<compile_context>
chip_gen: v5e
topology: v5e:2x2
jax: 0.10.0
libtpu: 0.0.40
codegen_flags: <defaults>
</compile_context>

<pallas_src>
import numpy as np
import jax
import jax.numpy as jnp
from jax import lax
from jax.experimental import pallas as pl
from jax.experimental.pallas import tpu as pltpu


def _round_up(x, m):
    return ((x + m - 1) // m) * m


# ----------------------------------------------------------------------------
# Kernel
# ----------------------------------------------------------------------------
def make_decoder_kernel(nb_layers, B, Vp, Hp, seq_len, init_token, use_targets):
    """Pallas kernel for a fixed (static, padded) configuration.

    B: padded batch (multiple of 8); Vp: padded vocab (multiple of 128);
    Hp: padded hidden (multiple of 128, so gate slices are lane-aligned).
    """
    f32 = jnp.float32
    G3, G4 = 3 * Hp, 4 * Hp

    def gru_fused(pre, h):
        # pre = [r | z | n_i | n_h], biases already folded in; PyTorch GRUCell.
        r = jax.nn.sigmoid(pre[:, :Hp])
        z = jax.nn.sigmoid(pre[:, Hp:2 * Hp])
        n = jnp.tanh(pre[:, 2 * Hp:3 * Hp] + r * pre[:, 3 * Hp:])
        return (1.0 - z) * n + z * h

    if use_targets:
        def kernel(x_all_ref, hid_ref, wi0_ref, bi0_ref, wh0_ref, bhn0_ref,
                   *rest):
            *deep_refs, wout_ref, bout_ref, out_ref = rest
            deep = [(deep_refs[2 * i], deep_refs[2 * i + 1])
                    for i in range(nb_layers - 1)]

            # Loop-invariant broadcasts hoisted (JAX does not CSE broadcasts).
            bhn0_b = jnp.broadcast_to(bhn0_ref[...], (B, Hp))
            deep_b = [(w, jnp.broadcast_to(b[...], (B, G4))) for (w, b) in deep]

            # All layer-0 input-side gates for every step in ONE fused matmul.
            gi0_all = (jnp.dot(x_all_ref[...], wi0_ref[...],
                               preferred_element_type=f32)
                       + jnp.broadcast_to(bi0_ref[...], (seq_len * B, G3)))

            hs = [hid_ref[...]] * nb_layers
            last_hs = []
            for di in range(seq_len):
                gi = gi0_all[di * B:(di + 1) * B, :]
                gh = jnp.dot(hs[0], wh0_ref[...], preferred_element_type=f32)
                r = jax.nn.sigmoid(gi[:, :Hp] + gh[:, :Hp])
                z = jax.nn.sigmoid(gi[:, Hp:2 * Hp] + gh[:, Hp:2 * Hp])
                n = jnp.tanh(gi[:, 2 * Hp:] + r * (gh[:, 2 * Hp:] + bhn0_b))
                hs[0] = (1.0 - z) * n + z * hs[0]
                x = hs[0]
                for li, (w_ref, b_b) in enumerate(deep_b, start=1):
                    xh = jnp.concatenate([x, hs[li]], axis=-1)
                    pre = jnp.dot(xh, w_ref[...],
                                  preferred_element_type=f32) + b_b
                    hs[li] = gru_fused(pre, hs[li])
                    x = hs[li]
                last_hs.append(x)

            # Deferred output head: one row/lane-dense matmul for all steps.
            h_all = jnp.concatenate(last_hs, axis=0)          # (seq*B, Hp)
            logits_all = (jnp.dot(h_all, wout_ref[...],
                                  preferred_element_type=f32)
                          + jnp.broadcast_to(bout_ref[...], (seq_len * B, Vp)))
            out_ref[...] = logits_all

        return kernel

    # ---- free-running path (greedy argmax feedback) ----
    def kernel(hid_ref, w0f_ref, b0f_ref, *rest):
        *deep_refs, wout_ref, bout_ref, out_ref = rest
        deep = [(deep_refs[2 * i], deep_refs[2 * i + 1])
                for i in range(nb_layers - 1)]

        b0f_b = jnp.broadcast_to(b0f_ref[...], (B, G4))
        deep_b = [(w, jnp.broadcast_to(b[...], (B, G4))) for (w, b) in deep]
        bout_b = jnp.broadcast_to(bout_ref[...], (B, Vp))
        lane = lax.broadcasted_iota(jnp.int32, (B, Vp), 1)    # hoisted iota

        hs = [hid_ref[...]] * nb_layers
        tok = jnp.full((B, 1), init_token, jnp.int32)

        for di in range(seq_len):
            # Embedding folded into the layer-0 fused weights: one matmul does
            # lookup + input gates + hidden gates.
            onehot = (lane == tok).astype(f32)
            xh0 = jnp.concatenate([onehot, hs[0]], axis=-1)   # (B, Vp+Hp)
            pre0 = jnp.dot(xh0, w0f_ref[...],
                           preferred_element_type=f32) + b0f_b
            hs[0] = gru_fused(pre0, hs[0])
            x = hs[0]
            for li, (w_ref, b_b) in enumerate(deep_b, start=1):
                xh = jnp.concatenate([x, hs[li]], axis=-1)
                pre = jnp.dot(xh, w_ref[...], preferred_element_type=f32) + b_b
                hs[li] = gru_fused(pre, hs[li])
                x = hs[li]

            logits = jnp.dot(x, wout_ref[...],
                             preferred_element_type=f32) + bout_b
            out_ref[di * B:(di + 1) * B, :] = logits          # aligned store

            # Greedy argmax (first-occurrence tie-break); padded vocab lanes
            # carry a -1e30 bias so they are never selected.
            m = jnp.max(logits, axis=-1, keepdims=True)
            tok = jnp.min(jnp.where(logits == m, lane, Vp),
                          axis=-1, keepdims=True).astype(jnp.int32)

    return kernel


# ----------------------------------------------------------------------------
# Wrapper
# ----------------------------------------------------------------------------
def decoder_forward(params, hidden, targets=None, max_len=None):
    B, H = hidden.shape
    V, E = params["emb"].shape
    L = len(params["layers"])
    use_targets = targets is not None
    seq_len = int(targets.shape[1]) if use_targets else int(max_len)
    init_token = int(params["init_token"])

    Bp = _round_up(B, 8)          # sublane granule
    Hp = _round_up(H, 128)        # lane-align every gate block (no relayouts)
    Vp = _round_up(V, 128)        # lane-dense logits
    NEG = jnp.float32(-1e30)
    hi = lax.Precision.HIGHEST
    f32 = jnp.float32

    def padw(w, r, c):
        w = jnp.asarray(w, f32)
        return jnp.zeros((r, c), f32).at[:w.shape[0], :w.shape[1]].set(w)

    layers = params["layers"]
    l0 = layers[0]

    # Layer 0 (un-fused hidden side kept separate for the teacher-forced path).
    wi0 = jnp.concatenate([padw(l0["wir"], E, Hp), padw(l0["wiz"], E, Hp),
                           padw(l0["win"], E, Hp)], axis=1)          # (E, 3Hp)
    bi0 = jnp.concatenate([padw(l0["b_r"], 1, Hp), padw(l0["b_z"], 1, Hp),
                           padw(l0["b_in"], 1, Hp)], axis=1)         # (1, 3Hp)
    wh0 = jnp.concatenate([padw(l0["whr"], Hp, Hp), padw(l0["whz"], Hp, Hp),
                           padw(l0["whn"], Hp, Hp)], axis=1)         # (Hp, 3Hp)
    bhn0 = padw(l0["b_hn"], 1, Hp)                                   # (1, Hp)

    # Layers >= 1: fused [x|h] @ [[Wi_r Wi_z Wi_n 0],[Wh_r Wh_z 0 Wh_n]].
    def fuse_deep(lyr):
        zi = jnp.zeros((Hp, Hp), f32)
        top = jnp.concatenate([padw(lyr["wir"], Hp, Hp), padw(lyr["wiz"], Hp, Hp),
                               padw(lyr["win"], Hp, Hp), zi], axis=1)
        bot = jnp.concatenate([padw(lyr["whr"], Hp, Hp), padw(lyr["whz"], Hp, Hp),
                               zi, padw(lyr["whn"], Hp, Hp)], axis=1)
        w = jnp.concatenate([top, bot], axis=0)                      # (2Hp, 4Hp)
        b = jnp.concatenate([padw(lyr["b_r"], 1, Hp), padw(lyr["b_z"], 1, Hp),
                             padw(lyr["b_in"], 1, Hp), padw(lyr["b_hn"], 1, Hp)],
                            axis=1)                                  # (1, 4Hp)
        return w, b

    deep = [fuse_deep(l) for l in layers[1:]]

    hidden_p = jnp.zeros((Bp, Hp), f32).at[:B, :H].set(hidden.astype(f32))

    # Output head; padded vocab lanes get a very negative bias.
    wout_p = padw(params["wout"], Hp, Vp)
    bout_p = jnp.full((1, Vp), NEG, f32).at[:, :V].set(
        jnp.asarray(params["bout"], f32))

    args = []
    if use_targets:
        # Teacher forcing: input token of every step is known up front
        # (init_token, targets[:,0], ..., targets[:,seq-2]).
        tok_in = jnp.concatenate(
            [jnp.full((B, 1), init_token, jnp.int32),
             targets[:, :seq_len - 1].astype(jnp.int32)], axis=1)    # (B, seq)
        tok_in = jnp.full((Bp, seq_len), init_token, jnp.int32).at[:B].set(tok_in)
        x_all = jnp.asarray(params["emb"], f32)[tok_in]              # (Bp, seq, E)
        x_all = jnp.transpose(x_all, (1, 0, 2)).reshape(seq_len * Bp, E)
        args += [x_all, hidden_p, wi0, bi0, wh0, bhn0]
    else:
        # Free-running: fold the embedding into the layer-0 fused weights so a
        # step's lookup + input gates + hidden gates is ONE matmul.
        emb = jnp.asarray(params["emb"], f32)
        embwi_r = padw(jnp.dot(emb, l0["wir"], precision=hi), Vp, Hp)
        embwi_z = padw(jnp.dot(emb, l0["wiz"], precision=hi), Vp, Hp)
        embwi_n = padw(jnp.dot(emb, l0["win"], precision=hi), Vp, Hp)
        zv = jnp.zeros((Vp, Hp), f32)
        zh = jnp.zeros((Hp, Hp), f32)
        top = jnp.concatenate([embwi_r, embwi_z, embwi_n, zv], axis=1)
        bot = jnp.concatenate([padw(l0["whr"], Hp, Hp), padw(l0["whz"], Hp, Hp),
                               zh, padw(l0["whn"], Hp, Hp)], axis=1)
        w0f = jnp.concatenate([top, bot], axis=0)                    # (Vp+Hp, 4Hp)
        b0f = jnp.concatenate([padw(l0["b_r"], 1, Hp), padw(l0["b_z"], 1, Hp),
                               padw(l0["b_in"], 1, Hp), padw(l0["b_hn"], 1, Hp)],
                              axis=1)
        args += [hidden_p, w0f, b0f]

    for (w, b) in deep:
        args += [w, b]
    args += [wout_p, bout_p]

    kernel = make_decoder_kernel(L, Bp, Vp, Hp, seq_len, init_token, use_targets)

    out_bytes = seq_len * Bp * Vp * 4
    in_bytes = sum(int(np.prod(a.shape)) * a.dtype.itemsize for a in args)
    vmem_limit = int(min(100 * 2**20, max(4 * 2**20, 2 * (in_bytes + out_bytes))))

    out = pl.pallas_call(
        kernel,
        out_shape=jax.ShapeDtypeStruct((seq_len * Bp, Vp), f32),
        in_specs=[pl.BlockSpec(memory_space=pltpu.MemorySpace.VMEM)
                  for _ in args],
        out_specs=pl.BlockSpec(memory_space=pltpu.MemorySpace.VMEM),
        compiler_params=pltpu.CompilerParams(vmem_limit_bytes=vmem_limit),
    )(*args)

    # (seq*Bp, Vp) -> (seq, Bp, Vp) -> strip padding -> (B, seq, V)
    out = out.reshape(seq_len, Bp, Vp)
    return jnp.transpose(out[:, :B, :V], (1, 0, 2))


# ----------------------------------------------------------------------------
# Deterministic parameter init (shapes follow the module's __init__)
# ----------------------------------------------------------------------------
def init_params(key, vocab, embed_dim, hidden, nb_layers, init_token):
    keys = jax.random.split(key, 2 + nb_layers)
    emb = 0.5 * jax.random.normal(keys[0], (vocab, embed_dim), jnp.float32)

    bound = 1.0 / float(hidden) ** 0.5

    def u(k, shape):
        return jax.random.uniform(k, shape, jnp.float32, -bound, bound)

    layers = []
    for i in range(nb_layers):
        in_dim = embed_dim if i == 0 else hidden
        kk = jax.random.split(keys[2 + i], 12)
        layers.append(dict(
            wir=u(kk[0], (in_dim, hidden)), whr=u(kk[1], (hidden, hidden)),
            wiz=u(kk[2], (in_dim, hidden)), whz=u(kk[3], (hidden, hidden)),
            win=u(kk[4], (in_dim, hidden)), whn=u(kk[5], (hidden, hidden)),
            b_r=u(kk[6], (1, hidden)) + u(kk[7], (1, hidden)),   # b_ir + b_hr
            b_z=u(kk[8], (1, hidden)) + u(kk[9], (1, hidden)),   # b_iz + b_hz
            b_in=u(kk[10], (1, hidden)),
            b_hn=u(kk[11], (1, hidden)),
        ))

    okeys = jax.random.split(keys[1], 2)
    wout = u(okeys[0], (hidden, vocab))
    bout = u(okeys[1], (1, vocab))
    return dict(emb=emb, layers=layers, wout=wout, bout=bout,
                init_token=init_token)


# ----------------------------------------------------------------------------
# Pure-JAX reference (eval-mode semantics of the PyTorch forward)
# ----------------------------------------------------------------------------
def reference_forward(params, hidden, targets=None, max_len=None):
    B, H = hidden.shape
    V, _ = params["emb"].shape
    L = len(params["layers"])
    seq_len = targets.shape[1] if targets is not None else max_len
    hi = lax.Precision.HIGHEST

    hs = [hidden for _ in range(L)]
    tok = jnp.full((B,), params["init_token"], jnp.int32)
    outs = []
    for di in range(seq_len):
        x = params["emb"][tok]
        for i, lyr in enumerate(params["layers"]):
            h = hs[i]
            r = jax.nn.sigmoid(jnp.dot(x, lyr["wir"], precision=hi)
                               + jnp.dot(h, lyr["whr"], precision=hi) + lyr["b_r"])
            z = jax.nn.sigmoid(jnp.dot(x, lyr["wiz"], precision=hi)
                               + jnp.dot(h, lyr["whz"], precision=hi) + lyr["b_z"])
            n = jnp.tanh(jnp.dot(x, lyr["win"], precision=hi) + lyr["b_in"]
                         + r * (jnp.dot(h, lyr["whn"], precision=hi) + lyr["b_hn"]))
            hs[i] = (1.0 - z) * n + z * h
            x = hs[i]
        logits = jnp.dot(x, params["wout"], precision=hi) + params["bout"]
        outs.append(logits)
        if targets is not None:
            tok = targets[:, di].astype(jnp.int32)
        else:
            tok = jnp.argmax(logits, axis=-1).astype(jnp.int32)
    return jnp.stack(outs, axis=1)


# ----------------------------------------------------------------------------
if __name__ == "__main__":
    VOCAB, EMB_DIM, HIDDEN, NB_LAYERS, BATCH = 32, 16, 32, 2, 4
    MAX_LEN, TGT_LEN, INIT_TOKEN = 8, 6, 1

    key = jax.random.PRNGKey(0)
    pkey, hkey, tkey = jax.random.split(key, 3)
    params = init_params(pkey, VOCAB, EMB_DIM, HIDDEN, NB_LAYERS, INIT_TOKEN)
    hidden = jax.random.normal(hkey, (BATCH, HIDDEN), jnp.float32)
    targets = jax.random.randint(tkey, (BATCH, TGT_LEN), 0, VOCAB, jnp.int32)

    # Teacher-forced path (targets provided) and free-running (argmax feedback).
    out_tf = decoder_forward(params, hidden, targets=targets)
    out_free = decoder_forward(params, hidden, targets=None, max_len=MAX_LEN)
    jax.block_until_ready((out_tf, out_free))

    assert out_tf.shape == (BATCH, TGT_LEN, VOCAB)
    assert out_free.shape == (BATCH, MAX_LEN, VOCAB)

    ref_tf = reference_forward(params, hidden, targets=targets)
    ref_free = reference_forward(params, hidden, targets=None, max_len=MAX_LEN)
    np.testing.assert_allclose(np.asarray(out_tf), np.asarray(ref_tf),
                               rtol=5e-3, atol=5e-3)
    np.testing.assert_allclose(np.asarray(out_free), np.asarray(ref_free),
                               rtol=5e-3, atol=5e-3)
    # Greedy feedback tokens must match (argmax stability check).
    np.testing.assert_array_equal(np.argmax(np.asarray(out_free), axis=-1),
                                  np.argmax(np.asarray(ref_free), axis=-1))

    print("KERNEL_OK")
</pallas_src>

<mosaic_0001>
module attributes {stable_mosaic.version = 11 : i64} {
  func.func @kernel(%arg0: memref<48x16xf32, #tpu.memory_space<vmem>>, %arg1: memref<8x128xf32, #tpu.memory_space<vmem>>, %arg2: memref<16x384xf32, #tpu.memory_space<vmem>>, %arg3: memref<1x384xf32, #tpu.memory_space<vmem>>, %arg4: memref<128x384xf32, #tpu.memory_space<vmem>>, %arg5: memref<1x128xf32, #tpu.memory_space<vmem>>, %arg6: memref<256x512xf32, #tpu.memory_space<vmem>>, %arg7: memref<1x512xf32, #tpu.memory_space<vmem>>, %arg8: memref<128x128xf32, #tpu.memory_space<vmem>>, %arg9: memref<1x128xf32, #tpu.memory_space<vmem>>, %arg10: memref<48x128xf32, #tpu.memory_space<vmem>>) attributes {dimension_semantics = [], scalar_prefetch = 0 : i64, scratch_operands = 0 : i64, tpu.core_type = #tpu.core_type<tc>} {
    %c0 = arith.constant 0 : index
    %c0_0 = arith.constant 0 : index
    %0 = vector.load %arg5[%c0, %c0_0] : memref<1x128xf32, #tpu.memory_space<vmem>>, vector<1x128xf32>
    %1 = vector.shape_cast %0 : vector<1x128xf32> to vector<1x128xf32>
    %2 = vector.broadcast %1 : vector<1x128xf32> to vector<8x128xf32>
    %c0_1 = arith.constant 0 : index
    %c0_2 = arith.constant 0 : index
    %3 = vector.load %arg7[%c0_1, %c0_2] : memref<1x512xf32, #tpu.memory_space<vmem>>, vector<1x512xf32>
    %4 = vector.shape_cast %3 : vector<1x512xf32> to vector<1x512xf32>
    %5 = vector.broadcast %4 : vector<1x512xf32> to vector<8x512xf32>
    %c0_3 = arith.constant 0 : index
    %c0_4 = arith.constant 0 : index
    %6 = vector.load %arg0[%c0_3, %c0_4] : memref<48x16xf32, #tpu.memory_space<vmem>>, vector<48x16xf32>
    %c0_5 = arith.constant 0 : index
    %c0_6 = arith.constant 0 : index
    %7 = vector.load %arg2[%c0_5, %c0_6] : memref<16x384xf32, #tpu.memory_space<vmem>>, vector<16x384xf32>
    %cst = arith.constant dense<0.000000e+00> : vector<48x384xf32>
    %8 = tpu.matmul %6, %7, %cst {dimension_numbers = #tpu.dot_dimension_numbers<[1], [0], [0], [1], [0, 0, 1, 1], [], []>} : vector<48x16xf32>, vector<16x384xf32>, vector<48x384xf32> -> vector<48x384xf32>
    %c0_7 = arith.constant 0 : index
    %c0_8 = arith.constant 0 : index
    %9 = vector.load %arg3[%c0_7, %c0_8] : memref<1x384xf32, #tpu.memory_space<vmem>>, vector<1x384xf32>
    %10 = vector.shape_cast %9 : vector<1x384xf32> to vector<1x384xf32>
    %11 = vector.broadcast %10 : vector<1x384xf32> to vector<48x384xf32>
    %12 = arith.addf %8, %11 : vector<48x384xf32>
    %c0_9 = arith.constant 0 : index
    %c0_10 = arith.constant 0 : index
    %13 = vector.load %arg1[%c0_9, %c0_10] : memref<8x128xf32, #tpu.memory_space<vmem>>, vector<8x128xf32>
    %14 = vector.extract_strided_slice %12 {offsets = [0, 0], sizes = [8, 384], strides = [1, 1]} : vector<48x384xf32> to vector<8x384xf32>
    %c0_11 = arith.constant 0 : index
    %c0_12 = arith.constant 0 : index
    %15 = vector.load %arg4[%c0_11, %c0_12] : memref<128x384xf32, #tpu.memory_space<vmem>>, vector<128x384xf32>
    %cst_13 = arith.constant dense<0.000000e+00> : vector<8x384xf32>
    %16 = tpu.matmul %13, %15, %cst_13 {dimension_numbers = #tpu.dot_dimension_numbers<[1], [0], [0], [1], [0, 0, 1, 1], [], []>} : vector<8x128xf32>, vector<128x384xf32>, vector<8x384xf32> -> vector<8x384xf32>
    %17 = vector.extract_strided_slice %14 {offsets = [0, 0], sizes = [8, 128], strides = [1, 1]} : vector<8x384xf32> to vector<8x128xf32>
    %18 = vector.extract_strided_slice %16 {offsets = [0, 0], sizes = [8, 128], strides = [1, 1]} : vector<8x384xf32> to vector<8x128xf32>
    %19 = arith.addf %17, %18 : vector<8x128xf32>
    %20 = arith.negf %19 : vector<8x128xf32>
    %21 = math.exp %20 : vector<8x128xf32>
    %cst_14 = arith.constant 1.000000e+00 : f32
    %22 = vector.broadcast %cst_14 : f32 to vector<8x128xf32>
    %23 = arith.addf %22, %21 : vector<8x128xf32>
    %24 = arith.divf %22, %23 : vector<8x128xf32>
    %25 = vector.extract_strided_slice %14 {offsets = [0, 128], sizes = [8, 128], strides = [1, 1]} : vector<8x384xf32> to vector<8x128xf32>
    %26 = vector.extract_strided_slice %16 {offsets = [0, 128], sizes = [8, 128], strides = [1, 1]} : vector<8x384xf32> to vector<8x128xf32>
    %27 = arith.addf %25, %26 : vector<8x128xf32>
    %28 = arith.negf %27 : vector<8x128xf32>
    %29 = math.exp %28 : vector<8x128xf32>
    %cst_15 = arith.constant 1.000000e+00 : f32
    %30 = vector.broadcast %cst_15 : f32 to vector<8x128xf32>
    %31 = arith.addf %30, %29 : vector<8x128xf32>
    %32 = arith.divf %30, %31 : vector<8x128xf32>
    %33 = vector.extract_strided_slice %14 {offsets = [0, 256], sizes = [8, 128], strides = [1, 1]} : vector<8x384xf32> to vector<8x128xf32>
    %34 = vector.extract_strided_slice %16 {offsets = [0, 256], sizes = [8, 128], strides = [1, 1]} : vector<8x384xf32> to vector<8x128xf32>
    %35 = arith.addf %34, %2 : vector<8x128xf32>
    %36 = arith.mulf %24, %35 : vector<8x128xf32>
    %37 = arith.addf %33, %36 : vector<8x128xf32>
    %38 = math.tanh %37 : vector<8x128xf32>
    %cst_16 = arith.constant 1.000000e+00 : f32
    %39 = vector.broadcast %cst_16 : f32 to vector<8x128xf32>
    %40 = arith.subf %39, %32 : vector<8x128xf32>
    %41 = arith.mulf %40, %38 : vector<8x128xf32>
    %42 = arith.mulf %32, %13 : vector<8x128xf32>
    %43 = arith.addf %41, %42 : vector<8x128xf32>
    %44 = tpu.concatenate %43, %13 in 1 : vector<8x128xf32>, vector<8x128xf32> -> vector<8x256xf32>
    %c0_17 = arith.constant 0 : index
    %c0_18 = arith.constant 0 : index
    %45 = vector.load %arg6[%c0_17, %c0_18] : memref<256x512xf32, #tpu.memory_space<vmem>>, vector<256x512xf32>
    %cst_19 = arith.constant dense<0.000000e+00> : vector<8x512xf32>
    %46 = tpu.matmul %44, %45, %cst_19 {dimension_numbers = #tpu.dot_dimension_numbers<[1], [0], [0], [1], [0, 0, 1, 1], [], []>} : vector<8x256xf32>, vector<256x512xf32>, vector<8x512xf32> -> vector<8x512xf32>
    %47 = arith.addf %46, %5 : vector<8x512xf32>
    %48 = vector.extract_strided_slice %47 {offsets = [0, 0], sizes = [8, 128], strides = [1, 1]} : vector<8x512xf32> to vector<8x128xf32>
    %49 = arith.negf %48 : vector<8x128xf32>
    %50 = math.exp %49 : vector<8x128xf32>
    %cst_20 = arith.constant 1.000000e+00 : f32
    %51 = vector.broadcast %cst_20 : f32 to vector<8x128xf32>
    %52 = arith.addf %51, %50 : vector<8x128xf32>
    %53 = arith.divf %51, %52 : vector<8x128xf32>
    %54 = vector.extract_strided_slice %47 {offsets = [0, 128], sizes = [8, 128], strides = [1, 1]} : vector<8x512xf32> to vector<8x128xf32>
    %55 = arith.negf %54 : vector<8x128xf32>
    %56 = math.exp %55 : vector<8x128xf32>
    %cst_21 = arith.constant 1.000000e+00 : f32
    %57 = vector.broadcast %cst_21 : f32 to vector<8x128xf32>
    %58 = arith.addf %57, %56 : vector<8x128xf32>
    %59 = arith.divf %57, %58 : vector<8x128xf32>
    %60 = vector.extract_strided_slice %47 {offsets = [0, 256], sizes = [8, 128], strides = [1, 1]} : vector<8x512xf32> to vector<8x128xf32>
    %61 = vector.extract_strided_slice %47 {offsets = [0, 384], sizes = [8, 128], strides = [1, 1]} : vector<8x512xf32> to vector<8x128xf32>
    %62 = arith.mulf %53, %61 : vector<8x128xf32>
    %63 = arith.addf %60, %62 : vector<8x128xf32>
    %64 = math.tanh %63 : vector<8x128xf32>
    %cst_22 = arith.constant 1.000000e+00 : f32
    %65 = vector.broadcast %cst_22 : f32 to vector<8x128xf32>
    %66 = arith.subf %65, %59 : vector<8x128xf32>
    %67 = arith.mulf %66, %64 : vector<8x128xf32>
    %68 = arith.mulf %59, %13 : vector<8x128xf32>
    %69 = arith.addf %67, %68 : vector<8x128xf32>
    %70 = vector.extract_strided_slice %12 {offsets = [8, 0], sizes = [8, 384], strides = [1, 1]} : vector<48x384xf32> to vector<8x384xf32>
    %c0_23 = arith.constant 0 : index
    %c0_24 = arith.constant 0 : index
    %71 = vector.load %arg4[%c0_23, %c0_24] : memref<128x384xf32, #tpu.memory_space<vmem>>, vector<128x384xf32>
    %cst_25 = arith.constant dense<0.000000e+00> : vector<8x384xf32>
    %72 = tpu.matmul %43, %71, %cst_25 {dimension_numbers = #tpu.dot_dimension_numbers<[1], [0], [0], [1], [0, 0, 1, 1], [], []>} : vector<8x128xf32>, vector<128x384xf32>, vector<8x384xf32> -> vector<8x384xf32>
    %73 = vector.extract_strided_slice %70 {offsets = [0, 0], sizes = [8, 128], strides = [1, 1]} : vector<8x384xf32> to vector<8x128xf32>
    %74 = vector.extract_strided_slice %72 {offsets = [0, 0], sizes = [8, 128], strides = [1, 1]} : vector<8x384xf32> to vector<8x128xf32>
    %75 = arith.addf %73, %74 : vector<8x128xf32>
    %76 = arith.negf %75 : vector<8x128xf32>
    %77 = math.exp %76 : vector<8x128xf32>
    %cst_26 = arith.constant 1.000000e+00 : f32
    %78 = vector.broadcast %cst_26 : f32 to vector<8x128xf32>
    %79 = arith.addf %78, %77 : vector<8x128xf32>
    %80 = arith.divf %78, %79 : vector<8x128xf32>
    %81 = vector.extract_strided_slice %70 {offsets = [0, 128], sizes = [8, 128], strides = [1, 1]} : vector<8x384xf32> to vector<8x128xf32>
    %82 = vector.extract_strided_slice %72 {offsets = [0, 128], sizes = [8, 128], strides = [1, 1]} : vector<8x384xf32> to vector<8x128xf32>
    %83 = arith.addf %81, %82 : vector<8x128xf32>
    %84 = arith.negf %83 : vector<8x128xf32>
    %85 = math.exp %84 : vector<8x128xf32>
    %cst_27 = arith.constant 1.000000e+00 : f32
    %86 = vector.broadcast %cst_27 : f32 to vector<8x128xf32>
    %87 = arith.addf %86, %85 : vector<8x128xf32>
    %88 = arith.divf %86, %87 : vector<8x128xf32>
    %89 = vector.extract_strided_slice %70 {offsets = [0, 256], sizes = [8, 128], strides = [1, 1]} : vector<8x384xf32> to vector<8x128xf32>
    %90 = vector.extract_strided_slice %72 {offsets = [0, 256], sizes = [8, 128], strides = [1, 1]} : vector<8x384xf32> to vector<8x128xf32>
    %91 = arith.addf %90, %2 : vector<8x128xf32>
    %92 = arith.mulf %80, %91 : vector<8x128xf32>
    %93 = arith.addf %89, %92 : vector<8x128xf32>
    %94 = math.tanh %93 : vector<8x128xf32>
    %cst_28 = arith.constant 1.000000e+00 : f32
    %95 = vector.broadcast %cst_28 : f32 to vector<8x128xf32>
    %96 = arith.subf %95, %88 : vector<8x128xf32>
    %97 = arith.mulf %96, %94 : vector<8x128xf32>
    %98 = arith.mulf %88, %43 : vector<8x128xf32>
    %99 = arith.addf %97, %98 : vector<8x128xf32>
    %100 = tpu.concatenate %99, %69 in 1 : vector<8x128xf32>, vector<8x128xf32> -> vector<8x256xf32>
    %c0_29 = arith.constant 0 : index
    %c0_30 = arith.constant 0 : index
    %101 = vector.load %arg6[%c0_29, %c0_30] : memref<256x512xf32, #tpu.memory_space<vmem>>, vector<256x512xf32>
    %cst_31 = arith.constant dense<0.000000e+00> : vector<8x512xf32>
    %102 = tpu.matmul %100, %101, %cst_31 {dimension_numbers = #tpu.dot_dimension_numbers<[1], [0], [0], [1], [0, 0, 1, 1], [], []>} : vector<8x256xf32>, vector<256x512xf32>, vector<8x512xf32> -> vector<8x512xf32>
    %103 = arith.addf %102, %5 : vector<8x512xf32>
    %104 = vector.extract_strided_slice %103 {offsets = [0, 0], sizes = [8, 128], strides = [1, 1]} : vector<8x512xf32> to vector<8x128xf32>
    %105 = arith.negf %104 : vector<8x128xf32>
    %106 = math.exp %105 : vector<8x128xf32>
    %cst_32 = arith.constant 1.000000e+00 : f32
    %107 = vector.broadcast %cst_32 : f32 to vector<8x128xf32>
    %108 = arith.addf %107, %106 : vector<8x128xf32>
    %109 = arith.divf %107, %108 : vector<8x128xf32>
    %110 = vector.extract_strided_slice %103 {offsets = [0, 128], sizes = [8, 128], strides = [1, 1]} : vector<8x512xf32> to vector<8x128xf32>
    %111 = arith.negf %110 : vector<8x128xf32>
    %112 = math.exp %111 : vector<8x128xf32>
    %cst_33 = arith.constant 1.000000e+00 : f32
    %113 = vector.broadcast %cst_33 : f32 to vector<8x128xf32>
    %114 = arith.addf %113, %112 : vector<8x128xf32>
    %115 = arith.divf %113, %114 : vector<8x128xf32>
    %116 = vector.extract_strided_slice %103 {offsets = [0, 256], sizes = [8, 128], strides = [1, 1]} : vector<8x512xf32> to vector<8x128xf32>
    %117 = vector.extract_strided_slice %103 {offsets = [0, 384], sizes = [8, 128], strides = [1, 1]} : vector<8x512xf32> to vector<8x128xf32>
    %118 = arith.mulf %109, %117 : vector<8x128xf32>
    %119 = arith.addf %116, %118 : vector<8x128xf32>
    %120 = math.tanh %119 : vector<8x128xf32>
    %cst_34 = arith.constant 1.000000e+00 : f32
    %121 = vector.broadcast %cst_34 : f32 to vector<8x128xf32>
    %122 = arith.subf %121, %115 : vector<8x128xf32>
    %123 = arith.mulf %122, %120 : vector<8x128xf32>
    %124 = arith.mulf %115, %69 : vector<8x128xf32>
    %125 = arith.addf %123, %124 : vector<8x128xf32>
    %126 = vector.extract_strided_slice %12 {offsets = [16, 0], sizes = [8, 384], strides = [1, 1]} : vector<48x384xf32> to vector<8x384xf32>
    %c0_35 = arith.constant 0 : index
    %c0_36 = arith.constant 0 : index
    %127 = vector.load %arg4[%c0_35, %c0_36] : memref<128x384xf32, #tpu.memory_space<vmem>>, vector<128x384xf32>
    %cst_37 = arith.constant dense<0.000000e+00> : vector<8x384xf32>
    %128 = tpu.matmul %99, %127, %cst_37 {dimension_numbers = #tpu.dot_dimension_numbers<[1], [0], [0], [1], [0, 0, 1, 1], [], []>} : vector<8x128xf32>, vector<128x384xf32>, vector<8x384xf32> -> vector<8x384xf32>
    %129 = vector.extract_strided_slice %126 {offsets = [0, 0], sizes = [8, 128], strides = [1, 1]} : vector<8x384xf32> to vector<8x128xf32>
    %130 = vector.extract_strided_slice %128 {offsets = [0, 0], sizes = [8, 128], strides = [1, 1]} : vector<8x384xf32> to vector<8x128xf32>
    %131 = arith.addf %129, %130 : vector<8x128xf32>
    %132 = arith.negf %131 : vector<8x128xf32>
    %133 = math.exp %132 : vector<8x128xf32>
    %cst_38 = arith.constant 1.000000e+00 : f32
    %134 = vector.broadcast %cst_38 : f32 to vector<8x128xf32>
    %135 = arith.addf %134, %133 : vector<8x128xf32>
    %136 = arith.divf %134, %135 : vector<8x128xf32>
    %137 = vector.extract_strided_slice %126 {offsets = [0, 128], sizes = [8, 128], strides = [1, 1]} : vector<8x384xf32> to vector<8x128xf32>
    %138 = vector.extract_strided_slice %128 {offsets = [0, 128], sizes = [8, 128], strides = [1, 1]} : vector<8x384xf32> to vector<8x128xf32>
    %139 = arith.addf %137, %138 : vector<8x128xf32>
    %140 = arith.negf %139 : vector<8x128xf32>
    %141 = math.exp %140 : vector<8x128xf32>
    %cst_39 = arith.constant 1.000000e+00 : f32
    %142 = vector.broadcast %cst_39 : f32 to vector<8x128xf32>
    %143 = arith.addf %142, %141 : vector<8x128xf32>
    %144 = arith.divf %142, %143 : vector<8x128xf32>
    %145 = vector.extract_strided_slice %126 {offsets = [0, 256], sizes = [8, 128], strides = [1, 1]} : vector<8x384xf32> to vector<8x128xf32>
    %146 = vector.extract_strided_slice %128 {offsets = [0, 256], sizes = [8, 128], strides = [1, 1]} : vector<8x384xf32> to vector<8x128xf32>
    %147 = arith.addf %146, %2 : vector<8x128xf32>
    %148 = arith.mulf %136, %147 : vector<8x128xf32>
    %149 = arith.addf %145, %148 : vector<8x128xf32>
    %150 = math.tanh %149 : vector<8x128xf32>
    %cst_40 = arith.constant 1.000000e+00 : f32
    %151 = vector.broadcast %cst_40 : f32 to vector<8x128xf32>
    %152 = arith.subf %151, %144 : vector<8x128xf32>
    %153 = arith.mulf %152, %150 : vector<8x128xf32>
    %154 = arith.mulf %144, %99 : vector<8x128xf32>
    %155 = arith.addf %153, %154 : vector<8x128xf32>
    %156 = tpu.concatenate %155, %125 in 1 : vector<8x128xf32>, vector<8x128xf32> -> vector<8x256xf32>
    %c0_41 = arith.constant 0 : index
    %c0_42 = arith.constant 0 : index
    %157 = vector.load %arg6[%c0_41, %c0_42] : memref<256x512xf32, #tpu.memory_space<vmem>>, vector<256x512xf32>
    %cst_43 = arith.constant dense<0.000000e+00> : vector<8x512xf32>
    %158 = tpu.matmul %156, %157, %cst_43 {dimension_numbers = #tpu.dot_dimension_numbers<[1], [0], [0], [1], [0, 0, 1, 1], [], []>} : vector<8x256xf32>, vector<256x512xf32>, vector<8x512xf32> -> vector<8x512xf32>
    %159 = arith.addf %158, %5 : vector<8x512xf32>
    %160 = vector.extract_strided_slice %159 {offsets = [0, 0], sizes = [8, 128], strides = [1, 1]} : vector<8x512xf32> to vector<8x128xf32>
    %161 = arith.negf %160 : vector<8x128xf32>
    %162 = math.exp %161 : vector<8x128xf32>
    %cst_44 = arith.constant 1.000000e+00 : f32
    %163 = vector.broadcast %cst_44 : f32 to vector<8x128xf32>
    %164 = arith.addf %163, %162 : vector<8x128xf32>
    %165 = arith.divf %163, %164 : vector<8x128xf32>
    %166 = vector.extract_strided_slice %159 {offsets = [0, 128], sizes = [8, 128], strides = [1, 1]} : vector<8x512xf32> to vector<8x128xf32>
    %167 = arith.negf %166 : vector<8x128xf32>
    %168 = math.exp %167 : vector<8x128xf32>
    %cst_45 = arith.constant 1.000000e+00 : f32
    %169 = vector.broadcast %cst_45 : f32 to vector<8x128xf32>
    %170 = arith.addf %169, %168 : vector<8x128xf32>
    %171 = arith.divf %169, %170 : vector<8x128xf32>
    %172 = vector.extract_strided_slice %159 {offsets = [0, 256], sizes = [8, 128], strides = [1, 1]} : vector<8x512xf32> to vector<8x128xf32>
    %173 = vector.extract_strided_slice %159 {offsets = [0, 384], sizes = [8, 128], strides = [1, 1]} : vector<8x512xf32> to vector<8x128xf32>
    %174 = arith.mulf %165, %173 : vector<8x128xf32>
    %175 = arith.addf %172, %174 : vector<8x128xf32>
    %176 = math.tanh %175 : vector<8x128xf32>
    %cst_46 = arith.constant 1.000000e+00 : f32
    %177 = vector.broadcast %cst_46 : f32 to vector<8x128xf32>
    %178 = arith.subf %177, %171 : vector<8x128xf32>
    %179 = arith.mulf %178, %176 : vector<8x128xf32>
    %180 = arith.mulf %171, %125 : vector<8x128xf32>
    %181 = arith.addf %179, %180 : vector<8x128xf32>
    %182 = vector.extract_strided_slice %12 {offsets = [24, 0], sizes = [8, 384], strides = [1, 1]} : vector<48x384xf32> to vector<8x384xf32>
    %c0_47 = arith.constant 0 : index
    %c0_48 = arith.constant 0 : index
    %183 = vector.load %arg4[%c0_47, %c0_48] : memref<128x384xf32, #tpu.memory_space<vmem>>, vector<128x384xf32>
    %cst_49 = arith.constant dense<0.000000e+00> : vector<8x384xf32>
    %184 = tpu.matmul %155, %183, %cst_49 {dimension_numbers = #tpu.dot_dimension_numbers<[1], [0], [0], [1], [0, 0, 1, 1], [], []>} : vector<8x128xf32>, vector<128x384xf32>, vector<8x384xf32> -> vector<8x384xf32>
    %185 = vector.extract_strided_slice %182 {offsets = [0, 0], sizes = [8, 128], strides = [1, 1]} : vector<8x384xf32> to vector<8x128xf32>
    %186 = vector.extract_strided_slice %184 {offsets = [0, 0], sizes = [8, 128], strides = [1, 1]} : vector<8x384xf32> to vector<8x128xf32>
    %187 = arith.addf %185, %186 : vector<8x128xf32>
    %188 = arith.negf %187 : vector<8x128xf32>
    %189 = math.exp %188 : vector<8x128xf32>
    %cst_50 = arith.constant 1.000000e+00 : f32
    %190 = vector.broadcast %cst_50 : f32 to vector<8x128xf32>
    %191 = arith.addf %190, %189 : vector<8x128xf32>
    %192 = arith.divf %190, %191 : vector<8x128xf32>
    %193 = vector.extract_strided_slice %182 {offsets = [0, 128], sizes = [8, 128], strides = [1, 1]} : vector<8x384xf32> to vector<8x128xf32>
    %194 = vector.extract_strided_slice %184 {offsets = [0, 128], sizes = [8, 128], strides = [1, 1]} : vector<8x384xf32> to vector<8x128xf32>
    %195 = arith.addf %193, %194 : vector<8x128xf32>
    %196 = arith.negf %195 : vector<8x128xf32>
    %197 = math.exp %196 : vector<8x128xf32>
    %cst_51 = arith.constant 1.000000e+00 : f32
    %198 = vector.broadcast %cst_51 : f32 to vector<8x128xf32>
    %199 = arith.addf %198, %197 : vector<8x128xf32>
    %200 = arith.divf %198, %199 : vector<8x128xf32>
    %201 = vector.extract_strided_slice %182 {offsets = [0, 256], sizes = [8, 128], strides = [1, 1]} : vector<8x384xf32> to vector<8x128xf32>
    %202 = vector.extract_strided_slice %184 {offsets = [0, 256], sizes = [8, 128], strides = [1, 1]} : vector<8x384xf32> to vector<8x128xf32>
    %203 = arith.addf %202, %2 : vector<8x128xf32>
    %204 = arith.mulf %192, %203 : vector<8x128xf32>
    %205 = arith.addf %201, %204 : vector<8x128xf32>
    %206 = math.tanh %205 : vector<8x128xf32>
    %cst_52 = arith.constant 1.000000e+00 : f32
    %207 = vector.broadcast %cst_52 : f32 to vector<8x128xf32>
    %208 = arith.subf %207, %200 : vector<8x128xf32>
    %209 = arith.mulf %208, %206 : vector<8x128xf32>
    %210 = arith.mulf %200, %155 : vector<8x128xf32>
    %211 = arith.addf %209, %210 : vector<8x128xf32>
    %212 = tpu.concatenate %211, %181 in 1 : vector<8x128xf32>, vector<8x128xf32> -> vector<8x256xf32>
    %c0_53 = arith.constant 0 : index
    %c0_54 = arith.constant 0 : index
    %213 = vector.load %arg6[%c0_53, %c0_54] : memref<256x512xf32, #tpu.memory_space<vmem>>, vector<256x512xf32>
    %cst_55 = arith.constant dense<0.000000e+00> : vector<8x512xf32>
    %214 = tpu.matmul %212, %213, %cst_55 {dimension_numbers = #tpu.dot_dimension_numbers<[1], [0], [0], [1], [0, 0, 1, 1], [], []>} : vector<8x256xf32>, vector<256x512xf32>, vector<8x512xf32> -> vector<8x512xf32>
    %215 = arith.addf %214, %5 : vector<8x512xf32>
    %216 = vector.extract_strided_slice %215 {offsets = [0, 0], sizes = [8, 128], strides = [1, 1]} : vector<8x512xf32> to vector<8x128xf32>
    %217 = arith.negf %216 : vector<8x128xf32>
    %218 = math.exp %217 : vector<8x128xf32>
    %cst_56 = arith.constant 1.000000e+00 : f32
    %219 = vector.broadcast %cst_56 : f32 to vector<8x128xf32>
    %220 = arith.addf %219, %218 : vector<8x128xf32>
    %221 = arith.divf %219, %220 : vector<8x128xf32>
    %222 = vector.extract_strided_slice %215 {offsets = [0, 128], sizes = [8, 128], strides = [1, 1]} : vector<8x512xf32> to vector<8x128xf32>
    %223 = arith.negf %222 : vector<8x128xf32>
    %224 = math.exp %223 : vector<8x128xf32>
    %cst_57 = arith.constant 1.000000e+00 : f32
    %225 = vector.broadcast %cst_57 : f32 to vector<8x128xf32>
    %226 = arith.addf %225, %224 : vector<8x128xf32>
    %227 = arith.divf %225, %226 : vector<8x128xf32>
    %228 = vector.extract_strided_slice %215 {offsets = [0, 256], sizes = [8, 128], strides = [1, 1]} : vector<8x512xf32> to vector<8x128xf32>
    %229 = vector.extract_strided_slice %215 {offsets = [0, 384], sizes = [8, 128], strides = [1, 1]} : vector<8x512xf32> to vector<8x128xf32>
    %230 = arith.mulf %221, %229 : vector<8x128xf32>
    %231 = arith.addf %228, %230 : vector<8x128xf32>
    %232 = math.tanh %231 : vector<8x128xf32>
    %cst_58 = arith.constant 1.000000e+00 : f32
    %233 = vector.broadcast %cst_58 : f32 to vector<8x128xf32>
    %234 = arith.subf %233, %227 : vector<8x128xf32>
    %235 = arith.mulf %234, %232 : vector<8x128xf32>
    %236 = arith.mulf %227, %181 : vector<8x128xf32>
    %237 = arith.addf %235, %236 : vector<8x128xf32>
    %238 = vector.extract_strided_slice %12 {offsets = [32, 0], sizes = [8, 384], strides = [1, 1]} : vector<48x384xf32> to vector<8x384xf32>
    %c0_59 = arith.constant 0 : index
    %c0_60 = arith.constant 0 : index
    %239 = vector.load %arg4[%c0_59, %c0_60] : memref<128x384xf32, #tpu.memory_space<vmem>>, vector<128x384xf32>
    %cst_61 = arith.constant dense<0.000000e+00> : vector<8x384xf32>
    %240 = tpu.matmul %211, %239, %cst_61 {dimension_numbers = #tpu.dot_dimension_numbers<[1], [0], [0], [1], [0, 0, 1, 1], [], []>} : vector<8x128xf32>, vector<128x384xf32>, vector<8x384xf32> -> vector<8x384xf32>
    %241 = vector.extract_strided_slice %238 {offsets = [0, 0], sizes = [8, 128], strides = [1, 1]} : vector<8x384xf32> to vector<8x128xf32>
    %242 = vector.extract_strided_slice %240 {offsets = [0, 0], sizes = [8, 128], strides = [1, 1]} : vector<8x384xf32> to vector<8x128xf32>
    %243 = arith.addf %241, %242 : vector<8x128xf32>
    %244 = arith.negf %243 : vector<8x128xf32>
    %245 = math.exp %244 : vector<8x128xf32>
    %cst_62 = arith.constant 1.000000e+00 : f32
    %246 = vector.broadcast %cst_62 : f32 to vector<8x128xf32>
    %247 = arith.addf %246, %245 : vector<8x128xf32>
    %248 = arith.divf %246, %247 : vector<8x128xf32>
    %249 = vector.extract_strided_slice %238 {offsets = [0, 128], sizes = [8, 128], strides = [1, 1]} : vector<8x384xf32> to vector<8x128xf32>
    %250 = vector.extract_strided_slice %240 {offsets = [0, 128], sizes = [8, 128], strides = [1, 1]} : vector<8x384xf32> to vector<8x128xf32>
    %251 = arith.addf %249, %250 : vector<8x128xf32>
    %252 = arith.negf %251 : vector<8x128xf32>
    %253 = math.exp %252 : vector<8x128xf32>
    %cst_63 = arith.constant 1.000000e+00 : f32
    %254 = vector.broadcast %cst_63 : f32 to vector<8x128xf32>
    %255 = arith.addf %254, %253 : vector<8x128xf32>
    %256 = arith.divf %254, %255 : vector<8x128xf32>
    %257 = vector.extract_strided_slice %238 {offsets = [0, 256], sizes = [8, 128], strides = [1, 1]} : vector<8x384xf32> to vector<8x128xf32>
    %258 = vector.extract_strided_slice %240 {offsets = [0, 256], sizes = [8, 128], strides = [1, 1]} : vector<8x384xf32> to vector<8x128xf32>
    %259 = arith.addf %258, %2 : vector<8x128xf32>
    %260 = arith.mulf %248, %259 : vector<8x128xf32>
    %261 = arith.addf %257, %260 : vector<8x128xf32>
    %262 = math.tanh %261 : vector<8x128xf32>
    %cst_64 = arith.constant 1.000000e+00 : f32
    %263 = vector.broadcast %cst_64 : f32 to vector<8x128xf32>
    %264 = arith.subf %263, %256 : vector<8x128xf32>
    %265 = arith.mulf %264, %262 : vector<8x128xf32>
    %266 = arith.mulf %256, %211 : vector<8x128xf32>
    %267 = arith.addf %265, %266 : vector<8x128xf32>
    %268 = tpu.concatenate %267, %237 in 1 : vector<8x128xf32>, vector<8x128xf32> -> vector<8x256xf32>
    %c0_65 = arith.constant 0 : index
    %c0_66 = arith.constant 0 : index
    %269 = vector.load %arg6[%c0_65, %c0_66] : memref<256x512xf32, #tpu.memory_space<vmem>>, vector<256x512xf32>
    %cst_67 = arith.constant dense<0.000000e+00> : vector<8x512xf32>
    %270 = tpu.matmul %268, %269, %cst_67 {dimension_numbers = #tpu.dot_dimension_numbers<[1], [0], [0], [1], [0, 0, 1, 1], [], []>} : vector<8x256xf32>, vector<256x512xf32>, vector<8x512xf32> -> vector<8x512xf32>
    %271 = arith.addf %270, %5 : vector<8x512xf32>
    %272 = vector.extract_strided_slice %271 {offsets = [0, 0], sizes = [8, 128], strides = [1, 1]} : vector<8x512xf32> to vector<8x128xf32>
    %273 = arith.negf %272 : vector<8x128xf32>
    %274 = math.exp %273 : vector<8x128xf32>
    %cst_68 = arith.constant 1.000000e+00 : f32
    %275 = vector.broadcast %cst_68 : f32 to vector<8x128xf32>
    %276 = arith.addf %275, %274 : vector<8x128xf32>
    %277 = arith.divf %275, %276 : vector<8x128xf32>
    %278 = vector.extract_strided_slice %271 {offsets = [0, 128], sizes = [8, 128], strides = [1, 1]} : vector<8x512xf32> to vector<8x128xf32>
    %279 = arith.negf %278 : vector<8x128xf32>
    %280 = math.exp %279 : vector<8x128xf32>
    %cst_69 = arith.constant 1.000000e+00 : f32
    %281 = vector.broadcast %cst_69 : f32 to vector<8x128xf32>
    %282 = arith.addf %281, %280 : vector<8x128xf32>
    %283 = arith.divf %281, %282 : vector<8x128xf32>
    %284 = vector.extract_strided_slice %271 {offsets = [0, 256], sizes = [8, 128], strides = [1, 1]} : vector<8x512xf32> to vector<8x128xf32>
    %285 = vector.extract_strided_slice %271 {offsets = [0, 384], sizes = [8, 128], strides = [1, 1]} : vector<8x512xf32> to vector<8x128xf32>
    %286 = arith.mulf %277, %285 : vector<8x128xf32>
    %287 = arith.addf %284, %286 : vector<8x128xf32>
    %288 = math.tanh %287 : vector<8x128xf32>
    %cst_70 = arith.constant 1.000000e+00 : f32
    %289 = vector.broadcast %cst_70 : f32 to vector<8x128xf32>
    %290 = arith.subf %289, %283 : vector<8x128xf32>
    %291 = arith.mulf %290, %288 : vector<8x128xf32>
    %292 = arith.mulf %283, %237 : vector<8x128xf32>
    %293 = arith.addf %291, %292 : vector<8x128xf32>
    %294 = vector.extract_strided_slice %12 {offsets = [40, 0], sizes = [8, 384], strides = [1, 1]} : vector<48x384xf32> to vector<8x384xf32>
    %c0_71 = arith.constant 0 : index
    %c0_72 = arith.constant 0 : index
    %295 = vector.load %arg4[%c0_71, %c0_72] : memref<128x384xf32, #tpu.memory_space<vmem>>, vector<128x384xf32>
    %cst_73 = arith.constant dense<0.000000e+00> : vector<8x384xf32>
    %296 = tpu.matmul %267, %295, %cst_73 {dimension_numbers = #tpu.dot_dimension_numbers<[1], [0], [0], [1], [0, 0, 1, 1], [], []>} : vector<8x128xf32>, vector<128x384xf32>, vector<8x384xf32> -> vector<8x384xf32>
    %297 = vector.extract_strided_slice %294 {offsets = [0, 0], sizes = [8, 128], strides = [1, 1]} : vector<8x384xf32> to vector<8x128xf32>
    %298 = vector.extract_strided_slice %296 {offsets = [0, 0], sizes = [8, 128], strides = [1, 1]} : vector<8x384xf32> to vector<8x128xf32>
    %299 = arith.addf %297, %298 : vector<8x128xf32>
    %300 = arith.negf %299 : vector<8x128xf32>
    %301 = math.exp %300 : vector<8x128xf32>
    %cst_74 = arith.constant 1.000000e+00 : f32
    %302 = vector.broadcast %cst_74 : f32 to vector<8x128xf32>
    %303 = arith.addf %302, %301 : vector<8x128xf32>
    %304 = arith.divf %302, %303 : vector<8x128xf32>
    %305 = vector.extract_strided_slice %294 {offsets = [0, 128], sizes = [8, 128], strides = [1, 1]} : vector<8x384xf32> to vector<8x128xf32>
    %306 = vector.extract_strided_slice %296 {offsets = [0, 128], sizes = [8, 128], strides = [1, 1]} : vector<8x384xf32> to vector<8x128xf32>
    %307 = arith.addf %305, %306 : vector<8x128xf32>
    %308 = arith.negf %307 : vector<8x128xf32>
    %309 = math.exp %308 : vector<8x128xf32>
    %cst_75 = arith.constant 1.000000e+00 : f32
    %310 = vector.broadcast %cst_75 : f32 to vector<8x128xf32>
    %311 = arith.addf %310, %309 : vector<8x128xf32>
    %312 = arith.divf %310, %311 : vector<8x128xf32>
    %313 = vector.extract_strided_slice %294 {offsets = [0, 256], sizes = [8, 128], strides = [1, 1]} : vector<8x384xf32> to vector<8x128xf32>
    %314 = vector.extract_strided_slice %296 {offsets = [0, 256], sizes = [8, 128], strides = [1, 1]} : vector<8x384xf32> to vector<8x128xf32>
    %315 = arith.addf %314, %2 : vector<8x128xf32>
    %316 = arith.mulf %304, %315 : vector<8x128xf32>
    %317 = arith.addf %313, %316 : vector<8x128xf32>
    %318 = math.tanh %317 : vector<8x128xf32>
    %cst_76 = arith.constant 1.000000e+00 : f32
    %319 = vector.broadcast %cst_76 : f32 to vector<8x128xf32>
    %320 = arith.subf %319, %312 : vector<8x128xf32>
    %321 = arith.mulf %320, %318 : vector<8x128xf32>
    %322 = arith.mulf %312, %267 : vector<8x128xf32>
    %323 = arith.addf %321, %322 : vector<8x128xf32>
    %324 = tpu.concatenate %323, %293 in 1 : vector<8x128xf32>, vector<8x128xf32> -> vector<8x256xf32>
    %c0_77 = arith.constant 0 : index
    %c0_78 = arith.constant 0 : index
    %325 = vector.load %arg6[%c0_77, %c0_78] : memref<256x512xf32, #tpu.memory_space<vmem>>, vector<256x512xf32>
    %cst_79 = arith.constant dense<0.000000e+00> : vector<8x512xf32>
    %326 = tpu.matmul %324, %325, %cst_79 {dimension_numbers = #tpu.dot_dimension_numbers<[1], [0], [0], [1], [0, 0, 1, 1], [], []>} : vector<8x256xf32>, vector<256x512xf32>, vector<8x512xf32> -> vector<8x512xf32>
    %327 = arith.addf %326, %5 : vector<8x512xf32>
    %328 = vector.extract_strided_slice %327 {offsets = [0, 0], sizes = [8, 128], strides = [1, 1]} : vector<8x512xf32> to vector<8x128xf32>
    %329 = arith.negf %328 : vector<8x128xf32>
    %330 = math.exp %329 : vector<8x128xf32>
    %cst_80 = arith.constant 1.000000e+00 : f32
    %331 = vector.broadcast %cst_80 : f32 to vector<8x128xf32>
    %332 = arith.addf %331, %330 : vector<8x128xf32>
    %333 = arith.divf %331, %332 : vector<8x128xf32>
    %334 = vector.extract_strided_slice %327 {offsets = [0, 128], sizes = [8, 128], strides = [1, 1]} : vector<8x512xf32> to vector<8x128xf32>
    %335 = arith.negf %334 : vector<8x128xf32>
    %336 = math.exp %335 : vector<8x128xf32>
    %cst_81 = arith.constant 1.000000e+00 : f32
    %337 = vector.broadcast %cst_81 : f32 to vector<8x128xf32>
    %338 = arith.addf %337, %336 : vector<8x128xf32>
    %339 = arith.divf %337, %338 : vector<8x128xf32>
    %340 = vector.extract_strided_slice %327 {offsets = [0, 256], sizes = [8, 128], strides = [1, 1]} : vector<8x512xf32> to vector<8x128xf32>
    %341 = vector.extract_strided_slice %327 {offsets = [0, 384], sizes = [8, 128], strides = [1, 1]} : vector<8x512xf32> to vector<8x128xf32>
    %342 = arith.mulf %333, %341 : vector<8x128xf32>
    %343 = arith.addf %340, %342 : vector<8x128xf32>
    %344 = math.tanh %343 : vector<8x128xf32>
    %cst_82 = arith.constant 1.000000e+00 : f32
    %345 = vector.broadcast %cst_82 : f32 to vector<8x128xf32>
    %346 = arith.subf %345, %339 : vector<8x128xf32>
    %347 = arith.mulf %346, %344 : vector<8x128xf32>
    %348 = arith.mulf %339, %293 : vector<8x128xf32>
    %349 = arith.addf %347, %348 : vector<8x128xf32>
    %350 = tpu.concatenate %69, %125, %181, %237, %293, %349 in 0 : vector<8x128xf32>, vector<8x128xf32>, vector<8x128xf32>, vector<8x128xf32>, vector<8x128xf32>, vector<8x128xf32> -> vector<48x128xf32>
    %c0_83 = arith.constant 0 : index
    %c0_84 = arith.constant 0 : index
    %351 = vector.load %arg8[%c0_83, %c0_84] : memref<128x128xf32, #tpu.memory_space<vmem>>, vector<128x128xf32>
    %cst_85 = arith.constant dense<0.000000e+00> : vector<48x128xf32>
    %352 = tpu.matmul %350, %351, %cst_85 {dimension_numbers = #tpu.dot_dimension_numbers<[1], [0], [0], [1], [0, 0, 1, 1], [], []>} : vector<48x128xf32>, vector<128x128xf32>, vector<48x128xf32> -> vector<48x128xf32>
    %c0_86 = arith.constant 0 : index
    %c0_87 = arith.constant 0 : index
    %353 = vector.load %arg9[%c0_86, %c0_87] : memref<1x128xf32, #tpu.memory_space<vmem>>, vector<1x128xf32>
    %354 = vector.shape_cast %353 : vector<1x128xf32> to vector<1x128xf32>
    %355 = vector.broadcast %354 : vector<1x128xf32> to vector<48x128xf32>
    %356 = arith.addf %352, %355 : vector<48x128xf32>
    %c0_88 = arith.constant 0 : index
    %c0_89 = arith.constant 0 : index
    %357 = vector.load %arg10[%c0_88, %c0_89] : memref<48x128xf32, #tpu.memory_space<vmem>>, vector<48x128xf32>
    tpu.vector_store %arg10[%c0_88, %c0_89], %356 {strides = array<i32>} : memref<48x128xf32, #tpu.memory_space<vmem>>, vector<48x128xf32>,
    return
  }
}

</mosaic_0001>

<llo_original>
// kernel: tpu_custom_call.1
$region0: #{tpu_custom_call.1}
  #allocation0 [shape = 'u32[]', space=smem, size = 0x4, offset = 0x4, fixed_abs, tag = 'smem constant byte address 0x4 - core index']
  #allocation1 [shape = 'u32[72,128]{1,0:T(1,128)}', space=vmem, size = 0x9000, scoped, tag = 'internal scratch']
  %s0 = inlined_call_operand.vmem [shape: f32[48,16], index: 0, kind: input, shape index: {}]
  %s1 = inlined_call_operand.vmem [shape: f32[8,128], index: 1, kind: input, shape index: {}]
  %s2 = inlined_call_operand.vmem [shape: f32[16,384], index: 2, kind: input, shape index: {}]
  %s3 = inlined_call_operand.vmem [shape: f32[1,384], index: 3, kind: input, shape index: {}]
  %s4 = inlined_call_operand.hbm [shape: f32[128,384], index: 4, kind: input, shape index: {}]
  %s5 = inlined_call_operand.vmem [shape: f32[1,128], index: 5, kind: input, shape index: {}]
  %s6 = inlined_call_operand.hbm [shape: f32[256,512], index: 6, kind: input, shape index: {}]
  %s7 = inlined_call_operand.vmem [shape: f32[1,512], index: 7, kind: input, shape index: {}]
  %s8 = inlined_call_operand.hbm [shape: f32[128,128], index: 8, kind: input, shape index: {}]
  %s9 = inlined_call_operand.vmem [shape: f32[1,128], index: 9, kind: input, shape index: {}]
  %s10 = inlined_call_operand.hbm [shape: f32[48,128], index: 10, kind: output, shape index: {}]
  %s11 = sld [smem:[#allocation0]]
  $region62: #{tpu_custom_call.1} parent=0
    _
  %s13 = ssub.s32 1, %s11
  %s14 = scalar_select 0, %s13, %s11
  $region1: #{tpu_custom_call.1} parent=0
    #allocation2 [shape = 'u8[196608]{0}', space=vmem, size = 0x30000, scoped, tag = 'input window, operand 4, single buffered']
    #allocation3 [shape = 's32[1]{0}', space=sflag, size = 0x4, scoped, tag = 'scoped memory for tpu_custom_call.1']
    #allocation4 [shape = 's32[1]{0}', space=sflag, size = 0x4, scoped, tag = 'scoped memory for tpu_custom_call.1']
    #allocation5 [shape = 'u8[524288]{0}', space=vmem, size = 0x80000, scoped, tag = 'input window, operand 6, single buffered']
    #allocation6 [shape = 's32[1]{0}', space=sflag, size = 0x4, scoped, tag = 'scoped memory for tpu_custom_call.1']
    #allocation7 [shape = 'u8[65536]{0}', space=vmem, size = 0x10000, scoped, tag = 'input window, operand 8, single buffered']
    #allocation8 [shape = 'u8[24576]{0}', space=vmem, size = 0x6000, scoped, tag = 'output window, operand 0, single buffered']
    %15 = vsyncpa [#allocation3], 0
    %16 = vsyncpa [#allocation6], 0
    %17 = vsyncpa [#allocation4], 0
    // Predicated region
    $region2: #{tpu_custom_call.1} parent=1 // pred_check
      _
    $region3: #{tpu_custom_call.1} parent=1 // pred_check_branch
      %19 = sbr.rel (0) target = $region5
    $region4: #{tpu_custom_call.1} parent=1 // pred_region
      _
    $region5: #{tpu_custom_call.1} parent=1 // pred_fallthru
      _
    // Predicated region
    $region6: #{tpu_custom_call.1} parent=1 // pred_check
      _
    $region7: #{tpu_custom_call.1} parent=1 // pred_check_branch
      %21 = sbr.rel (0) target = $region9
    $region8: #{tpu_custom_call.1} parent=1 // pred_region
      _
    $region9: #{tpu_custom_call.1} parent=1 // pred_fallthru
      _
    // Predicated region
    $region10: #{tpu_custom_call.1} parent=1 // pred_check
      _
    $region11: #{tpu_custom_call.1} parent=1 // pred_check_branch
      %23 = sbr.rel (0) target = $region13
    $region12: #{tpu_custom_call.1} parent=1 // pred_region
      _
    $region13: #{tpu_custom_call.1} parent=1 // pred_fallthru
      _
    // Predicated region
    $region14: #{tpu_custom_call.1} parent=1 // pred_check
      _
    $region15: #{tpu_custom_call.1} parent=1 // pred_check_branch
      %25 = sbr.rel (0) target = $region17
    $region16: #{tpu_custom_call.1} parent=1 // pred_region
      _
    $region17: #{tpu_custom_call.1} parent=1 // pred_fallthru
      _
    // Predicated region
    $region18: #{tpu_custom_call.1} parent=1 // pred_check
      _
    $region19: #{tpu_custom_call.1} parent=1 // pred_check_branch
      %27 = sbr.rel (0) target = $region21
    $region20: #{tpu_custom_call.1} parent=1 // pred_region
      %29 = vsyncadd [#allocation3], 0
      %s30 = sshll.u32 %s4, 4
      %s31 = int_to_ptr.hbm [resolvable:$true] %s30
      %s32 = sshll.u32 [#allocation2], 4
      %s33 = int_to_ptr.vmem [resolvable:$true] %s32
      %38 = dma.hbm_to_vmem [thread:$0]  %s31, 6144, %s33, [#allocation3], 384, 384, 24
    $region21: #{tpu_custom_call.1} parent=1 // pred_fallthru
      _
    // Predicated region
    $region22: #{tpu_custom_call.1} parent=1 // pred_check
      _
    $region23: #{tpu_custom_call.1} parent=1 // pred_check_branch
      %40 = sbr.rel (0) target = $region25
    $region24: #{tpu_custom_call.1} parent=1 // pred_region
      _
    $region25: #{tpu_custom_call.1} parent=1 // pred_fallthru
      _
    // Predicated region
    $region26: #{tpu_custom_call.1} parent=1 // pred_check
      _
    $region27: #{tpu_custom_call.1} parent=1 // pred_check_branch
      %42 = sbr.rel (0) target = $region29
    $region28: #{tpu_custom_call.1} parent=1 // pred_region
      %44 = vsyncadd [#allocation6], 0
      %s45 = sshll.u32 %s6, 4
      %s46 = int_to_ptr.hbm [resolvable:$true] %s45
      %s47 = sshll.u32 [#allocation5], 4
      %s48 = int_to_ptr.vmem [resolvable:$true] %s47
      %53 = dma.hbm_to_vmem [thread:$0]  %s46, 16384, %s48, [#allocation6], 512, 512, 32
    $region29: #{tpu_custom_call.1} parent=1 // pred_fallthru
      _
    // Predicated region
    $region30: #{tpu_custom_call.1} parent=1 // pred_check
      _
    $region31: #{tpu_custom_call.1} parent=1 // pred_check_branch
      %55 = sbr.rel (0) target = $region33
    $region32: #{tpu_custom_call.1} parent=1 // pred_region
      _
    $region33: #{tpu_custom_call.1} parent=1 // pred_fallthru
      _
    // Predicated region
    $region34: #{tpu_custom_call.1} parent=1 // pred_check
      _
    $region35: #{tpu_custom_call.1} parent=1 // pred_check_branch
      %57 = sbr.rel (0) target = $region37
    $region36: #{tpu_custom_call.1} parent=1 // pred_region
      %59 = vsyncadd [#allocation6], 0
      %s60 = sshll.u32 %s8, 4
      %s61 = int_to_ptr.hbm [resolvable:$true] %s60
      %s62 = sshll.u32 [#allocation7], 4
      %s63 = int_to_ptr.vmem [resolvable:$true] %s62
      %68 = dma.hbm_to_vmem [thread:$0]  %s61, 2048, %s63, [#allocation6], 128, 128, 8
    $region37: #{tpu_custom_call.1} parent=1 // pred_fallthru
      _
    // Predicated region
    $region38: #{tpu_custom_call.1} parent=1 // pred_check
      _
    $region39: #{tpu_custom_call.1} parent=1 // pred_check_branch
      %70 = sbr.rel (0) target = $region41
    $region40: #{tpu_custom_call.1} parent=1 // pred_region
      _
    $region41: #{tpu_custom_call.1} parent=1 // pred_fallthru
      _
    // Predicated region
    $region42: #{tpu_custom_call.1} parent=1 // pred_check
      _
    $region43: #{tpu_custom_call.1} parent=1 // pred_check_branch
      %72 = sbr.rel (0) target = $region45
    $region44: #{tpu_custom_call.1} parent=1 // pred_region
      %74 = dma.done [#allocation3], 6144
    $region45: #{tpu_custom_call.1} parent=1 // pred_fallthru
      _
    // Predicated region
    $region46: #{tpu_custom_call.1} parent=1 // pred_check
      _
    $region47: #{tpu_custom_call.1} parent=1 // pred_check_branch
      %76 = sbr.rel (0) target = $region49
    $region48: #{tpu_custom_call.1} parent=1 // pred_region
      %78 = dma.done [#allocation6], 16384
    $region49: #{tpu_custom_call.1} parent=1 // pred_fallthru
      _
    // Predicated region
    $region50: #{tpu_custom_call.1} parent=1 // pred_check
      _
    $region51: #{tpu_custom_call.1} parent=1 // pred_check_branch
      %80 = sbr.rel (0) target = $region53
    $region52: #{tpu_custom_call.1} parent=1 // pred_region
      %82 = dma.done [#allocation6], 2048
    $region53: #{tpu_custom_call.1} parent=1 // pred_fallthru
      _
    %v83 = vld [vmem:[%s5] sm:$0x1]
    %v85 = vperm.slane %v83, 0
    %v87 = vld [vmem:[%s7] sm:$0xf]
    %v89 = vperm.slane %v87, 0
    %v90 = vperm.slane %v87, 1
    %v91 = vperm.slane %v87, 2
    %v92 = vperm.slane %v87, 3
    %v97 = vld [vmem:[%s0] sm:$0xff]
    %v98 = vld [vmem:[%s0 + $0x8] sm:$0xff]
    %v99 = vld [vmem:[%s0 + $0x10] sm:$0xff]
    %v100 = vld [vmem:[%s0 + $0x18] sm:$0xff]
    %v101 = vld [vmem:[%s0 + $0x20] sm:$0xff]
    %v102 = vld [vmem:[%s0 + $0x28] sm:$0xff]
    %v103 = vld [vmem:[%s2] sm:$0xff]
    %v104 = vld [vmem:[%s2 + $0x8] sm:$0xff]
    %v105 = vld [vmem:[%s2 + $0x10] sm:$0xff]
    %v106 = vld [vmem:[%s2 + $0x18] sm:$0xff]
    %v107 = vld [vmem:[%s2 + $0x20] sm:$0xff]
    %v108 = vld [vmem:[%s2 + $0x28] sm:$0xff]
    %v109 = vld [vmem:[%s3] sm:$0x7]
    %v111 = vperm.slane %v109, 0
    %v112 = vperm.slane %v109, 1
    %v113 = vperm.slane %v109, 2
    %vm117 = vcmask 130048
    %v119 = vsel %vm117, %v97, 0
    %v122 = vsel %vm117, %v98, 0
    %v125 = vsel %vm117, %v99, 0
    %v128 = vsel %vm117, %v100, 0
    %v131 = vsel %vm117, %v101, 0
    %v134 = vsel %vm117, %v102, 0
    %136 = vmatpush.msra.mxu0 0.0
    %137 = vmatpush.msra.mxu0 0.0
    %138 = vmatpush.msra.mxu0 0.0
    %139 = vmatpush.msra.mxu0 0.0
    %140 = vmatpush.msra.mxu0 0.0
    %141 = vmatpush.msra.mxu0 0.0
    %142 = vmatpush.msra.mxu0 0.0
    %143 = vmatpush.msra.mxu0 0.0
    %144 = vmatpush.msra.mxu0 0.0
    %145 = vmatpush.msra.mxu0 0.0
    %146 = vmatpush.msra.mxu0 0.0
    %147 = vmatpush.msra.mxu0 0.0
    %148 = vmatpush.msra.mxu0 0.0
    %149 = vmatpush.msra.mxu0 0.0
    %150 = vmatpush.msra.mxu0 %v106
    %151 = vmatpush.msra.mxu0 %v103
    %152 = vmatmul.f32.gmra.mxu0 %v119
    %v153 = vpop.f32.mrf.mxu0
    %v154 = vadd.f32 %v111, %v153
    %155 = vmatmul.f32.gmra.mxu0 %v122
    %v156 = vpop.f32.mrf.mxu0
    %v157 = vadd.f32 %v111, %v156
    %158 = vmatmul.f32.gmra.mxu0 %v125
    %v159 = vpop.f32.mrf.mxu0
    %v160 = vadd.f32 %v111, %v159
    %161 = vmatmul.f32.gmra.mxu0 %v128
    %v162 = vpop.f32.mrf.mxu0
    %v163 = vadd.f32 %v111, %v162
    %164 = vmatmul.f32.gmra.mxu0 %v131
    %v165 = vpop.f32.mrf.mxu0
    %v166 = vadd.f32 %v111, %v165
    %167 = vmatmul.f32.gmra.mxu0 %v134
    %v168 = vpop.f32.mrf.mxu0
    %v169 = vadd.f32 %v111, %v168
    %170 = vdwg.mxu0
    %171 = vmatpush.msra.mxu0 0.0
    %172 = vmatpush.msra.mxu0 0.0
    %173 = vmatpush.msra.mxu0 0.0
    %174 = vmatpush.msra.mxu0 0.0
    %175 = vmatpush.msra.mxu0 0.0
    %176 = vmatpush.msra.mxu0 0.0
    %177 = vmatpush.msra.mxu0 0.0
    %178 = vmatpush.msra.mxu0 0.0
    %179 = vmatpush.msra.mxu0 0.0
    %180 = vmatpush.msra.mxu0 0.0
    %181 = vmatpush.msra.mxu0 0.0
    %182 = vmatpush.msra.mxu0 0.0
    %183 = vmatpush.msra.mxu0 0.0
    %184 = vmatpush.msra.mxu0 0.0
    %185 = vmatpush.msra.mxu0 %v107
    %186 = vmatpush.msra.mxu0 %v104
    %187 = vmatmul.f32.gmra.mxu0 %v119
    %v188 = vpop.f32.mrf.mxu0
    %v189 = vadd.f32 %v112, %v188
    %190 = vmatmul.f32.gmra.mxu0 %v122
    %v191 = vpop.f32.mrf.mxu0
    %v192 = vadd.f32 %v112, %v191
    %193 = vmatmul.f32.gmra.mxu0 %v125
    %v194 = vpop.f32.mrf.mxu0
    %v195 = vadd.f32 %v112, %v194
    %196 = vmatmul.f32.gmra.mxu0 %v128
    %v197 = vpop.f32.mrf.mxu0
    %v198 = vadd.f32 %v112, %v197
    %199 = vmatmul.f32.gmra.mxu0 %v131
    %v200 = vpop.f32.mrf.mxu0
    %v201 = vadd.f32 %v112, %v200
    %202 = vmatmul.f32.gmra.mxu0 %v134
    %v203 = vpop.f32.mrf.mxu0
    %v204 = vadd.f32 %v112, %v203
    %205 = vdwg.mxu0
    %206 = vmatpush.msra.mxu0 0.0
    %207 = vmatpush.msra.mxu0 0.0
    %208 = vmatpush.msra.mxu0 0.0
    %209 = vmatpush.msra.mxu0 0.0
    %210 = vmatpush.msra.mxu0 0.0
    %211 = vmatpush.msra.mxu0 0.0
    %212 = vmatpush.msra.mxu0 0.0
    %213 = vmatpush.msra.mxu0 0.0
    %214 = vmatpush.msra.mxu0 0.0
    %215 = vmatpush.msra.mxu0 0.0
    %216 = vmatpush.msra.mxu0 0.0
    %217 = vmatpush.msra.mxu0 0.0
    %218 = vmatpush.msra.mxu0 0.0
    %219 = vmatpush.msra.mxu0 0.0
    %220 = vmatpush.msra.mxu0 %v108
    %221 = vmatpush.msra.mxu0 %v105
    %222 = vmatmul.f32.gmra.mxu0 %v119
    %v223 = vpop.f32.mrf.mxu0
    %v224 = vadd.f32 %v113, %v223
    %225 = vmatmul.f32.gmra.mxu0 %v122
    %v226 = vpop.f32.mrf.mxu0
    %v227 = vadd.f32 %v113, %v226
    %228 = vmatmul.f32.gmra.mxu0 %v125
    %v229 = vpop.f32.mrf.mxu0
    %v230 = vadd.f32 %v113, %v229
    %231 = vmatmul.f32.gmra.mxu0 %v128
    %v232 = vpop.f32.mrf.mxu0
    %v233 = vadd.f32 %v113, %v232
    %234 = vmatmul.f32.gmra.mxu0 %v131
    %v235 = vpop.f32.mrf.mxu0
    %v236 = vadd.f32 %v113, %v235
    %237 = vmatmul.f32.gmra.mxu0 %v134
    %v238 = vpop.f32.mrf.mxu0
    %v239 = vadd.f32 %v113, %v238
    %240 = vdwg.mxu0
    %v241 = vld [vmem:[%s1] sm:$0xff]
    %v242 = vld [vmem:[#allocation2] sm:$0xff]
    %v243 = vld [vmem:[#allocation2 + $0x8] sm:$0xff]
    %v244 = vld [vmem:[#allocation2 + $0x10] sm:$0xff]
    %v245 = vld [vmem:[#allocation2 + $0x18] sm:$0xff]
    %v246 = vld [vmem:[#allocation2 + $0x20] sm:$0xff]
    %v247 = vld [vmem:[#allocation2 + $0x28] sm:$0xff]
    %v248 = vld [vmem:[#allocation2 + $0x30] sm:$0xff]
    %v249 = vld [vmem:[#allocation2 + $0x38] sm:$0xff]
    %v250 = vld [vmem:[#allocation2 + $0x40] sm:$0xff]
    %v251 = vld [vmem:[#allocation2 + $0x48] sm:$0xff]
    %v252 = vld [vmem:[#allocation2 + $0x50] sm:$0xff]
    %v253 = vld [vmem:[#allocation2 + $0x58] sm:$0xff]
    %v254 = vld [vmem:[#allocation2 + $0x60] sm:$0xff]
    %v255 = vld [vmem:[#allocation2 + $0x68] sm:$0xff]
    %v256 = vld [vmem:[#allocation2 + $0x70] sm:$0xff]
    %v257 = vld [vmem:[#allocation2 + $0x78] sm:$0xff]
    %v258 = vld [vmem:[#allocation2 + $0x80] sm:$0xff]
    %v259 = vld [vmem:[#allocation2 + $0x88] sm:$0xff]
    %v260 = vld [vmem:[#allocation2 + $0x90] sm:$0xff]
    %v261 = vld [vmem:[#allocation2 + $0x98] sm:$0xff]
    %v262 = vld [vmem:[#allocation2 + $0xa0] sm:$0xff]
    %v263 = vld [vmem:[#allocation2 + $0xa8] sm:$0xff]
    %v264 = vld [vmem:[#allocation2 + $0xb0] sm:$0xff]
    %v265 = vld [vmem:[#allocation2 + $0xb8] sm:$0xff]
    %v266 = vld [vmem:[#allocation2 + $0xc0] sm:$0xff]
    %v267 = vld [vmem:[#allocation2 + $0xc8] sm:$0xff]
    %v268 = vld [vmem:[#allocation2 + $0xd0] sm:$0xff]
    %v269 = vld [vmem:[#allocation2 + $0xd8] sm:$0xff]
    %v270 = vld [vmem:[#allocation2 + $0xe0] sm:$0xff]
    %v271 = vld [vmem:[#allocation2 + $0xe8] sm:$0xff]
    %v272 = vld [vmem:[#allocation2 + $0xf0] sm:$0xff]
    %v273 = vld [vmem:[#allocation2 + $0xf8] sm:$0xff]
    %v274 = vld [vmem:[#allocation2 + $0x100] sm:$0xff]
    %v275 = vld [vmem:[#allocation2 + $0x108] sm:$0xff]
    %v276 = vld [vmem:[#allocation2 + $0x110] sm:$0xff]
    %v277 = vld [vmem:[#allocation2 + $0x118] sm:$0xff]
    %v278 = vld [vmem:[#allocation2 + $0x120] sm:$0xff]
    %v279 = vld [vmem:[#allocation2 + $0x128] sm:$0xff]
    %v280 = vld [vmem:[#allocation2 + $0x130] sm:$0xff]
    %v281 = vld [vmem:[#allocation2 + $0x138] sm:$0xff]
    %v282 = vld [vmem:[#allocation2 + $0x140] sm:$0xff]
    %v283 = vld [vmem:[#allocation2 + $0x148] sm:$0xff]
    %v284 = vld [vmem:[#allocation2 + $0x150] sm:$0xff]
    %v285 = vld [vmem:[#allocation2 + $0x158] sm:$0xff]
    %v286 = vld [vmem:[#allocation2 + $0x160] sm:$0xff]
    %v287 = vld [vmem:[#allocation2 + $0x168] sm:$0xff]
    %v288 = vld [vmem:[#allocation2 + $0x170] sm:$0xff]
    %v289 = vld [vmem:[#allocation2 + $0x178] sm:$0xff]
    %290 = vmatpush.msra.mxu0 %v287
    %291 = vmatpush.msra.mxu0 %v284
    %292 = vmatpush.msra.mxu0 %v281
    %293 = vmatpush.msra.mxu0 %v278
    %294 = vmatpush.msra.mxu0 %v275
    %295 = vmatpush.msra.mxu0 %v272
    %296 = vmatpush.msra.mxu0 %v269
    %297 = vmatpush.msra.mxu0 %v266
    %298 = vmatpush.msra.mxu0 %v263
    %299 = vmatpush.msra.mxu0 %v260
    %300 = vmatpush.msra.mxu0 %v257
    %301 = vmatpush.msra.mxu0 %v254
    %302 = vmatpush.msra.mxu0 %v251
    %303 = vmatpush.msra.mxu0 %v248
    %304 = vmatpush.msra.mxu0 %v245
    %305 = vmatpush.msra.mxu0 %v242
    %306 = vmatmul.f32.gmra.mxu0 %v241
    %v307 = vpop.f32.mrf.mxu0
    %v308 = vadd.f32 0.0, %v307
    %309 = vdwg.mxu0
    %310 = vmatpush.msra.mxu0 %v288
    %311 = vmatpush.msra.mxu0 %v285
    %312 = vmatpush.msra.mxu0 %v282
    %313 = vmatpush.msra.mxu0 %v279
    %314 = vmatpush.msra.mxu0 %v276
    %315 = vmatpush.msra.mxu0 %v273
    %316 = vmatpush.msra.mxu0 %v270
    %317 = vmatpush.msra.mxu0 %v267
    %318 = vmatpush.msra.mxu0 %v264
    %319 = vmatpush.msra.mxu0 %v261
    %320 = vmatpush.msra.mxu0 %v258
    %321 = vmatpush.msra.mxu0 %v255
    %322 = vmatpush.msra.mxu0 %v252
    %323 = vmatpush.msra.mxu0 %v249
    %324 = vmatpush.msra.mxu0 %v246
    %325 = vmatpush.msra.mxu0 %v243
    %326 = vmatmul.f32.gmra.mxu0 %v241
    %v327 = vpop.f32.mrf.mxu0
    %v328 = vadd.f32 0.0, %v327
    %329 = vdwg.mxu0
    %330 = vmatpush.msra.mxu0 %v289
    %331 = vmatpush.msra.mxu0 %v286
    %332 = vmatpush.msra.mxu0 %v283
    %333 = vmatpush.msra.mxu0 %v280
    %334 = vmatpush.msra.mxu0 %v277
    %335 = vmatpush.msra.mxu0 %v274
    %336 = vmatpush.msra.mxu0 %v271
    %337 = vmatpush.msra.mxu0 %v268
    %338 = vmatpush.msra.mxu0 %v265
    %339 = vmatpush.msra.mxu0 %v262
    %340 = vmatpush.msra.mxu0 %v259
    %341 = vmatpush.msra.mxu0 %v256
    %342 = vmatpush.msra.mxu0 %v253
    %343 = vmatpush.msra.mxu0 %v250
    %344 = vmatpush.msra.mxu0 %v247
    %345 = vmatpush.msra.mxu0 %v244
    %346 = vmatmul.f32.gmra.mxu0 %v241
    %v347 = vpop.f32.mrf.mxu0
    %v348 = vadd.f32 0.0, %v347
    %349 = vdwg.mxu0
    %v350 = vadd.f32 %v154, %v308
    %v351 = vxor.u32 %v350, 2147483648
    %v352 = vmul.f32 %v351, 1.442695
    %v353 = vpow.pop %v352
    %v354 = vadd.f32 %v353, 1.0
    %v355 = vrcp.pop %v354
    %v356 = vmul.f32 %v354, %v355
    %v357 = vsub.f32 1.0, %v356
    %v358 = vmul.f32 %v355, %v357
    %v359 = vadd.f32 %v355, %v358
    %vm360 = vweird.f32 %v354
    %vm361 = vweird.f32 %v355
    %vm362 = vmor %vm360, %vm361
    %v363 = vsel %vm362, %v355, %v359
    %v364 = vand.u32 2147483647, %v354
    %vm365 = vcmp.eq.f32.partialorder %v364, 8.507059e+37
    %v366 = vand.u32 %v354, 2147483648
    %v367 = vor.u32 1.1754944e-38, %v366
    %v368 = vsel %vm365, %v367, %v363
    %v369 = vmul.f32 1.0, %v368
    %v370 = vadd.f32 %v189, %v328
    %v371 = vxor.u32 %v370, 2147483648
    %v372 = vmul.f32 %v371, 1.442695
    %v373 = vpow.pop %v372
    %v374 = vadd.f32 %v373, 1.0
    %v375 = vrcp.pop %v374
    %v376 = vmul.f32 %v374, %v375
    %v377 = vsub.f32 1.0, %v376
    %v378 = vmul.f32 %v375, %v377
    %v379 = vadd.f32 %v375, %v378
    %vm380 = vweird.f32 %v374
    %vm381 = vweird.f32 %v375
    %vm382 = vmor %vm380, %vm381
    %v383 = vsel %vm382, %v375, %v379
    %v384 = vand.u32 2147483647, %v374
    %vm385 = vcmp.eq.f32.partialorder %v384, 8.507059e+37
    %v386 = vand.u32 %v374, 2147483648
    %v387 = vor.u32 1.1754944e-38, %v386
    %v388 = vsel %vm385, %v387, %v383
    %v389 = vmul.f32 1.0, %v388
    %v390 = vadd.f32 %v348, %v85
    %v391 = vmul.f32 %v369, %v390
    %v392 = vadd.f32 %v224, %v391
    %v393 = vtanh.pop %v392
    %v394 = vsub.f32 1.0, %v389
    %v395 = vmul.f32 %v394, %v393
    %v396 = vmul.f32 %v389, %v241
    %v397 = vadd.f32 %v395, %v396
    %v398 = vld [vmem:[#allocation5] sm:$0xff]
    %v399 = vld [vmem:[#allocation5 + $0x8] sm:$0xff]
    %v400 = vld [vmem:[#allocation5 + $0x10] sm:$0xff]
    %v401 = vld [vmem:[#allocation5 + $0x18] sm:$0xff]
    %v402 = vld [vmem:[#allocation5 + $0x20] sm:$0xff]
    %v403 = vld [vmem:[#allocation5 + $0x28] sm:$0xff]
    %v404 = vld [vmem:[#allocation5 + $0x30] sm:$0xff]
    %v405 = vld [vmem:[#allocation5 + $0x38] sm:$0xff]
    %v406 = vld [vmem:[#allocation5 + $0x40] sm:$0xff]
    %v407 = vld [vmem:[#allocation5 + $0x48] sm:$0xff]
    %v408 = vld [vmem:[#allocation5 + $0x50] sm:$0xff]
    %v409 = vld [vmem:[#allocation5 + $0x58] sm:$0xff]
    %v410 = vld [vmem:[#allocation5 + $0x60] sm:$0xff]
    %v411 = vld [vmem:[#allocation5 + $0x68] sm:$0xff]
    %v412 = vld [vmem:[#allocation5 + $0x70] sm:$0xff]
    %v413 = vld [vmem:[#allocation5 + $0x78] sm:$0xff]
    %v414 = vld [vmem:[#allocation5 + $0x80] sm:$0xff]
    %v415 = vld [vmem:[#allocation5 + $0x88] sm:$0xff]
    %v416 = vld [vmem:[#allocation5 + $0x90] sm:$0xff]
    %v417 = vld [vmem:[#allocation5 + $0x98] sm:$0xff]
    %v418 = vld [vmem:[#allocation5 + $0xa0] sm:$0xff]
    %v419 = vld [vmem:[#allocation5 + $0xa8] sm:$0xff]
    %v420 = vld [vmem:[#allocation5 + $0xb0] sm:$0xff]
    %v421 = vld [vmem:[#allocation5 + $0xb8] sm:$0xff]
    %v422 = vld [vmem:[#allocation5 + $0xc0] sm:$0xff]
    %v423 = vld [vmem:[#allocation5 + $0xc8] sm:$0xff]
    %v424 = vld [vmem:[#allocation5 + $0xd0] sm:$0xff]
    %v425 = vld [vmem:[#allocation5 + $0xd8] sm:$0xff]
    %v426 = vld [vmem:[#allocation5 + $0xe0] sm:$0xff]
    %v427 = vld [vmem:[#allocation5 + $0xe8] sm:$0xff]
    %v428 = vld [vmem:[#allocation5 + $0xf0] sm:$0xff]
    %v429 = vld [vmem:[#allocation5 + $0xf8] sm:$0xff]
    %v430 = vld [vmem:[#allocation5 + $0x100] sm:$0xff]
    %v431 = vld [vmem:[#allocation5 + $0x108] sm:$0xff]
    %v432 = vld [vmem:[#allocation5 + $0x110] sm:$0xff]
    %v433 = vld [vmem:[#allocation5 + $0x118] sm:$0xff]
    %v434 = vld [vmem:[#allocation5 + $0x120] sm:$0xff]
    %v435 = vld [vmem:[#allocation5 + $0x128] sm:$0xff]
    %v436 = vld [vmem:[#allocation5 + $0x130] sm:$0xff]
    %v437 = vld [vmem:[#allocation5 + $0x138] sm:$0xff]
    %v438 = vld [vmem:[#allocation5 + $0x140] sm:$0xff]
    %v439 = vld [vmem:[#allocation5 + $0x148] sm:$0xff]
    %v440 = vld [vmem:[#allocation5 + $0x150] sm:$0xff]
    %v441 = vld [vmem:[#allocation5 + $0x158] sm:$0xff]
    %v442 = vld [vmem:[#allocation5 + $0x160] sm:$0xff]
    %v443 = vld [vmem:[#allocation5 + $0x168] sm:$0xff]
    %v444 = vld [vmem:[#allocation5 + $0x170] sm:$0xff]
    %v445 = vld [vmem:[#allocation5 + $0x178] sm:$0xff]
    %v446 = vld [vmem:[#allocation5 + $0x180] sm:$0xff]
    %v447 = vld [vmem:[#allocation5 + $0x188] sm:$0xff]
    %v448 = vld [vmem:[#allocation5 + $0x190] sm:$0xff]
    %v449 = vld [vmem:[#allocation5 + $0x198] sm:$0xff]
    %v450 = vld [vmem:[#allocation5 + $0x1a0] sm:$0xff]
    %v451 = vld [vmem:[#allocation5 + $0x1a8] sm:$0xff]
    %v452 = vld [vmem:[#allocation5 + $0x1b0] sm:$0xff]
    %v453 = vld [vmem:[#allocation5 + $0x1b8] sm:$0xff]
    %v454 = vld [vmem:[#allocation5 + $0x1c0] sm:$0xff]
    %v455 = vld [vmem:[#allocation5 + $0x1c8] sm:$0xff]
    %v456 = vld [vmem:[#allocation5 + $0x1d0] sm:$0xff]
    %v457 = vld [vmem:[#allocation5 + $0x1d8] sm:$0xff]
    %v458 = vld [vmem:[#allocation5 + $0x1e0] sm:$0xff]
    %v459 = vld [vmem:[#allocation5 + $0x1e8] sm:$0xff]
    %v460 = vld [vmem:[#allocation5 + $0x1f0] sm:$0xff]
    %v461 = vld [vmem:[#allocation5 + $0x1f8] sm:$0xff]
    %v462 = vld [vmem:[#allocation5 + $0x200] sm:$0xff]
    %v463 = vld [vmem:[#allocation5 + $0x208] sm:$0xff]
    %v464 = vld [vmem:[#allocation5 + $0x210] sm:$0xff]
    %v465 = vld [vmem:[#allocation5 + $0x218] sm:$0xff]
    %v466 = vld [vmem:[#allocation5 + $0x220] sm:$0xff]
    %v467 = vld [vmem:[#allocation5 + $0x228] sm:$0xff]
    %v468 = vld [vmem:[#allocation5 + $0x230] sm:$0xff]
    %v469 = vld [vmem:[#allocation5 + $0x238] sm:$0xff]
    %v470 = vld [vmem:[#allocation5 + $0x240] sm:$0xff]
    %v471 = vld [vmem:[#allocation5 + $0x248] sm:$0xff]
    %v472 = vld [vmem:[#allocation5 + $0x250] sm:$0xff]
    %v473 = vld [vmem:[#allocation5 + $0x258] sm:$0xff]
    %v474 = vld [vmem:[#allocation5 + $0x260] sm:$0xff]
    %v475 = vld [vmem:[#allocation5 + $0x268] sm:$0xff]
    %v476 = vld [vmem:[#allocation5 + $0x270] sm:$0xff]
    %v477 = vld [vmem:[#allocation5 + $0x278] sm:$0xff]
    %v478 = vld [vmem:[#allocation5 + $0x280] sm:$0xff]
    %v479 = vld [vmem:[#allocation5 + $0x288] sm:$0xff]
    %v480 = vld [vmem:[#allocation5 + $0x290] sm:$0xff]
    %v481 = vld [vmem:[#allocation5 + $0x298] sm:$0xff]
    %v482 = vld [vmem:[#allocation5 + $0x2a0] sm:$0xff]
    %v483 = vld [vmem:[#allocation5 + $0x2a8] sm:$0xff]
    %v484 = vld [vmem:[#allocation5 + $0x2b0] sm:$0xff]
    %v485 = vld [vmem:[#allocation5 + $0x2b8] sm:$0xff]
    %v486 = vld [vmem:[#allocation5 + $0x2c0] sm:$0xff]
    %v487 = vld [vmem:[#allocation5 + $0x2c8] sm:$0xff]
    %v488 = vld [vmem:[#allocation5 + $0x2d0] sm:$0xff]
    %v489 = vld [vmem:[#allocation5 + $0x2d8] sm:$0xff]
    %v490 = vld [vmem:[#allocation5 + $0x2e0] sm:$0xff]
    %v491 = vld [vmem:[#allocation5 + $0x2e8] sm:$0xff]
    %v492 = vld [vmem:[#allocation5 + $0x2f0] sm:$0xff]
    %v493 = vld [vmem:[#allocation5 + $0x2f8] sm:$0xff]
    %v494 = vld [vmem:[#allocation5 + $0x300] sm:$0xff]
    %v495 = vld [vmem:[#allocation5 + $0x308] sm:$0xff]
    %v496 = vld [vmem:[#allocation5 + $0x310] sm:$0xff]
    %v497 = vld [vmem:[#allocation5 + $0x318] sm:$0xff]
    %v498 = vld [vmem:[#allocation5 + $0x320] sm:$0xff]
    %v499 = vld [vmem:[#allocation5 + $0x328] sm:$0xff]
    %v500 = vld [vmem:[#allocation5 + $0x330] sm:$0xff]
    %v501 = vld [vmem:[#allocation5 + $0x338] sm:$0xff]
    %v502 = vld [vmem:[#allocation5 + $0x340] sm:$0xff]
    %v503 = vld [vmem:[#allocation5 + $0x348] sm:$0xff]
    %v504 = vld [vmem:[#allocation5 + $0x350] sm:$0xff]
    %v505 = vld [vmem:[#allocation5 + $0x358] sm:$0xff]
    %v506 = vld [vmem:[#allocation5 + $0x360] sm:$0xff]
    %v507 = vld [vmem:[#allocation5 + $0x368] sm:$0xff]
    %v508 = vld [vmem:[#allocation5 + $0x370] sm:$0xff]
    %v509 = vld [vmem:[#allocation5 + $0x378] sm:$0xff]
    %v510 = vld [vmem:[#allocation5 + $0x380] sm:$0xff]
    %v511 = vld [vmem:[#allocation5 + $0x388] sm:$0xff]
    %v512 = vld [vmem:[#allocation5 + $0x390] sm:$0xff]
    %v513 = vld [vmem:[#allocation5 + $0x398] sm:$0xff]
    %v514 = vld [vmem:[#allocation5 + $0x3a0] sm:$0xff]
    %v515 = vld [vmem:[#allocation5 + $0x3a8] sm:$0xff]
    %v516 = vld [vmem:[#allocation5 + $0x3b0] sm:$0xff]
    %v517 = vld [vmem:[#allocation5 + $0x3b8] sm:$0xff]
    %v518 = vld [vmem:[#allocation5 + $0x3c0] sm:$0xff]
    %v519 = vld [vmem:[#allocation5 + $0x3c8] sm:$0xff]
    %v520 = vld [vmem:[#allocation5 + $0x3d0] sm:$0xff]
    %v521 = vld [vmem:[#allocation5 + $0x3d8] sm:$0xff]
    %v522 = vld [vmem:[#allocation5 + $0x3e0] sm:$0xff]
    %v523 = vld [vmem:[#allocation5 + $0x3e8] sm:$0xff]
    %v524 = vld [vmem:[#allocation5 + $0x3f0] sm:$0xff]
    %v525 = vld [vmem:[#allocation5 + $0x3f8] sm:$0xff]
    %526 = vmatpush.msra.mxu0 %v458
    %527 = vmatpush.msra.mxu0 %v454
    %528 = vmatpush.msra.mxu0 %v450
    %529 = vmatpush.msra.mxu0 %v446
    %530 = vmatpush.msra.mxu0 %v442
    %531 = vmatpush.msra.mxu0 %v438
    %532 = vmatpush.msra.mxu0 %v434
    %533 = vmatpush.msra.mxu0 %v430
    %534 = vmatpush.msra.mxu0 %v426
    %535 = vmatpush.msra.mxu0 %v422
    %536 = vmatpush.msra.mxu0 %v418
    %537 = vmatpush.msra.mxu0 %v414
    %538 = vmatpush.msra.mxu0 %v410
    %539 = vmatpush.msra.mxu0 %v406
    %540 = vmatpush.msra.mxu0 %v402
    %541 = vmatpush.msra.mxu0 %v398
    %542 = vmatmul.f32.gmra.mxu0 %v397
    %v543 = vpop.f32.mrf.mxu0
    %v544 = vadd.f32 %v89, %v543
    %545 = vdwg.mxu0
    %546 = vmatpush.msra.mxu0 %v522
    %547 = vmatpush.msra.mxu0 %v518
    %548 = vmatpush.msra.mxu0 %v514
    %549 = vmatpush.msra.mxu0 %v510
    %550 = vmatpush.msra.mxu0 %v506
    %551 = vmatpush.msra.mxu0 %v502
    %552 = vmatpush.msra.mxu0 %v498
    %553 = vmatpush.msra.mxu0 %v494
    %554 = vmatpush.msra.mxu0 %v490
    %555 = vmatpush.msra.mxu0 %v486
    %556 = vmatpush.msra.mxu0 %v482
    %557 = vmatpush.msra.mxu0 %v478
    %558 = vmatpush.msra.mxu0 %v474
    %559 = vmatpush.msra.mxu0 %v470
    %560 = vmatpush.msra.mxu0 %v466
    %561 = vmatpush.msra.mxu0 %v462
    %562 = vmatmul.f32.gmra.mxu0 %v241
    %v563 = vpop.f32.mrf.mxu0
    %v564 = vadd.f32 %v544, %v563
    %565 = vdwg.mxu0
    %566 = vmatpush.msra.mxu0 %v459
    %567 = vmatpush.msra.mxu0 %v455
    %568 = vmatpush.msra.mxu0 %v451
    %569 = vmatpush.msra.mxu0 %v447
    %570 = vmatpush.msra.mxu0 %v443
    %571 = vmatpush.msra.mxu0 %v439
    %572 = vmatpush.msra.mxu0 %v435
    %573 = vmatpush.msra.mxu0 %v431
    %574 = vmatpush.msra.mxu0 %v427
    %575 = vmatpush.msra.mxu0 %v423
    %576 = vmatpush.msra.mxu0 %v419
    %577 = vmatpush.msra.mxu0 %v415
    %578 = vmatpush.msra.mxu0 %v411
    %579 = vmatpush.msra.mxu0 %v407
    %580 = vmatpush.msra.mxu0 %v403
    %581 = vmatpush.msra.mxu0 %v399
    %582 = vmatmul.f32.gmra.mxu0 %v397
    %v583 = vpop.f32.mrf.mxu0
    %v584 = vadd.f32 %v90, %v583
    %585 = vdwg.mxu0
    %586 = vmatpush.msra.mxu0 %v523
    %587 = vmatpush.msra.mxu0 %v519
    %588 = vmatpush.msra.mxu0 %v515
    %589 = vmatpush.msra.mxu0 %v511
    %590 = vmatpush.msra.mxu0 %v507
    %591 = vmatpush.msra.mxu0 %v503
    %592 = vmatpush.msra.mxu0 %v499
    %593 = vmatpush.msra.mxu0 %v495
    %594 = vmatpush.msra.mxu0 %v491
    %595 = vmatpush.msra.mxu0 %v487
    %596 = vmatpush.msra.mxu0 %v483
    %597 = vmatpush.msra.mxu0 %v479
    %598 = vmatpush.msra.mxu0 %v475
    %599 = vmatpush.msra.mxu0 %v471
    %600 = vmatpush.msra.mxu0 %v467
    %601 = vmatpush.msra.mxu0 %v463
    %602 = vmatmul.f32.gmra.mxu0 %v241
    %v603 = vpop.f32.mrf.mxu0
    %v604 = vadd.f32 %v584, %v603
    %605 = vdwg.mxu0
    %606 = vmatpush.msra.mxu0 %v460
    %607 = vmatpush.msra.mxu0 %v456
    %608 = vmatpush.msra.mxu0 %v452
    %609 = vmatpush.msra.mxu0 %v448
    %610 = vmatpush.msra.mxu0 %v444
    %611 = vmatpush.msra.mxu0 %v440
    %612 = vmatpush.msra.mxu0 %v436
    %613 = vmatpush.msra.mxu0 %v432
    %614 = vmatpush.msra.mxu0 %v428
    %615 = vmatpush.msra.mxu0 %v424
    %616 = vmatpush.msra.mxu0 %v420
    %617 = vmatpush.msra.mxu0 %v416
    %618 = vmatpush.msra.mxu0 %v412
    %619 = vmatpush.msra.mxu0 %v408
    %620 = vmatpush.msra.mxu0 %v404
    %621 = vmatpush.msra.mxu0 %v400
    %622 = vmatmul.f32.gmra.mxu0 %v397
    %v623 = vpop.f32.mrf.mxu0
    %v624 = vadd.f32 %v91, %v623
    %625 = vdwg.mxu0
    %626 = vmatpush.msra.mxu0 %v524
    %627 = vmatpush.msra.mxu0 %v520
    %628 = vmatpush.msra.mxu0 %v516
    %629 = vmatpush.msra.mxu0 %v512
    %630 = vmatpush.msra.mxu0 %v508
    %631 = vmatpush.msra.mxu0 %v504
    %632 = vmatpush.msra.mxu0 %v500
    %633 = vmatpush.msra.mxu0 %v496
    %634 = vmatpush.msra.mxu0 %v492
    %635 = vmatpush.msra.mxu0 %v488
    %636 = vmatpush.msra.mxu0 %v484
    %637 = vmatpush.msra.mxu0 %v480
    %638 = vmatpush.msra.mxu0 %v476
    %639 = vmatpush.msra.mxu0 %v472
    %640 = vmatpush.msra.mxu0 %v468
    %641 = vmatpush.msra.mxu0 %v464
    %642 = vmatmul.f32.gmra.mxu0 %v241
    %v643 = vpop.f32.mrf.mxu0
    %v644 = vadd.f32 %v624, %v643
    %645 = vdwg.mxu0
    %646 = vmatpush.msra.mxu0 %v461
    %647 = vmatpush.msra.mxu0 %v457
    %648 = vmatpush.msra.mxu0 %v453
    %649 = vmatpush.msra.mxu0 %v449
    %650 = vmatpush.msra.mxu0 %v445
    %651 = vmatpush.msra.mxu0 %v441
    %652 = vmatpush.msra.mxu0 %v437
    %653 = vmatpush.msra.mxu0 %v433
    %654 = vmatpush.msra.mxu0 %v429
    %655 = vmatpush.msra.mxu0 %v425
    %656 = vmatpush.msra.mxu0 %v421
    %657 = vmatpush.msra.mxu0 %v417
    %658 = vmatpush.msra.mxu0 %v413
    %659 = vmatpush.msra.mxu0 %v409
    %660 = vmatpush.msra.mxu0 %v405
    %661 = vmatpush.msra.mxu0 %v401
    %662 = vmatmul.f32.gmra.mxu0 %v397
    %v663 = vpop.f32.mrf.mxu0
    %v664 = vadd.f32 %v92, %v663
    %665 = vdwg.mxu0
    %666 = vmatpush.msra.mxu0 %v525
    %667 = vmatpush.msra.mxu0 %v521
    %668 = vmatpush.msra.mxu0 %v517
    %669 = vmatpush.msra.mxu0 %v513
    %670 = vmatpush.msra.mxu0 %v509
    %671 = vmatpush.msra.mxu0 %v505
    %672 = vmatpush.msra.mxu0 %v501
    %673 = vmatpush.msra.mxu0 %v497
    %674 = vmatpush.msra.mxu0 %v493
    %675 = vmatpush.msra.mxu0 %v489
    %676 = vmatpush.msra.mxu0 %v485
    %677 = vmatpush.msra.mxu0 %v481
    %678 = vmatpush.msra.mxu0 %v477
    %679 = vmatpush.msra.mxu0 %v473
    %680 = vmatpush.msra.mxu0 %v469
    %681 = vmatpush.msra.mxu0 %v465
    %682 = vmatmul.f32.gmra.mxu0 %v241
    %v683 = vpop.f32.mrf.mxu0
    %v684 = vadd.f32 %v664, %v683
    %685 = vdwg.mxu0
    %v686 = vxor.u32 %v564, 2147483648
    %v687 = vmul.f32 %v686, 1.442695
    %v688 = vpow.pop %v687
    %v689 = vadd.f32 %v688, 1.0
    %v690 = vrcp.pop %v689
    %v691 = vmul.f32 %v689, %v690
    %v692 = vsub.f32 1.0, %v691
    %v693 = vmul.f32 %v690, %v692
    %v694 = vadd.f32 %v690, %v693
    %vm695 = vweird.f32 %v689
    %vm696 = vweird.f32 %v690
    %vm697 = vmor %vm695, %vm696
    %v698 = vsel %vm697, %v690, %v694
    %v699 = vand.u32 2147483647, %v689
    %vm700 = vcmp.eq.f32.partialorder %v699, 8.507059e+37
    %v701 = vand.u32 %v689, 2147483648
    %v702 = vor.u32 1.1754944e-38, %v701
    %v703 = vsel %vm700, %v702, %v698
    %v704 = vmul.f32 1.0, %v703
    %v705 = vxor.u32 %v604, 2147483648
    %v706 = vmul.f32 %v705, 1.442695
    %v707 = vpow.pop %v706
    %v708 = vadd.f32 %v707, 1.0
    %v709 = vrcp.pop %v708
    %v710 = vmul.f32 %v708, %v709
    %v711 = vsub.f32 1.0, %v710
    %v712 = vmul.f32 %v709, %v711
    %v713 = vadd.f32 %v709, %v712
    %vm714 = vweird.f32 %v708
    %vm715 = vweird.f32 %v709
    %vm716 = vmor %vm714, %vm715
    %v717 = vsel %vm716, %v709, %v713
    %v718 = vand.u32 2147483647, %v708
    %vm719 = vcmp.eq.f32.partialorder %v718, 8.507059e+37
    %v720 = vand.u32 %v708, 2147483648
    %v721 = vor.u32 1.1754944e-38, %v720
    %v722 = vsel %vm719, %v721, %v717
    %v723 = vmul.f32 1.0, %v722
    %v724 = vmul.f32 %v704, %v684
    %v725 = vadd.f32 %v644, %v724
    %v726 = vtanh.pop %v725
    %v727 = vsub.f32 1.0, %v723
    %v728 = vmul.f32 %v727, %v726
    %v729 = vmul.f32 %v723, %v241
    %v730 = vadd.f32 %v728, %v729
    %731 = vmatpush.msra.mxu0 %v287
    %732 = vmatpush.msra.mxu0 %v284
    %733 = vmatpush.msra.mxu0 %v281
    %734 = vmatpush.msra.mxu0 %v278
    %735 = vmatpush.msra.mxu0 %v275
    %736 = vmatpush.msra.mxu0 %v272
    %737 = vmatpush.msra.mxu0 %v269
    %738 = vmatpush.msra.mxu0 %v266
    %739 = vmatpush.msra.mxu0 %v263
    %740 = vmatpush.msra.mxu0 %v260
    %741 = vmatpush.msra.mxu0 %v257
    %742 = vmatpush.msra.mxu0 %v254
    %743 = vmatpush.msra.mxu0 %v251
    %744 = vmatpush.msra.mxu0 %v248
    %745 = vmatpush.msra.mxu0 %v245
    %746 = vmatpush.msra.mxu0 %v242
    %747 = vmatmul.f32.gmra.mxu0 %v397
    %v748 = vpop.f32.mrf.mxu0
    %v749 = vadd.f32 0.0, %v748
    %750 = vdwg.mxu0
    %751 = vmatpush.msra.mxu0 %v288
    %752 = vmatpush.msra.mxu0 %v285
    %753 = vmatpush.msra.mxu0 %v282
    %754 = vmatpush.msra.mxu0 %v279
    %755 = vmatpush.msra.mxu0 %v276
    %756 = vmatpush.msra.mxu0 %v273
    %757 = vmatpush.msra.mxu0 %v270
    %758 = vmatpush.msra.mxu0 %v267
    %759 = vmatpush.msra.mxu0 %v264
    %760 = vmatpush.msra.mxu0 %v261
    %761 = vmatpush.msra.mxu0 %v258
    %762 = vmatpush.msra.mxu0 %v255
    %763 = vmatpush.msra.mxu0 %v252
    %764 = vmatpush.msra.mxu0 %v249
    %765 = vmatpush.msra.mxu0 %v246
    %766 = vmatpush.msra.mxu0 %v243
    %767 = vmatmul.f32.gmra.mxu0 %v397
    %v768 = vpop.f32.mrf.mxu0
    %v769 = vadd.f32 0.0, %v768
    %770 = vdwg.mxu0
    %771 = vmatpush.msra.mxu0 %v289
    %772 = vmatpush.msra.mxu0 %v286
    %773 = vmatpush.msra.mxu0 %v283
    %774 = vmatpush.msra.mxu0 %v280
    %775 = vmatpush.msra.mxu0 %v277
    %776 = vmatpush.msra.mxu0 %v274
    %777 = vmatpush.msra.mxu0 %v271
    %778 = vmatpush.msra.mxu0 %v268
    %779 = vmatpush.msra.mxu0 %v265
    %780 = vmatpush.msra.mxu0 %v262
    %781 = vmatpush.msra.mxu0 %v259
    %782 = vmatpush.msra.mxu0 %v256
    %783 = vmatpush.msra.mxu0 %v253
    %784 = vmatpush.msra.mxu0 %v250
    %785 = vmatpush.msra.mxu0 %v247
    %786 = vmatpush.msra.mxu0 %v244
    %787 = vmatmul.f32.gmra.mxu0 %v397
    %v788 = vpop.f32.mrf.mxu0
    %v789 = vadd.f32 0.0, %v788
    %790 = vdwg.mxu0
    %v791 = vadd.f32 %v157, %v749
    %v792 = vxor.u32 %v791, 2147483648
    %v793 = vmul.f32 %v792, 1.442695
    %v794 = vpow.pop %v793
    %v795 = vadd.f32 %v794, 1.0
    %v796 = vrcp.pop %v795
    %v797 = vmul.f32 %v795, %v796
    %v798 = vsub.f32 1.0, %v797
    %v799 = vmul.f32 %v796, %v798
    %v800 = vadd.f32 %v796, %v799
    %vm801 = vweird.f32 %v795
    %vm802 = vweird.f32 %v796
    %vm803 = vmor %vm801, %vm802
    %v804 = vsel %vm803, %v796, %v800
    %v805 = vand.u32 2147483647, %v795
    %vm806 = vcmp.eq.f32.partialorder %v805, 8.507059e+37
    %v807 = vand.u32 %v795, 2147483648
    %v808 = vor.u32 1.1754944e-38, %v807
    %v809 = vsel %vm806, %v808, %v804
    %v810 = vmul.f32 1.0, %v809
    %v811 = vadd.f32 %v192, %v769
    %v812 = vxor.u32 %v811, 2147483648
    %v813 = vmul.f32 %v812, 1.442695
    %v814 = vpow.pop %v813
    %v815 = vadd.f32 %v814, 1.0
    %v816 = vrcp.pop %v815
    %v817 = vmul.f32 %v815, %v816
    %v818 = vsub.f32 1.0, %v817
    %v819 = vmul.f32 %v816, %v818
    %v820 = vadd.f32 %v816, %v819
    %vm821 = vweird.f32 %v815
    %vm822 = vweird.f32 %v816
    %vm823 = vmor %vm821, %vm822
    %v824 = vsel %vm823, %v816, %v820
    %v825 = vand.u32 2147483647, %v815
    %vm826 = vcmp.eq.f32.partialorder %v825, 8.507059e+37
    %v827 = vand.u32 %v815, 2147483648
    %v828 = vor.u32 1.1754944e-38, %v827
    %v829 = vsel %vm826, %v828, %v824
    %v830 = vmul.f32 1.0, %v829
    %v831 = vadd.f32 %v789, %v85
    %v832 = vmul.f32 %v810, %v831
    %v833 = vadd.f32 %v227, %v832
    %v834 = vtanh.pop %v833
    %v835 = vsub.f32 1.0, %v830
    %v836 = vmul.f32 %v835, %v834
    %v837 = vmul.f32 %v830, %v397
    %v838 = vadd.f32 %v836, %v837
    %839 = vmatpush.msra.mxu0 %v458
    %840 = vmatpush.msra.mxu0 %v454
    %841 = vmatpush.msra.mxu0 %v450
    %842 = vmatpush.msra.mxu0 %v446
    %843 = vmatpush.msra.mxu0 %v442
    %844 = vmatpush.msra.mxu0 %v438
    %845 = vmatpush.msra.mxu0 %v434
    %846 = vmatpush.msra.mxu0 %v430
    %847 = vmatpush.msra.mxu0 %v426
    %848 = vmatpush.msra.mxu0 %v422
    %849 = vmatpush.msra.mxu0 %v418
    %850 = vmatpush.msra.mxu0 %v414
    %851 = vmatpush.msra.mxu0 %v410
    %852 = vmatpush.msra.mxu0 %v406
    %853 = vmatpush.msra.mxu0 %v402
    %854 = vmatpush.msra.mxu0 %v398
    %855 = vmatmul.f32.gmra.mxu0 %v838
    %v856 = vpop.f32.mrf.mxu0
    %v857 = vadd.f32 %v89, %v856
    %858 = vdwg.mxu0
    %859 = vmatpush.msra.mxu0 %v522
    %860 = vmatpush.msra.mxu0 %v518
    %861 = vmatpush.msra.mxu0 %v514
    %862 = vmatpush.msra.mxu0 %v510
    %863 = vmatpush.msra.mxu0 %v506
    %864 = vmatpush.msra.mxu0 %v502
    %865 = vmatpush.msra.mxu0 %v498
    %866 = vmatpush.msra.mxu0 %v494
    %867 = vmatpush.msra.mxu0 %v490
    %868 = vmatpush.msra.mxu0 %v486
    %869 = vmatpush.msra.mxu0 %v482
    %870 = vmatpush.msra.mxu0 %v478
    %871 = vmatpush.msra.mxu0 %v474
    %872 = vmatpush.msra.mxu0 %v470
    %873 = vmatpush.msra.mxu0 %v466
    %874 = vmatpush.msra.mxu0 %v462
    %875 = vmatmul.f32.gmra.mxu0 %v730
    %v876 = vpop.f32.mrf.mxu0
    %v877 = vadd.f32 %v857, %v876
    %878 = vdwg.mxu0
    %879 = vmatpush.msra.mxu0 %v459
    %880 = vmatpush.msra.mxu0 %v455
    %881 = vmatpush.msra.mxu0 %v451
    %882 = vmatpush.msra.mxu0 %v447
    %883 = vmatpush.msra.mxu0 %v443
    %884 = vmatpush.msra.mxu0 %v439
    %885 = vmatpush.msra.mxu0 %v435
    %886 = vmatpush.msra.mxu0 %v431
    %887 = vmatpush.msra.mxu0 %v427
    %888 = vmatpush.msra.mxu0 %v423
    %889 = vmatpush.msra.mxu0 %v419
    %890 = vmatpush.msra.mxu0 %v415
    %891 = vmatpush.msra.mxu0 %v411
    %892 = vmatpush.msra.mxu0 %v407
    %893 = vmatpush.msra.mxu0 %v403
    %894 = vmatpush.msra.mxu0 %v399
    %895 = vmatmul.f32.gmra.mxu0 %v838
    %v896 = vpop.f32.mrf.mxu0
    %v897 = vadd.f32 %v90, %v896
    %898 = vdwg.mxu0
    %899 = vmatpush.msra.mxu0 %v523
    %900 = vmatpush.msra.mxu0 %v519
    %901 = vmatpush.msra.mxu0 %v515
    %902 = vmatpush.msra.mxu0 %v511
    %903 = vmatpush.msra.mxu0 %v507
    %904 = vmatpush.msra.mxu0 %v503
    %905 = vmatpush.msra.mxu0 %v499
    %906 = vmatpush.msra.mxu0 %v495
    %907 = vmatpush.msra.mxu0 %v491
    %908 = vmatpush.msra.mxu0 %v487
    %909 = vmatpush.msra.mxu0 %v483
    %910 = vmatpush.msra.mxu0 %v479
    %911 = vmatpush.msra.mxu0 %v475
    %912 = vmatpush.msra.mxu0 %v471
    %913 = vmatpush.msra.mxu0 %v467
    %914 = vmatpush.msra.mxu0 %v463
    %915 = vmatmul.f32.gmra.mxu0 %v730
    %v916 = vpop.f32.mrf.mxu0
    %v917 = vadd.f32 %v897, %v916
    %918 = vdwg.mxu0
    %919 = vmatpush.msra.mxu0 %v460
    %920 = vmatpush.msra.mxu0 %v456
    %921 = vmatpush.msra.mxu0 %v452
    %922 = vmatpush.msra.mxu0 %v448
    %923 = vmatpush.msra.mxu0 %v444
    %924 = vmatpush.msra.mxu0 %v440
    %925 = vmatpush.msra.mxu0 %v436
    %926 = vmatpush.msra.mxu0 %v432
    %927 = vmatpush.msra.mxu0 %v428
    %928 = vmatpush.msra.mxu0 %v424
    %929 = vmatpush.msra.mxu0 %v420
    %930 = vmatpush.msra.mxu0 %v416
    %931 = vmatpush.msra.mxu0 %v412
    %932 = vmatpush.msra.mxu0 %v408
    %933 = vmatpush.msra.mxu0 %v404
    %934 = vmatpush.msra.mxu0 %v400
    %935 = vmatmul.f32.gmra.mxu0 %v838
    %v936 = vpop.f32.mrf.mxu0
    %v937 = vadd.f32 %v91, %v936
    %938 = vdwg.mxu0
    %939 = vmatpush.msra.mxu0 %v524
    %940 = vmatpush.msra.mxu0 %v520
    %941 = vmatpush.msra.mxu0 %v516
    %942 = vmatpush.msra.mxu0 %v512
    %943 = vmatpush.msra.mxu0 %v508
    %944 = vmatpush.msra.mxu0 %v504
    %945 = vmatpush.msra.mxu0 %v500
    %946 = vmatpush.msra.mxu0 %v496
    %947 = vmatpush.msra.mxu0 %v492
    %948 = vmatpush.msra.mxu0 %v488
    %949 = vmatpush.msra.mxu0 %v484
    %950 = vmatpush.msra.mxu0 %v480
    %951 = vmatpush.msra.mxu0 %v476
    %952 = vmatpush.msra.mxu0 %v472
    %953 = vmatpush.msra.mxu0 %v468
    %954 = vmatpush.msra.mxu0 %v464
    %955 = vmatmul.f32.gmra.mxu0 %v730
    %v956 = vpop.f32.mrf.mxu0
    %v957 = vadd.f32 %v937, %v956
    %958 = vdwg.mxu0
    %959 = vmatpush.msra.mxu0 %v461
    %960 = vmatpush.msra.mxu0 %v457
    %961 = vmatpush.msra.mxu0 %v453
    %962 = vmatpush.msra.mxu0 %v449
    %963 = vmatpush.msra.mxu0 %v445
    %964 = vmatpush.msra.mxu0 %v441
    %965 = vmatpush.msra.mxu0 %v437
    %966 = vmatpush.msra.mxu0 %v433
    %967 = vmatpush.msra.mxu0 %v429
    %968 = vmatpush.msra.mxu0 %v425
    %969 = vmatpush.msra.mxu0 %v421
    %970 = vmatpush.msra.mxu0 %v417
    %971 = vmatpush.msra.mxu0 %v413
    %972 = vmatpush.msra.mxu0 %v409
    %973 = vmatpush.msra.mxu0 %v405
    %974 = vmatpush.msra.mxu0 %v401
    %975 = vmatmul.f32.gmra.mxu0 %v838
    %v976 = vpop.f32.mrf.mxu0
    %v977 = vadd.f32 %v92, %v976
    %978 = vdwg.mxu0
    %979 = vmatpush.msra.mxu0 %v525
    %980 = vmatpush.msra.mxu0 %v521
    %981 = vmatpush.msra.mxu0 %v517
    %982 = vmatpush.msra.mxu0 %v513
    %983 = vmatpush.msra.mxu0 %v509
    %984 = vmatpush.msra.mxu0 %v505
    %985 = vmatpush.msra.mxu0 %v501
    %986 = vmatpush.msra.mxu0 %v497
    %987 = vmatpush.msra.mxu0 %v493
    %988 = vmatpush.msra.mxu0 %v489
    %989 = vmatpush.msra.mxu0 %v485
    %990 = vmatpush.msra.mxu0 %v481
    %991 = vmatpush.msra.mxu0 %v477
    %992 = vmatpush.msra.mxu0 %v473
    %993 = vmatpush.msra.mxu0 %v469
    %994 = vmatpush.msra.mxu0 %v465
    %995 = vmatmul.f32.gmra.mxu0 %v730
    %v996 = vpop.f32.mrf.mxu0
    %v997 = vadd.f32 %v977, %v996
    %998 = vdwg.mxu0
    %v999 = vxor.u32 %v877, 2147483648
    %v1000 = vmul.f32 %v999, 1.442695
    %v1001 = vpow.pop %v1000
    %v1002 = vadd.f32 %v1001, 1.0
    %v1003 = vrcp.pop %v1002
    %v1004 = vmul.f32 %v1002, %v1003
    %v1005 = vsub.f32 1.0, %v1004
    %v1006 = vmul.f32 %v1003, %v1005
    %v1007 = vadd.f32 %v1003, %v1006
    %vm1008 = vweird.f32 %v1002
    %vm1009 = vweird.f32 %v1003
    %vm1010 = vmor %vm1008, %vm1009
    %v1011 = vsel %vm1010, %v1003, %v1007
    %v1012 = vand.u32 2147483647, %v1002
    %vm1013 = vcmp.eq.f32.partialorder %v1012, 8.507059e+37
    %v1014 = vand.u32 %v1002, 2147483648
    %v1015 = vor.u32 1.1754944e-38, %v1014
    %v1016 = vsel %vm1013, %v1015, %v1011
    %v1017 = vmul.f32 1.0, %v1016
    %v1018 = vxor.u32 %v917, 2147483648
    %v1019 = vmul.f32 %v1018, 1.442695
    %v1020 = vpow.pop %v1019
    %v1021 = vadd.f32 %v1020, 1.0
    %v1022 = vrcp.pop %v1021
    %v1023 = vmul.f32 %v1021, %v1022
    %v1024 = vsub.f32 1.0, %v1023
    %v1025 = vmul.f32 %v1022, %v1024
    %v1026 = vadd.f32 %v1022, %v1025
    %vm1027 = vweird.f32 %v1021
    %vm1028 = vweird.f32 %v1022
    %vm1029 = vmor %vm1027, %vm1028
    %v1030 = vsel %vm1029, %v1022, %v1026
    %v1031 = vand.u32 2147483647, %v1021
    %vm1032 = vcmp.eq.f32.partialorder %v1031, 8.507059e+37
    %v1033 = vand.u32 %v1021, 2147483648
    %v1034 = vor.u32 1.1754944e-38, %v1033
    %v1035 = vsel %vm1032, %v1034, %v1030
    %v1036 = vmul.f32 1.0, %v1035
    %v1037 = vmul.f32 %v1017, %v997
    %v1038 = vadd.f32 %v957, %v1037
    %v1039 = vtanh.pop %v1038
    %v1040 = vsub.f32 1.0, %v1036
    %v1041 = vmul.f32 %v1040, %v1039
    %v1042 = vmul.f32 %v1036, %v730
    %v1043 = vadd.f32 %v1041, %v1042
    %1044 = vmatpush.msra.mxu0 %v287
    %1045 = vmatpush.msra.mxu0 %v284
    %1046 = vmatpush.msra.mxu0 %v281
    %1047 = vmatpush.msra.mxu0 %v278
    %1048 = vmatpush.msra.mxu0 %v275
    %1049 = vmatpush.msra.mxu0 %v272
    %1050 = vmatpush.msra.mxu0 %v269
    %1051 = vmatpush.msra.mxu0 %v266
    %1052 = vmatpush.msra.mxu0 %v263
    %1053 = vmatpush.msra.mxu0 %v260
    %1054 = vmatpush.msra.mxu0 %v257
    %1055 = vmatpush.msra.mxu0 %v254
    %1056 = vmatpush.msra.mxu0 %v251
    %1057 = vmatpush.msra.mxu0 %v248
    %1058 = vmatpush.msra.mxu0 %v245
    %1059 = vmatpush.msra.mxu0 %v242
    %1060 = vmatmul.f32.gmra.mxu0 %v838
    %v1061 = vpop.f32.mrf.mxu0
    %v1062 = vadd.f32 0.0, %v1061
    %1063 = vdwg.mxu0
    %1064 = vmatpush.msra.mxu0 %v288
    %1065 = vmatpush.msra.mxu0 %v285
    %1066 = vmatpush.msra.mxu0 %v282
    %1067 = vmatpush.msra.mxu0 %v279
    %1068 = vmatpush.msra.mxu0 %v276
    %1069 = vmatpush.msra.mxu0 %v273
    %1070 = vmatpush.msra.mxu0 %v270
    %1071 = vmatpush.msra.mxu0 %v267
    %1072 = vmatpush.msra.mxu0 %v264
    %1073 = vmatpush.msra.mxu0 %v261
    %1074 = vmatpush.msra.mxu0 %v258
    %1075 = vmatpush.msra.mxu0 %v255
    %1076 = vmatpush.msra.mxu0 %v252
    %1077 = vmatpush.msra.mxu0 %v249
    %1078 = vmatpush.msra.mxu0 %v246
    %1079 = vmatpush.msra.mxu0 %v243
    %1080 = vmatmul.f32.gmra.mxu0 %v838
    %v1081 = vpop.f32.mrf.mxu0
    %v1082 = vadd.f32 0.0, %v1081
    %1083 = vdwg.mxu0
    %1084 = vmatpush.msra.mxu0 %v289
    %1085 = vmatpush.msra.mxu0 %v286
    %1086 = vmatpush.msra.mxu0 %v283
    %1087 = vmatpush.msra.mxu0 %v280
    %1088 = vmatpush.msra.mxu0 %v277
    %1089 = vmatpush.msra.mxu0 %v274
    %1090 = vmatpush.msra.mxu0 %v271
    %1091 = vmatpush.msra.mxu0 %v268
    %1092 = vmatpush.msra.mxu0 %v265
    %1093 = vmatpush.msra.mxu0 %v262
    %1094 = vmatpush.msra.mxu0 %v259
    %1095 = vmatpush.msra.mxu0 %v256
    %1096 = vmatpush.msra.mxu0 %v253
    %1097 = vmatpush.msra.mxu0 %v250
    %1098 = vmatpush.msra.mxu0 %v247
    %1099 = vmatpush.msra.mxu0 %v244
    %1100 = vmatmul.f32.gmra.mxu0 %v838
    %v1101 = vpop.f32.mrf.mxu0
    %v1102 = vadd.f32 0.0, %v1101
    %1103 = vdwg.mxu0
    %v1104 = vadd.f32 %v160, %v1062
    %v1105 = vxor.u32 %v1104, 2147483648
    %v1106 = vmul.f32 %v1105, 1.442695
    %v1107 = vpow.pop %v1106
    %v1108 = vadd.f32 %v1107, 1.0
    %v1109 = vrcp.pop %v1108
    %v1110 = vmul.f32 %v1108, %v1109
    %v1111 = vsub.f32 1.0, %v1110
    %v1112 = vmul.f32 %v1109, %v1111
    %v1113 = vadd.f32 %v1109, %v1112
    %vm1114 = vweird.f32 %v1108
    %vm1115 = vweird.f32 %v1109
    %vm1116 = vmor %vm1114, %vm1115
    %v1117 = vsel %vm1116, %v1109, %v1113
    %v1118 = vand.u32 2147483647, %v1108
    %vm1119 = vcmp.eq.f32.partialorder %v1118, 8.507059e+37
    %v1120 = vand.u32 %v1108, 2147483648
    %v1121 = vor.u32 1.1754944e-38, %v1120
    %v1122 = vsel %vm1119, %v1121, %v1117
    %v1123 = vmul.f32 1.0, %v1122
    %v1124 = vadd.f32 %v195, %v1082
    %v1125 = vxor.u32 %v1124, 2147483648
    %v1126 = vmul.f32 %v1125, 1.442695
    %v1127 = vpow.pop %v1126
    %v1128 = vadd.f32 %v1127, 1.0
    %v1129 = vrcp.pop %v1128
    %v1130 = vmul.f32 %v1128, %v1129
    %v1131 = vsub.f32 1.0, %v1130
    %v1132 = vmul.f32 %v1129, %v1131
    %v1133 = vadd.f32 %v1129, %v1132
    %vm1134 = vweird.f32 %v1128
    %vm1135 = vweird.f32 %v1129
    %vm1136 = vmor %vm1134, %vm1135
    %v1137 = vsel %vm1136, %v1129, %v1133
    %v1138 = vand.u32 2147483647, %v1128
    %vm1139 = vcmp.eq.f32.partialorder %v1138, 8.507059e+37
    %v1140 = vand.u32 %v1128, 2147483648
    %v1141 = vor.u32 1.1754944e-38, %v1140
    %v1142 = vsel %vm1139, %v1141, %v1137
    %v1143 = vmul.f32 1.0, %v1142
    %v1144 = vadd.f32 %v1102, %v85
    %v1145 = vmul.f32 %v1123, %v1144
    %v1146 = vadd.f32 %v230, %v1145
    %v1147 = vtanh.pop %v1146
    %v1148 = vsub.f32 1.0, %v1143
    %v1149 = vmul.f32 %v1148, %v1147
    %v1150 = vmul.f32 %v1143, %v838
    %v1151 = vadd.f32 %v1149, %v1150
    %1152 = vmatpush.msra.mxu0 %v458
    %1153 = vmatpush.msra.mxu0 %v454
    %1154 = vmatpush.msra.mxu0 %v450
    %1155 = vmatpush.msra.mxu0 %v446
    %1156 = vmatpush.msra.mxu0 %v442
    %1157 = vmatpush.msra.mxu0 %v438
    %1158 = vmatpush.msra.mxu0 %v434
    %1159 = vmatpush.msra.mxu0 %v430
    %1160 = vmatpush.msra.mxu0 %v426
    %1161 = vmatpush.msra.mxu0 %v422
    %1162 = vmatpush.msra.mxu0 %v418
    %1163 = vmatpush.msra.mxu0 %v414
    %1164 = vmatpush.msra.mxu0 %v410
    %1165 = vmatpush.msra.mxu0 %v406
    %1166 = vmatpush.msra.mxu0 %v402
    %1167 = vmatpush.msra.mxu0 %v398
    %1168 = vmatmul.f32.gmra.mxu0 %v1151
    %v1169 = vpop.f32.mrf.mxu0
    %v1170 = vadd.f32 %v89, %v1169
    %1171 = vdwg.mxu0
    %1172 = vmatpush.msra.mxu0 %v522
    %1173 = vmatpush.msra.mxu0 %v518
    %1174 = vmatpush.msra.mxu0 %v514
    %1175 = vmatpush.msra.mxu0 %v510
    %1176 = vmatpush.msra.mxu0 %v506
    %1177 = vmatpush.msra.mxu0 %v502
    %1178 = vmatpush.msra.mxu0 %v498
    %1179 = vmatpush.msra.mxu0 %v494
    %1180 = vmatpush.msra.mxu0 %v490
    %1181 = vmatpush.msra.mxu0 %v486
    %1182 = vmatpush.msra.mxu0 %v482
    %1183 = vmatpush.msra.mxu0 %v478
    %1184 = vmatpush.msra.mxu0 %v474
    %1185 = vmatpush.msra.mxu0 %v470
    %1186 = vmatpush.msra.mxu0 %v466
    %1187 = vmatpush.msra.mxu0 %v462
    %1188 = vmatmul.f32.gmra.mxu0 %v1043
    %v1189 = vpop.f32.mrf.mxu0
    %v1190 = vadd.f32 %v1170, %v1189
    %1191 = vdwg.mxu0
    %1192 = vmatpush.msra.mxu0 %v459
    %1193 = vmatpush.msra.mxu0 %v455
    %1194 = vmatpush.msra.mxu0 %v451
    %1195 = vmatpush.msra.mxu0 %v447
    %1196 = vmatpush.msra.mxu0 %v443
    %1197 = vmatpush.msra.mxu0 %v439
    %1198 = vmatpush.msra.mxu0 %v435
    %1199 = vmatpush.msra.mxu0 %v431
    %1200 = vmatpush.msra.mxu0 %v427
    %1201 = vmatpush.msra.mxu0 %v423
    %1202 = vmatpush.msra.mxu0 %v419
    %1203 = vmatpush.msra.mxu0 %v415
    %1204 = vmatpush.msra.mxu0 %v411
    %1205 = vmatpush.msra.mxu0 %v407
    %1206 = vmatpush.msra.mxu0 %v403
    %1207 = vmatpush.msra.mxu0 %v399
    %1208 = vmatmul.f32.gmra.mxu0 %v1151
    %v1209 = vpop.f32.mrf.mxu0
    %v1210 = vadd.f32 %v90, %v1209
    %1211 = vdwg.mxu0
    %1212 = vmatpush.msra.mxu0 %v523
    %1213 = vmatpush.msra.mxu0 %v519
    %1214 = vmatpush.msra.mxu0 %v515
    %1215 = vmatpush.msra.mxu0 %v511
    %1216 = vmatpush.msra.mxu0 %v507
    %1217 = vmatpush.msra.mxu0 %v503
    %1218 = vmatpush.msra.mxu0 %v499
    %1219 = vmatpush.msra.mxu0 %v495
    %1220 = vmatpush.msra.mxu0 %v491
    %1221 = vmatpush.msra.mxu0 %v487
    %1222 = vmatpush.msra.mxu0 %v483
    %1223 = vmatpush.msra.mxu0 %v479
    %1224 = vmatpush.msra.mxu0 %v475
    %1225 = vmatpush.msra.mxu0 %v471
    %1226 = vmatpush.msra.mxu0 %v467
    %1227 = vmatpush.msra.mxu0 %v463
    %1228 = vmatmul.f32.gmra.mxu0 %v1043
    %v1229 = vpop.f32.mrf.mxu0
    %v1230 = vadd.f32 %v1210, %v1229
    %1231 = vdwg.mxu0
    %1232 = vmatpush.msra.mxu0 %v460
    %1233 = vmatpush.msra.mxu0 %v456
    %1234 = vmatpush.msra.mxu0 %v452
    %1235 = vmatpush.msra.mxu0 %v448
    %1236 = vmatpush.msra.mxu0 %v444
    %1237 = vmatpush.msra.mxu0 %v440
    %1238 = vmatpush.msra.mxu0 %v436
    %1239 = vmatpush.msra.mxu0 %v432
    %1240 = vmatpush.msra.mxu0 %v428
    %1241 = vmatpush.msra.mxu0 %v424
    %1242 = vmatpush.msra.mxu0 %v420
    %1243 = vmatpush.msra.mxu0 %v416
    %1244 = vmatpush.msra.mxu0 %v412
    %1245 = vmatpush.msra.mxu0 %v408
    %1246 = vmatpush.msra.mxu0 %v404
    %1247 = vmatpush.msra.mxu0 %v400
    %1248 = vmatmul.f32.gmra.mxu0 %v1151
    %v1249 = vpop.f32.mrf.mxu0
    %v1250 = vadd.f32 %v91, %v1249
    %1251 = vdwg.mxu0
    %1252 = vmatpush.msra.mxu0 %v524
    %1253 = vmatpush.msra.mxu0 %v520
    %1254 = vmatpush.msra.mxu0 %v516
    %1255 = vmatpush.msra.mxu0 %v512
    %1256 = vmatpush.msra.mxu0 %v508
    %1257 = vmatpush.msra.mxu0 %v504
    %1258 = vmatpush.msra.mxu0 %v500
    %1259 = vmatpush.msra.mxu0 %v496
    %1260 = vmatpush.msra.mxu0 %v492
    %1261 = vmatpush.msra.mxu0 %v488
    %1262 = vmatpush.msra.mxu0 %v484
    %1263 = vmatpush.msra.mxu0 %v480
    %1264 = vmatpush.msra.mxu0 %v476
    %1265 = vmatpush.msra.mxu0 %v472
    %1266 = vmatpush.msra.mxu0 %v468
    %1267 = vmatpush.msra.mxu0 %v464
    %1268 = vmatmul.f32.gmra.mxu0 %v1043
    %v1269 = vpop.f32.mrf.mxu0
    %v1270 = vadd.f32 %v1250, %v1269
    %1271 = vdwg.mxu0
    %1272 = vmatpush.msra.mxu0 %v461
    %1273 = vmatpush.msra.mxu0 %v457
    %1274 = vmatpush.msra.mxu0 %v453
    %1275 = vmatpush.msra.mxu0 %v449
    %1276 = vmatpush.msra.mxu0 %v445
    %1277 = vmatpush.msra.mxu0 %v441
    %1278 = vmatpush.msra.mxu0 %v437
    %1279 = vmatpush.msra.mxu0 %v433
    %1280 = vmatpush.msra.mxu0 %v429
    %1281 = vmatpush.msra.mxu0 %v425
    %1282 = vmatpush.msra.mxu0 %v421
    %1283 = vmatpush.msra.mxu0 %v417
    %1284 = vmatpush.msra.mxu0 %v413
    %1285 = vmatpush.msra.mxu0 %v409
    %1286 = vmatpush.msra.mxu0 %v405
    %1287 = vmatpush.msra.mxu0 %v401
    %1288 = vmatmul.f32.gmra.mxu0 %v1151
    %v1289 = vpop.f32.mrf.mxu0
    %v1290 = vadd.f32 %v92, %v1289
    %1291 = vdwg.mxu0
    %1292 = vmatpush.msra.mxu0 %v525
    %1293 = vmatpush.msra.mxu0 %v521
    %1294 = vmatpush.msra.mxu0 %v517
    %1295 = vmatpush.msra.mxu0 %v513
    %1296 = vmatpush.msra.mxu0 %v509
    %1297 = vmatpush.msra.mxu0 %v505
    %1298 = vmatpush.msra.mxu0 %v501
    %1299 = vmatpush.msra.mxu0 %v497
    %1300 = vmatpush.msra.mxu0 %v493
    %1301 = vmatpush.msra.mxu0 %v489
    %1302 = vmatpush.msra.mxu0 %v485
    %1303 = vmatpush.msra.mxu0 %v481
    %1304 = vmatpush.msra.mxu0 %v477
    %1305 = vmatpush.msra.mxu0 %v473
    %1306 = vmatpush.msra.mxu0 %v469
    %1307 = vmatpush.msra.mxu0 %v465
    %1308 = vmatmul.f32.gmra.mxu0 %v1043
    %v1309 = vpop.f32.mrf.mxu0
    %v1310 = vadd.f32 %v1290, %v1309
    %1311 = vdwg.mxu0
    %v1312 = vxor.u32 %v1190, 2147483648
    %v1313 = vmul.f32 %v1312, 1.442695
    %v1314 = vpow.pop %v1313
    %v1315 = vadd.f32 %v1314, 1.0
    %v1316 = vrcp.pop %v1315
    %v1317 = vmul.f32 %v1315, %v1316
    %v1318 = vsub.f32 1.0, %v1317
    %v1319 = vmul.f32 %v1316, %v1318
    %v1320 = vadd.f32 %v1316, %v1319
    %vm1321 = vweird.f32 %v1315
    %vm1322 = vweird.f32 %v1316
    %vm1323 = vmor %vm1321, %vm1322
    %v1324 = vsel %vm1323, %v1316, %v1320
    %v1325 = vand.u32 2147483647, %v1315
    %vm1326 = vcmp.eq.f32.partialorder %v1325, 8.507059e+37
    %v1327 = vand.u32 %v1315, 2147483648
    %v1328 = vor.u32 1.1754944e-38, %v1327
    %v1329 = vsel %vm1326, %v1328, %v1324
    %v1330 = vmul.f32 1.0, %v1329
    %v1331 = vxor.u32 %v1230, 2147483648
    %v1332 = vmul.f32 %v1331, 1.442695
    %v1333 = vpow.pop %v1332
    %v1334 = vadd.f32 %v1333, 1.0
    %v1335 = vrcp.pop %v1334
    %v1336 = vmul.f32 %v1334, %v1335
    %v1337 = vsub.f32 1.0, %v1336
    %v1338 = vmul.f32 %v1335, %v1337
    %v1339 = vadd.f32 %v1335, %v1338
    %vm1340 = vweird.f32 %v1334
    %vm1341 = vweird.f32 %v1335
    %vm1342 = vmor %vm1340, %vm1341
    %v1343 = vsel %vm1342, %v1335, %v1339
    %v1344 = vand.u32 2147483647, %v1334
    %vm1345 = vcmp.eq.f32.partialorder %v1344, 8.507059e+37
    %v1346 = vand.u32 %v1334, 2147483648
    %v1347 = vor.u32 1.1754944e-38, %v1346
    %v1348 = vsel %vm1345, %v1347, %v1343
    %v1349 = vmul.f32 1.0, %v1348
    %v1350 = vmul.f32 %v1330, %v1310
    %v1351 = vadd.f32 %v1270, %v1350
    %v1352 = vtanh.pop %v1351
    %v1353 = vsub.f32 1.0, %v1349
    %v1354 = vmul.f32 %v1353, %v1352
    %v1355 = vmul.f32 %v1349, %v1043
    %v1356 = vadd.f32 %v1354, %v1355
    %1357 = vmatpush.msra.mxu0 %v287
    %1358 = vmatpush.msra.mxu0 %v284
    %1359 = vmatpush.msra.mxu0 %v281
    %1360 = vmatpush.msra.mxu0 %v278
    %1361 = vmatpush.msra.mxu0 %v275
    %1362 = vmatpush.msra.mxu0 %v272
    %1363 = vmatpush.msra.mxu0 %v269
    %1364 = vmatpush.msra.mxu0 %v266
    %1365 = vmatpush.msra.mxu0 %v263
    %1366 = vmatpush.msra.mxu0 %v260
    %1367 = vmatpush.msra.mxu0 %v257
    %1368 = vmatpush.msra.mxu0 %v254
    %1369 = vmatpush.msra.mxu0 %v251
    %1370 = vmatpush.msra.mxu0 %v248
    %1371 = vmatpush.msra.mxu0 %v245
    %1372 = vmatpush.msra.mxu0 %v242
    %1373 = vmatmul.f32.gmra.mxu0 %v1151
    %v1374 = vpop.f32.mrf.mxu0
    %v1375 = vadd.f32 0.0, %v1374
    %1376 = vdwg.mxu0
    %1377 = vmatpush.msra.mxu0 %v288
    %1378 = vmatpush.msra.mxu0 %v285
    %1379 = vmatpush.msra.mxu0 %v282
    %1380 = vmatpush.msra.mxu0 %v279
    %1381 = vmatpush.msra.mxu0 %v276
    %1382 = vmatpush.msra.mxu0 %v273
    %1383 = vmatpush.msra.mxu0 %v270
    %1384 = vmatpush.msra.mxu0 %v267
    %1385 = vmatpush.msra.mxu0 %v264
    %1386 = vmatpush.msra.mxu0 %v261
    %1387 = vmatpush.msra.mxu0 %v258
    %1388 = vmatpush.msra.mxu0 %v255
    %1389 = vmatpush.msra.mxu0 %v252
    %1390 = vmatpush.msra.mxu0 %v249
    %1391 = vmatpush.msra.mxu0 %v246
    %1392 = vmatpush.msra.mxu0 %v243
    %1393 = vmatmul.f32.gmra.mxu0 %v1151
    %v1394 = vpop.f32.mrf.mxu0
    %v1395 = vadd.f32 0.0, %v1394
    %1396 = vdwg.mxu0
    %1397 = vmatpush.msra.mxu0 %v289
    %1398 = vmatpush.msra.mxu0 %v286
    %1399 = vmatpush.msra.mxu0 %v283
    %1400 = vmatpush.msra.mxu0 %v280
    %1401 = vmatpush.msra.mxu0 %v277
    %1402 = vmatpush.msra.mxu0 %v274
    %1403 = vmatpush.msra.mxu0 %v271
    %1404 = vmatpush.msra.mxu0 %v268
    %1405 = vmatpush.msra.mxu0 %v265
    %1406 = vmatpush.msra.mxu0 %v262
    %1407 = vmatpush.msra.mxu0 %v259
    %1408 = vmatpush.msra.mxu0 %v256
    %1409 = vmatpush.msra.mxu0 %v253
    %1410 = vmatpush.msra.mxu0 %v250
    %1411 = vmatpush.msra.mxu0 %v247
    %1412 = vmatpush.msra.mxu0 %v244
    %1413 = vmatmul.f32.gmra.mxu0 %v1151
    %v1414 = vpop.f32.mrf.mxu0
    %v1415 = vadd.f32 0.0, %v1414
    %1416 = vdwg.mxu0
    %v1417 = vadd.f32 %v163, %v1375
    %v1418 = vxor.u32 %v1417, 2147483648
    %v1419 = vmul.f32 %v1418, 1.442695
    %v1420 = vpow.pop %v1419
    %v1421 = vadd.f32 %v1420, 1.0
    %v1422 = vrcp.pop %v1421
    %v1423 = vmul.f32 %v1421, %v1422
    %v1424 = vsub.f32 1.0, %v1423
    %v1425 = vmul.f32 %v1422, %v1424
    %v1426 = vadd.f32 %v1422, %v1425
    %vm1427 = vweird.f32 %v1421
    %vm1428 = vweird.f32 %v1422
    %vm1429 = vmor %vm1427, %vm1428
    %v1430 = vsel %vm1429, %v1422, %v1426
    %v1431 = vand.u32 2147483647, %v1421
    %vm1432 = vcmp.eq.f32.partialorder %v1431, 8.507059e+37
    %v1433 = vand.u32 %v1421, 2147483648
    %v1434 = vor.u32 1.1754944e-38, %v1433
    %v1435 = vsel %vm1432, %v1434, %v1430
    %v1436 = vmul.f32 1.0, %v1435
    %v1437 = vadd.f32 %v198, %v1395
    %v1438 = vxor.u32 %v1437, 2147483648
    %v1439 = vmul.f32 %v1438, 1.442695
    %v1440 = vpow.pop %v1439
    %v1441 = vadd.f32 %v1440, 1.0
    %v1442 = vrcp.pop %v1441
    %v1443 = vmul.f32 %v1441, %v1442
    %v1444 = vsub.f32 1.0, %v1443
    %v1445 = vmul.f32 %v1442, %v1444
    %v1446 = vadd.f32 %v1442, %v1445
    %vm1447 = vweird.f32 %v1441
    %vm1448 = vweird.f32 %v1442
    %vm1449 = vmor %vm1447, %vm1448
    %v1450 = vsel %vm1449, %v1442, %v1446
    %v1451 = vand.u32 2147483647, %v1441
    %vm1452 = vcmp.eq.f32.partialorder %v1451, 8.507059e+37
    %v1453 = vand.u32 %v1441, 2147483648
    %v1454 = vor.u32 1.1754944e-38, %v1453
    %v1455 = vsel %vm1452, %v1454, %v1450
    %v1456 = vmul.f32 1.0, %v1455
    %v1457 = vadd.f32 %v1415, %v85
    %v1458 = vmul.f32 %v1436, %v1457
    %v1459 = vadd.f32 %v233, %v1458
    %v1460 = vtanh.pop %v1459
    %v1461 = vsub.f32 1.0, %v1456
    %v1462 = vmul.f32 %v1461, %v1460
    %v1463 = vmul.f32 %v1456, %v1151
    %v1464 = vadd.f32 %v1462, %v1463
    %1465 = vmatpush.msra.mxu0 %v458
    %1466 = vmatpush.msra.mxu0 %v454
    %1467 = vmatpush.msra.mxu0 %v450
    %1468 = vmatpush.msra.mxu0 %v446
    %1469 = vmatpush.msra.mxu0 %v442
    %1470 = vmatpush.msra.mxu0 %v438
    %1471 = vmatpush.msra.mxu0 %v434
    %1472 = vmatpush.msra.mxu0 %v430
    %1473 = vmatpush.msra.mxu0 %v426
    %1474 = vmatpush.msra.mxu0 %v422
    %1475 = vmatpush.msra.mxu0 %v418
    %1476 = vmatpush.msra.mxu0 %v414
    %1477 = vmatpush.msra.mxu0 %v410
    %1478 = vmatpush.msra.mxu0 %v406
    %1479 = vmatpush.msra.mxu0 %v402
    %1480 = vmatpush.msra.mxu0 %v398
    %1481 = vmatmul.f32.gmra.mxu0 %v1464
    %v1482 = vpop.f32.mrf.mxu0
    %v1483 = vadd.f32 %v89, %v1482
    %1484 = vdwg.mxu0
    %1485 = vmatpush.msra.mxu0 %v522
    %1486 = vmatpush.msra.mxu0 %v518
    %1487 = vmatpush.msra.mxu0 %v514
    %1488 = vmatpush.msra.mxu0 %v510
    %1489 = vmatpush.msra.mxu0 %v506
    %1490 = vmatpush.msra.mxu0 %v502
    %1491 = vmatpush.msra.mxu0 %v498
    %1492 = vmatpush.msra.mxu0 %v494
    %1493 = vmatpush.msra.mxu0 %v490
    %1494 = vmatpush.msra.mxu0 %v486
    %1495 = vmatpush.msra.mxu0 %v482
    %1496 = vmatpush.msra.mxu0 %v478
    %1497 = vmatpush.msra.mxu0 %v474
    %1498 = vmatpush.msra.mxu0 %v470
    %1499 = vmatpush.msra.mxu0 %v466
    %1500 = vmatpush.msra.mxu0 %v462
    %1501 = vmatmul.f32.gmra.mxu0 %v1356
    %v1502 = vpop.f32.mrf.mxu0
    %v1503 = vadd.f32 %v1483, %v1502
    %1504 = vdwg.mxu0
    %1505 = vmatpush.msra.mxu0 %v459
    %1506 = vmatpush.msra.mxu0 %v455
    %1507 = vmatpush.msra.mxu0 %v451
    %1508 = vmatpush.msra.mxu0 %v447
    %1509 = vmatpush.msra.mxu0 %v443
    %1510 = vmatpush.msra.mxu0 %v439
    %1511 = vmatpush.msra.mxu0 %v435
    %1512 = vmatpush.msra.mxu0 %v431
    %1513 = vmatpush.msra.mxu0 %v427
    %1514 = vmatpush.msra.mxu0 %v423
    %1515 = vmatpush.msra.mxu0 %v419
    %1516 = vmatpush.msra.mxu0 %v415
    %1517 = vmatpush.msra.mxu0 %v411
    %1518 = vmatpush.msra.mxu0 %v407
    %1519 = vmatpush.msra.mxu0 %v403
    %1520 = vmatpush.msra.mxu0 %v399
    %1521 = vmatmul.f32.gmra.mxu0 %v1464
    %v1522 = vpop.f32.mrf.mxu0
    %v1523 = vadd.f32 %v90, %v1522
    %1524 = vdwg.mxu0
    %1525 = vmatpush.msra.mxu0 %v523
    %1526 = vmatpush.msra.mxu0 %v519
    %1527 = vmatpush.msra.mxu0 %v515
    %1528 = vmatpush.msra.mxu0 %v511
    %1529 = vmatpush.msra.mxu0 %v507
    %1530 = vmatpush.msra.mxu0 %v503
    %1531 = vmatpush.msra.mxu0 %v499
    %1532 = vmatpush.msra.mxu0 %v495
    %1533 = vmatpush.msra.mxu0 %v491
    %1534 = vmatpush.msra.mxu0 %v487
    %1535 = vmatpush.msra.mxu0 %v483
    %1536 = vmatpush.msra.mxu0 %v479
    %1537 = vmatpush.msra.mxu0 %v475
    %1538 = vmatpush.msra.mxu0 %v471
    %1539 = vmatpush.msra.mxu0 %v467
    %1540 = vmatpush.msra.mxu0 %v463
    %1541 = vmatmul.f32.gmra.mxu0 %v1356
    %v1542 = vpop.f32.mrf.mxu0
    %v1543 = vadd.f32 %v1523, %v1542
    %1544 = vdwg.mxu0
    %1545 = vmatpush.msra.mxu0 %v460
    %1546 = vmatpush.msra.mxu0 %v456
    %1547 = vmatpush.msra.mxu0 %v452
    %1548 = vmatpush.msra.mxu0 %v448
    %1549 = vmatpush.msra.mxu0 %v444
    %1550 = vmatpush.msra.mxu0 %v440
    %1551 = vmatpush.msra.mxu0 %v436
    %1552 = vmatpush.msra.mxu0 %v432
    %1553 = vmatpush.msra.mxu0 %v428
    %1554 = vmatpush.msra.mxu0 %v424
    %1555 = vmatpush.msra.mxu0 %v420
    %1556 = vmatpush.msra.mxu0 %v416
    %1557 = vmatpush.msra.mxu0 %v412
    %1558 = vmatpush.msra.mxu0 %v408
    %1559 = vmatpush.msra.mxu0 %v404
    %1560 = vmatpush.msra.mxu0 %v400
    %1561 = vmatmul.f32.gmra.mxu0 %v1464
    %v1562 = vpop.f32.mrf.mxu0
    %v1563 = vadd.f32 %v91, %v1562
    %1564 = vdwg.mxu0
    %1565 = vmatpush.msra.mxu0 %v524
    %1566 = vmatpush.msra.mxu0 %v520
    %1567 = vmatpush.msra.mxu0 %v516
    %1568 = vmatpush.msra.mxu0 %v512
    %1569 = vmatpush.msra.mxu0 %v508
    %1570 = vmatpush.msra.mxu0 %v504
    %1571 = vmatpush.msra.mxu0 %v500
    %1572 = vmatpush.msra.mxu0 %v496
    %1573 = vmatpush.msra.mxu0 %v492
    %1574 = vmatpush.msra.mxu0 %v488
    %1575 = vmatpush.msra.mxu0 %v484
    %1576 = vmatpush.msra.mxu0 %v480
    %1577 = vmatpush.msra.mxu0 %v476
    %1578 = vmatpush.msra.mxu0 %v472
    %1579 = vmatpush.msra.mxu0 %v468
    %1580 = vmatpush.msra.mxu0 %v464
    %1581 = vmatmul.f32.gmra.mxu0 %v1356
    %v1582 = vpop.f32.mrf.mxu0
    %v1583 = vadd.f32 %v1563, %v1582
    %1584 = vdwg.mxu0
    %1585 = vmatpush.msra.mxu0 %v461
    %1586 = vmatpush.msra.mxu0 %v457
    %1587 = vmatpush.msra.mxu0 %v453
    %1588 = vmatpush.msra.mxu0 %v449
    %1589 = vmatpush.msra.mxu0 %v445
    %1590 = vmatpush.msra.mxu0 %v441
    %1591 = vmatpush.msra.mxu0 %v437
    %1592 = vmatpush.msra.mxu0 %v433
    %1593 = vmatpush.msra.mxu0 %v429
    %1594 = vmatpush.msra.mxu0 %v425
    %1595 = vmatpush.msra.mxu0 %v421
    %1596 = vmatpush.msra.mxu0 %v417
    %1597 = vmatpush.msra.mxu0 %v413
    %1598 = vmatpush.msra.mxu0 %v409
    %1599 = vmatpush.msra.mxu0 %v405
    %1600 = vmatpush.msra.mxu0 %v401
    %1601 = vmatmul.f32.gmra.mxu0 %v1464
    %v1602 = vpop.f32.mrf.mxu0
    %v1603 = vadd.f32 %v92, %v1602
    %1604 = vdwg.mxu0
    %1605 = vmatpush.msra.mxu0 %v525
    %1606 = vmatpush.msra.mxu0 %v521
    %1607 = vmatpush.msra.mxu0 %v517
    %1608 = vmatpush.msra.mxu0 %v513
    %1609 = vmatpush.msra.mxu0 %v509
    %1610 = vmatpush.msra.mxu0 %v505
    %1611 = vmatpush.msra.mxu0 %v501
    %1612 = vmatpush.msra.mxu0 %v497
    %1613 = vmatpush.msra.mxu0 %v493
    %1614 = vmatpush.msra.mxu0 %v489
    %1615 = vmatpush.msra.mxu0 %v485
    %1616 = vmatpush.msra.mxu0 %v481
    %1617 = vmatpush.msra.mxu0 %v477
    %1618 = vmatpush.msra.mxu0 %v473
    %1619 = vmatpush.msra.mxu0 %v469
    %1620 = vmatpush.msra.mxu0 %v465
    %1621 = vmatmul.f32.gmra.mxu0 %v1356
    %v1622 = vpop.f32.mrf.mxu0
    %v1623 = vadd.f32 %v1603, %v1622
    %1624 = vdwg.mxu0
    %v1625 = vxor.u32 %v1503, 2147483648
    %v1626 = vmul.f32 %v1625, 1.442695
    %v1627 = vpow.pop %v1626
    %v1628 = vadd.f32 %v1627, 1.0
    %v1629 = vrcp.pop %v1628
    %v1630 = vmul.f32 %v1628, %v1629
    %v1631 = vsub.f32 1.0, %v1630
    %v1632 = vmul.f32 %v1629, %v1631
    %v1633 = vadd.f32 %v1629, %v1632
    %vm1634 = vweird.f32 %v1628
    %vm1635 = vweird.f32 %v1629
    %vm1636 = vmor %vm1634, %vm1635
    %v1637 = vsel %vm1636, %v1629, %v1633
    %v1638 = vand.u32 2147483647, %v1628
    %vm1639 = vcmp.eq.f32.partialorder %v1638, 8.507059e+37
    %v1640 = vand.u32 %v1628, 2147483648
    %v1641 = vor.u32 1.1754944e-38, %v1640
    %v1642 = vsel %vm1639, %v1641, %v1637
    %v1643 = vmul.f32 1.0, %v1642
    %v1644 = vxor.u32 %v1543, 2147483648
    %v1645 = vmul.f32 %v1644, 1.442695
    %v1646 = vpow.pop %v1645
    %v1647 = vadd.f32 %v1646, 1.0
    %v1648 = vrcp.pop %v1647
    %v1649 = vmul.f32 %v1647, %v1648
    %v1650 = vsub.f32 1.0, %v1649
    %v1651 = vmul.f32 %v1648, %v1650
    %v1652 = vadd.f32 %v1648, %v1651
    %vm1653 = vweird.f32 %v1647
    %vm1654 = vweird.f32 %v1648
    %vm1655 = vmor %vm1653, %vm1654
    %v1656 = vsel %vm1655, %v1648, %v1652
    %v1657 = vand.u32 2147483647, %v1647
    %vm1658 = vcmp.eq.f32.partialorder %v1657, 8.507059e+37
    %v1659 = vand.u32 %v1647, 2147483648
    %v1660 = vor.u32 1.1754944e-38, %v1659
    %v1661 = vsel %vm1658, %v1660, %v1656
    %v1662 = vmul.f32 1.0, %v1661
    %v1663 = vmul.f32 %v1643, %v1623
    %v1664 = vadd.f32 %v1583, %v1663
    %v1665 = vtanh.pop %v1664
    %v1666 = vsub.f32 1.0, %v1662
    %v1667 = vmul.f32 %v1666, %v1665
    %v1668 = vmul.f32 %v1662, %v1356
    %v1669 = vadd.f32 %v1667, %v1668
    %1670 = vmatpush.msra.mxu0 %v287
    %1671 = vmatpush.msra.mxu0 %v284
    %1672 = vmatpush.msra.mxu0 %v281
    %1673 = vmatpush.msra.mxu0 %v278
    %1674 = vmatpush.msra.mxu0 %v275
    %1675 = vmatpush.msra.mxu0 %v272
    %1676 = vmatpush.msra.mxu0 %v269
    %1677 = vmatpush.msra.mxu0 %v266
    %1678 = vmatpush.msra.mxu0 %v263
    %1679 = vmatpush.msra.mxu0 %v260
    %1680 = vmatpush.msra.mxu0 %v257
    %1681 = vmatpush.msra.mxu0 %v254
    %1682 = vmatpush.msra.mxu0 %v251
    %1683 = vmatpush.msra.mxu0 %v248
    %1684 = vmatpush.msra.mxu0 %v245
    %1685 = vmatpush.msra.mxu0 %v242
    %1686 = vmatmul.f32.gmra.mxu0 %v1464
    %v1687 = vpop.f32.mrf.mxu0
    %v1688 = vadd.f32 0.0, %v1687
    %1689 = vdwg.mxu0
    %1690 = vmatpush.msra.mxu0 %v288
    %1691 = vmatpush.msra.mxu0 %v285
    %1692 = vmatpush.msra.mxu0 %v282
    %1693 = vmatpush.msra.mxu0 %v279
    %1694 = vmatpush.msra.mxu0 %v276
    %1695 = vmatpush.msra.mxu0 %v273
    %1696 = vmatpush.msra.mxu0 %v270
    %1697 = vmatpush.msra.mxu0 %v267
    %1698 = vmatpush.msra.mxu0 %v264
    %1699 = vmatpush.msra.mxu0 %v261
    %1700 = vmatpush.msra.mxu0 %v258
    %1701 = vmatpush.msra.mxu0 %v255
    %1702 = vmatpush.msra.mxu0 %v252
    %1703 = vmatpush.msra.mxu0 %v249
    %1704 = vmatpush.msra.mxu0 %v246
    %1705 = vmatpush.msra.mxu0 %v243
    %1706 = vmatmul.f32.gmra.mxu0 %v1464
    %v1707 = vpop.f32.mrf.mxu0
    %v1708 = vadd.f32 0.0, %v1707
    %1709 = vdwg.mxu0
    %1710 = vmatpush.msra.mxu0 %v289
    %1711 = vmatpush.msra.mxu0 %v286
    %1712 = vmatpush.msra.mxu0 %v283
    %1713 = vmatpush.msra.mxu0 %v280
    %1714 = vmatpush.msra.mxu0 %v277
    %1715 = vmatpush.msra.mxu0 %v274
    %1716 = vmatpush.msra.mxu0 %v271
    %1717 = vmatpush.msra.mxu0 %v268
    %1718 = vmatpush.msra.mxu0 %v265
    %1719 = vmatpush.msra.mxu0 %v262
    %1720 = vmatpush.msra.mxu0 %v259
    %1721 = vmatpush.msra.mxu0 %v256
    %1722 = vmatpush.msra.mxu0 %v253
    %1723 = vmatpush.msra.mxu0 %v250
    %1724 = vmatpush.msra.mxu0 %v247
    %1725 = vmatpush.msra.mxu0 %v244
    %1726 = vmatmul.f32.gmra.mxu0 %v1464
    %v1727 = vpop.f32.mrf.mxu0
    %v1728 = vadd.f32 0.0, %v1727
    %1729 = vdwg.mxu0
    %v1730 = vadd.f32 %v166, %v1688
    %v1731 = vxor.u32 %v1730, 2147483648
    %v1732 = vmul.f32 %v1731, 1.442695
    %v1733 = vpow.pop %v1732
    %v1734 = vadd.f32 %v1733, 1.0
    %v1735 = vrcp.pop %v1734
    %v1736 = vmul.f32 %v1734, %v1735
    %v1737 = vsub.f32 1.0, %v1736
    %v1738 = vmul.f32 %v1735, %v1737
    %v1739 = vadd.f32 %v1735, %v1738
    %vm1740 = vweird.f32 %v1734
    %vm1741 = vweird.f32 %v1735
    %vm1742 = vmor %vm1740, %vm1741
    %v1743 = vsel %vm1742, %v1735, %v1739
    %v1744 = vand.u32 2147483647, %v1734
    %vm1745 = vcmp.eq.f32.partialorder %v1744, 8.507059e+37
    %v1746 = vand.u32 %v1734, 2147483648
    %v1747 = vor.u32 1.1754944e-38, %v1746
    %v1748 = vsel %vm1745, %v1747, %v1743
    %v1749 = vmul.f32 1.0, %v1748
    %v1750 = vadd.f32 %v201, %v1708
    %v1751 = vxor.u32 %v1750, 2147483648
    %v1752 = vmul.f32 %v1751, 1.442695
    %v1753 = vpow.pop %v1752
    %v1754 = vadd.f32 %v1753, 1.0
    %v1755 = vrcp.pop %v1754
    %v1756 = vmul.f32 %v1754, %v1755
    %v1757 = vsub.f32 1.0, %v1756
    %v1758 = vmul.f32 %v1755, %v1757
    %v1759 = vadd.f32 %v1755, %v1758
    %vm1760 = vweird.f32 %v1754
    %vm1761 = vweird.f32 %v1755
    %vm1762 = vmor %vm1760, %vm1761
    %v1763 = vsel %vm1762, %v1755, %v1759
    %v1764 = vand.u32 2147483647, %v1754
    %vm1765 = vcmp.eq.f32.partialorder %v1764, 8.507059e+37
    %v1766 = vand.u32 %v1754, 2147483648
    %v1767 = vor.u32 1.1754944e-38, %v1766
    %v1768 = vsel %vm1765, %v1767, %v1763
    %v1769 = vmul.f32 1.0, %v1768
    %v1770 = vadd.f32 %v1728, %v85
    %v1771 = vmul.f32 %v1749, %v1770
    %v1772 = vadd.f32 %v236, %v1771
    %v1773 = vtanh.pop %v1772
    %v1774 = vsub.f32 1.0, %v1769
    %v1775 = vmul.f32 %v1774, %v1773
    %v1776 = vmul.f32 %v1769, %v1464
    %v1777 = vadd.f32 %v1775, %v1776
    %1778 = vmatpush.msra.mxu0 %v458
    %1779 = vmatpush.msra.mxu0 %v454
    %1780 = vmatpush.msra.mxu0 %v450
    %1781 = vmatpush.msra.mxu0 %v446
    %1782 = vmatpush.msra.mxu0 %v442
    %1783 = vmatpush.msra.mxu0 %v438
    %1784 = vmatpush.msra.mxu0 %v434
    %1785 = vmatpush.msra.mxu0 %v430
    %1786 = vmatpush.msra.mxu0 %v426
    %1787 = vmatpush.msra.mxu0 %v422
    %1788 = vmatpush.msra.mxu0 %v418
    %1789 = vmatpush.msra.mxu0 %v414
    %1790 = vmatpush.msra.mxu0 %v410
    %1791 = vmatpush.msra.mxu0 %v406
    %1792 = vmatpush.msra.mxu0 %v402
    %1793 = vmatpush.msra.mxu0 %v398
    %1794 = vmatmul.f32.gmra.mxu0 %v1777
    %v1795 = vpop.f32.mrf.mxu0
    %v1796 = vadd.f32 %v89, %v1795
    %1797 = vdwg.mxu0
    %1798 = vmatpush.msra.mxu0 %v522
    %1799 = vmatpush.msra.mxu0 %v518
    %1800 = vmatpush.msra.mxu0 %v514
    %1801 = vmatpush.msra.mxu0 %v510
    %1802 = vmatpush.msra.mxu0 %v506
    %1803 = vmatpush.msra.mxu0 %v502
    %1804 = vmatpush.msra.mxu0 %v498
    %1805 = vmatpush.msra.mxu0 %v494
    %1806 = vmatpush.msra.mxu0 %v490
    %1807 = vmatpush.msra.mxu0 %v486
    %1808 = vmatpush.msra.mxu0 %v482
    %1809 = vmatpush.msra.mxu0 %v478
    %1810 = vmatpush.msra.mxu0 %v474
    %1811 = vmatpush.msra.mxu0 %v470
    %1812 = vmatpush.msra.mxu0 %v466
    %1813 = vmatpush.msra.mxu0 %v462
    %1814 = vmatmul.f32.gmra.mxu0 %v1669
    %v1815 = vpop.f32.mrf.mxu0
    %v1816 = vadd.f32 %v1796, %v1815
    %1817 = vdwg.mxu0
    %1818 = vmatpush.msra.mxu0 %v459
    %1819 = vmatpush.msra.mxu0 %v455
    %1820 = vmatpush.msra.mxu0 %v451
    %1821 = vmatpush.msra.mxu0 %v447
    %1822 = vmatpush.msra.mxu0 %v443
    %1823 = vmatpush.msra.mxu0 %v439
    %1824 = vmatpush.msra.mxu0 %v435
    %1825 = vmatpush.msra.mxu0 %v431
    %1826 = vmatpush.msra.mxu0 %v427
    %1827 = vmatpush.msra.mxu0 %v423
    %1828 = vmatpush.msra.mxu0 %v419
    %1829 = vmatpush.msra.mxu0 %v415
    %1830 = vmatpush.msra.mxu0 %v411
    %1831 = vmatpush.msra.mxu0 %v407
    %1832 = vmatpush.msra.mxu0 %v403
    %1833 = vmatpush.msra.mxu0 %v399
    %1834 = vmatmul.f32.gmra.mxu0 %v1777
    %v1835 = vpop.f32.mrf.mxu0
    %v1836 = vadd.f32 %v90, %v1835
    %1837 = vdwg.mxu0
    %1838 = vmatpush.msra.mxu0 %v523
    %1839 = vmatpush.msra.mxu0 %v519
    %1840 = vmatpush.msra.mxu0 %v515
    %1841 = vmatpush.msra.mxu0 %v511
    %1842 = vmatpush.msra.mxu0 %v507
    %1843 = vmatpush.msra.mxu0 %v503
    %1844 = vmatpush.msra.mxu0 %v499
    %1845 = vmatpush.msra.mxu0 %v495
    %1846 = vmatpush.msra.mxu0 %v491
    %1847 = vmatpush.msra.mxu0 %v487
    %1848 = vmatpush.msra.mxu0 %v483
    %1849 = vmatpush.msra.mxu0 %v479
    %1850 = vmatpush.msra.mxu0 %v475
    %1851 = vmatpush.msra.mxu0 %v471
    %1852 = vmatpush.msra.mxu0 %v467
    %1853 = vmatpush.msra.mxu0 %v463
    %1854 = vmatmul.f32.gmra.mxu0 %v1669
    %v1855 = vpop.f32.mrf.mxu0
    %v1856 = vadd.f32 %v1836, %v1855
    %1857 = vdwg.mxu0
    %1858 = vmatpush.msra.mxu0 %v460
    %1859 = vmatpush.msra.mxu0 %v456
    %1860 = vmatpush.msra.mxu0 %v452
    %1861 = vmatpush.msra.mxu0 %v448
    %1862 = vmatpush.msra.mxu0 %v444
    %1863 = vmatpush.msra.mxu0 %v440
    %1864 = vmatpush.msra.mxu0 %v436
    %1865 = vmatpush.msra.mxu0 %v432
    %1866 = vmatpush.msra.mxu0 %v428
    %1867 = vmatpush.msra.mxu0 %v424
    %1868 = vmatpush.msra.mxu0 %v420
    %1869 = vmatpush.msra.mxu0 %v416
    %1870 = vmatpush.msra.mxu0 %v412
    %1871 = vmatpush.msra.mxu0 %v408
    %1872 = vmatpush.msra.mxu0 %v404
    %1873 = vmatpush.msra.mxu0 %v400
    %1874 = vmatmul.f32.gmra.mxu0 %v1777
    %v1875 = vpop.f32.mrf.mxu0
    %v1876 = vadd.f32 %v91, %v1875
    %1877 = vdwg.mxu0
    %1878 = vmatpush.msra.mxu0 %v524
    %1879 = vmatpush.msra.mxu0 %v520
    %1880 = vmatpush.msra.mxu0 %v516
    %1881 = vmatpush.msra.mxu0 %v512
    %1882 = vmatpush.msra.mxu0 %v508
    %1883 = vmatpush.msra.mxu0 %v504
    %1884 = vmatpush.msra.mxu0 %v500
    %1885 = vmatpush.msra.mxu0 %v496
    %1886 = vmatpush.msra.mxu0 %v492
    %1887 = vmatpush.msra.mxu0 %v488
    %1888 = vmatpush.msra.mxu0 %v484
    %1889 = vmatpush.msra.mxu0 %v480
    %1890 = vmatpush.msra.mxu0 %v476
    %1891 = vmatpush.msra.mxu0 %v472
    %1892 = vmatpush.msra.mxu0 %v468
    %1893 = vmatpush.msra.mxu0 %v464
    %1894 = vmatmul.f32.gmra.mxu0 %v1669
    %v1895 = vpop.f32.mrf.mxu0
    %v1896 = vadd.f32 %v1876, %v1895
    %1897 = vdwg.mxu0
    %1898 = vmatpush.msra.mxu0 %v461
    %1899 = vmatpush.msra.mxu0 %v457
    %1900 = vmatpush.msra.mxu0 %v453
    %1901 = vmatpush.msra.mxu0 %v449
    %1902 = vmatpush.msra.mxu0 %v445
    %1903 = vmatpush.msra.mxu0 %v441
    %1904 = vmatpush.msra.mxu0 %v437
    %1905 = vmatpush.msra.mxu0 %v433
    %1906 = vmatpush.msra.mxu0 %v429
    %1907 = vmatpush.msra.mxu0 %v425
    %1908 = vmatpush.msra.mxu0 %v421
    %1909 = vmatpush.msra.mxu0 %v417
    %1910 = vmatpush.msra.mxu0 %v413
    %1911 = vmatpush.msra.mxu0 %v409
    %1912 = vmatpush.msra.mxu0 %v405
    %1913 = vmatpush.msra.mxu0 %v401
    %1914 = vmatmul.f32.gmra.mxu0 %v1777
    %v1915 = vpop.f32.mrf.mxu0
    %v1916 = vadd.f32 %v92, %v1915
    %1917 = vdwg.mxu0
    %1918 = vmatpush.msra.mxu0 %v525
    %1919 = vmatpush.msra.mxu0 %v521
    %1920 = vmatpush.msra.mxu0 %v517
    %1921 = vmatpush.msra.mxu0 %v513
    %1922 = vmatpush.msra.mxu0 %v509
    %1923 = vmatpush.msra.mxu0 %v505
    %1924 = vmatpush.msra.mxu0 %v501
    %1925 = vmatpush.msra.mxu0 %v497
    %1926 = vmatpush.msra.mxu0 %v493
    %1927 = vmatpush.msra.mxu0 %v489
    %1928 = vmatpush.msra.mxu0 %v485
    %1929 = vmatpush.msra.mxu0 %v481
    %1930 = vmatpush.msra.mxu0 %v477
    %1931 = vmatpush.msra.mxu0 %v473
    %1932 = vmatpush.msra.mxu0 %v469
    %1933 = vmatpush.msra.mxu0 %v465
    %1934 = vmatmul.f32.gmra.mxu0 %v1669
    %v1935 = vpop.f32.mrf.mxu0
    %v1936 = vadd.f32 %v1916, %v1935
    %1937 = vdwg.mxu0
    %v1938 = vxor.u32 %v1816, 2147483648
    %v1939 = vmul.f32 %v1938, 1.442695
    %v1940 = vpow.pop %v1939
    %v1941 = vadd.f32 %v1940, 1.0
    %v1942 = vrcp.pop %v1941
    %v1943 = vmul.f32 %v1941, %v1942
    %v1944 = vsub.f32 1.0, %v1943
    %v1945 = vmul.f32 %v1942, %v1944
    %v1946 = vadd.f32 %v1942, %v1945
    %vm1947 = vweird.f32 %v1941
    %vm1948 = vweird.f32 %v1942
    %vm1949 = vmor %vm1947, %vm1948
    %v1950 = vsel %vm1949, %v1942, %v1946
    %v1951 = vand.u32 2147483647, %v1941
    %vm1952 = vcmp.eq.f32.partialorder %v1951, 8.507059e+37
    %v1953 = vand.u32 %v1941, 2147483648
    %v1954 = vor.u32 1.1754944e-38, %v1953
    %v1955 = vsel %vm1952, %v1954, %v1950
    %v1956 = vmul.f32 1.0, %v1955
    %v1957 = vxor.u32 %v1856, 2147483648
    %v1958 = vmul.f32 %v1957, 1.442695
    %v1959 = vpow.pop %v1958
    %v1960 = vadd.f32 %v1959, 1.0
    %v1961 = vrcp.pop %v1960
    %v1962 = vmul.f32 %v1960, %v1961
    %v1963 = vsub.f32 1.0, %v1962
    %v1964 = vmul.f32 %v1961, %v1963
    %v1965 = vadd.f32 %v1961, %v1964
    %vm1966 = vweird.f32 %v1960
    %vm1967 = vweird.f32 %v1961
    %vm1968 = vmor %vm1966, %vm1967
    %v1969 = vsel %vm1968, %v1961, %v1965
    %v1970 = vand.u32 2147483647, %v1960
    %vm1971 = vcmp.eq.f32.partialorder %v1970, 8.507059e+37
    %v1972 = vand.u32 %v1960, 2147483648
    %v1973 = vor.u32 1.1754944e-38, %v1972
    %v1974 = vsel %vm1971, %v1973, %v1969
    %v1975 = vmul.f32 1.0, %v1974
    %v1976 = vmul.f32 %v1956, %v1936
    %v1977 = vadd.f32 %v1896, %v1976
    %v1978 = vtanh.pop %v1977
    %v1979 = vsub.f32 1.0, %v1975
    %v1980 = vmul.f32 %v1979, %v1978
    %v1981 = vmul.f32 %v1975, %v1669
    %v1982 = vadd.f32 %v1980, %v1981
    %1983 = vmatpush.msra.mxu0 %v287
    %1984 = vmatpush.msra.mxu0 %v284
    %1985 = vmatpush.msra.mxu0 %v281
    %1986 = vmatpush.msra.mxu0 %v278
    %1987 = vmatpush.msra.mxu0 %v275
    %1988 = vmatpush.msra.mxu0 %v272
    %1989 = vmatpush.msra.mxu0 %v269
    %1990 = vmatpush.msra.mxu0 %v266
    %1991 = vmatpush.msra.mxu0 %v263
    %1992 = vmatpush.msra.mxu0 %v260
    %1993 = vmatpush.msra.mxu0 %v257
    %1994 = vmatpush.msra.mxu0 %v254
    %1995 = vmatpush.msra.mxu0 %v251
    %1996 = vmatpush.msra.mxu0 %v248
    %1997 = vmatpush.msra.mxu0 %v245
    %1998 = vmatpush.msra.mxu0 %v242
    %1999 = vmatmul.f32.gmra.mxu0 %v1777
    %v2000 = vpop.f32.mrf.mxu0
    %v2001 = vadd.f32 0.0, %v2000
    %2002 = vdwg.mxu0
    %2003 = vmatpush.msra.mxu0 %v288
    %2004 = vmatpush.msra.mxu0 %v285
    %2005 = vmatpush.msra.mxu0 %v282
    %2006 = vmatpush.msra.mxu0 %v279
    %2007 = vmatpush.msra.mxu0 %v276
    %2008 = vmatpush.msra.mxu0 %v273
    %2009 = vmatpush.msra.mxu0 %v270
    %2010 = vmatpush.msra.mxu0 %v267
    %2011 = vmatpush.msra.mxu0 %v264
    %2012 = vmatpush.msra.mxu0 %v261
    %2013 = vmatpush.msra.mxu0 %v258
    %2014 = vmatpush.msra.mxu0 %v255
    %2015 = vmatpush.msra.mxu0 %v252
    %2016 = vmatpush.msra.mxu0 %v249
    %2017 = vmatpush.msra.mxu0 %v246
    %2018 = vmatpush.msra.mxu0 %v243
    %2019 = vmatmul.f32.gmra.mxu0 %v1777
    %v2020 = vpop.f32.mrf.mxu0
    %v2021 = vadd.f32 0.0, %v2020
    %2022 = vdwg.mxu0
    %2023 = vmatpush.msra.mxu0 %v289
    %2024 = vmatpush.msra.mxu0 %v286
    %2025 = vmatpush.msra.mxu0 %v283
    %2026 = vmatpush.msra.mxu0 %v280
    %2027 = vmatpush.msra.mxu0 %v277
    %2028 = vmatpush.msra.mxu0 %v274
    %2029 = vmatpush.msra.mxu0 %v271
    %2030 = vmatpush.msra.mxu0 %v268
    %2031 = vmatpush.msra.mxu0 %v265
    %2032 = vmatpush.msra.mxu0 %v262
    %2033 = vmatpush.msra.mxu0 %v259
    %2034 = vmatpush.msra.mxu0 %v256
    %2035 = vmatpush.msra.mxu0 %v253
    %2036 = vmatpush.msra.mxu0 %v250
    %2037 = vmatpush.msra.mxu0 %v247
    %2038 = vmatpush.msra.mxu0 %v244
    %2039 = vmatmul.f32.gmra.mxu0 %v1777
    %v2040 = vpop.f32.mrf.mxu0
    %v2041 = vadd.f32 0.0, %v2040
    %2042 = vdwg.mxu0
    %v2043 = vadd.f32 %v169, %v2001
    %v2044 = vxor.u32 %v2043, 2147483648
    %v2045 = vmul.f32 %v2044, 1.442695
    %v2046 = vpow.pop %v2045
    %v2047 = vadd.f32 %v2046, 1.0
    %v2048 = vrcp.pop %v2047
    %v2049 = vmul.f32 %v2047, %v2048
    %v2050 = vsub.f32 1.0, %v2049
    %v2051 = vmul.f32 %v2048, %v2050
    %v2052 = vadd.f32 %v2048, %v2051
    %vm2053 = vweird.f32 %v2047
    %vm2054 = vweird.f32 %v2048
    %vm2055 = vmor %vm2053, %vm2054
    %v2056 = vsel %vm2055, %v2048, %v2052
    %v2057 = vand.u32 2147483647, %v2047
    %vm2058 = vcmp.eq.f32.partialorder %v2057, 8.507059e+37
    %v2059 = vand.u32 %v2047, 2147483648
    %v2060 = vor.u32 1.1754944e-38, %v2059
    %v2061 = vsel %vm2058, %v2060, %v2056
    %v2062 = vmul.f32 1.0, %v2061
    %v2063 = vadd.f32 %v204, %v2021
    %v2064 = vxor.u32 %v2063, 2147483648
    %v2065 = vmul.f32 %v2064, 1.442695
    %v2066 = vpow.pop %v2065
    %v2067 = vadd.f32 %v2066, 1.0
    %v2068 = vrcp.pop %v2067
    %v2069 = vmul.f32 %v2067, %v2068
    %v2070 = vsub.f32 1.0, %v2069
    %v2071 = vmul.f32 %v2068, %v2070
    %v2072 = vadd.f32 %v2068, %v2071
    %vm2073 = vweird.f32 %v2067
    %vm2074 = vweird.f32 %v2068
    %vm2075 = vmor %vm2073, %vm2074
    %v2076 = vsel %vm2075, %v2068, %v2072
    %v2077 = vand.u32 2147483647, %v2067
    %vm2078 = vcmp.eq.f32.partialorder %v2077, 8.507059e+37
    %v2079 = vand.u32 %v2067, 2147483648
    %v2080 = vor.u32 1.1754944e-38, %v2079
    %v2081 = vsel %vm2078, %v2080, %v2076
    %v2082 = vmul.f32 1.0, %v2081
    %v2083 = vadd.f32 %v2041, %v85
    %v2084 = vmul.f32 %v2062, %v2083
    %v2085 = vadd.f32 %v239, %v2084
    %v2086 = vtanh.pop %v2085
    %v2087 = vsub.f32 1.0, %v2082
    %v2088 = vmul.f32 %v2087, %v2086
    %v2089 = vmul.f32 %v2082, %v1777
    %v2090 = vadd.f32 %v2088, %v2089
    %2091 = vmatpush.msra.mxu0 %v458
    %2092 = vmatpush.msra.mxu0 %v454
    %2093 = vmatpush.msra.mxu0 %v450
    %2094 = vmatpush.msra.mxu0 %v446
    %2095 = vmatpush.msra.mxu0 %v442
    %2096 = vmatpush.msra.mxu0 %v438
    %2097 = vmatpush.msra.mxu0 %v434
    %2098 = vmatpush.msra.mxu0 %v430
    %2099 = vmatpush.msra.mxu0 %v426
    %2100 = vmatpush.msra.mxu0 %v422
    %2101 = vmatpush.msra.mxu0 %v418
    %2102 = vmatpush.msra.mxu0 %v414
    %2103 = vmatpush.msra.mxu0 %v410
    %2104 = vmatpush.msra.mxu0 %v406
    %2105 = vmatpush.msra.mxu0 %v402
    %2106 = vmatpush.msra.mxu0 %v398
    %2107 = vmatmul.f32.gmra.mxu0 %v2090
    %v2108 = vpop.f32.mrf.mxu0
    %v2109 = vadd.f32 %v89, %v2108
    %2110 = vdwg.mxu0
    %2111 = vmatpush.msra.mxu0 %v522
    %2112 = vmatpush.msra.mxu0 %v518
    %2113 = vmatpush.msra.mxu0 %v514
    %2114 = vmatpush.msra.mxu0 %v510
    %2115 = vmatpush.msra.mxu0 %v506
    %2116 = vmatpush.msra.mxu0 %v502
    %2117 = vmatpush.msra.mxu0 %v498
    %2118 = vmatpush.msra.mxu0 %v494
    %2119 = vmatpush.msra.mxu0 %v490
    %2120 = vmatpush.msra.mxu0 %v486
    %2121 = vmatpush.msra.mxu0 %v482
    %2122 = vmatpush.msra.mxu0 %v478
    %2123 = vmatpush.msra.mxu0 %v474
    %2124 = vmatpush.msra.mxu0 %v470
    %2125 = vmatpush.msra.mxu0 %v466
    %2126 = vmatpush.msra.mxu0 %v462
    %2127 = vmatmul.f32.gmra.mxu0 %v1982
    %v2128 = vpop.f32.mrf.mxu0
    %v2129 = vadd.f32 %v2109, %v2128
    %2130 = vdwg.mxu0
    %2131 = vmatpush.msra.mxu0 %v459
    %2132 = vmatpush.msra.mxu0 %v455
    %2133 = vmatpush.msra.mxu0 %v451
    %2134 = vmatpush.msra.mxu0 %v447
    %2135 = vmatpush.msra.mxu0 %v443
    %2136 = vmatpush.msra.mxu0 %v439
    %2137 = vmatpush.msra.mxu0 %v435
    %2138 = vmatpush.msra.mxu0 %v431
    %2139 = vmatpush.msra.mxu0 %v427
    %2140 = vmatpush.msra.mxu0 %v423
    %2141 = vmatpush.msra.mxu0 %v419
    %2142 = vmatpush.msra.mxu0 %v415
    %2143 = vmatpush.msra.mxu0 %v411
    %2144 = vmatpush.msra.mxu0 %v407
    %2145 = vmatpush.msra.mxu0 %v403
    %2146 = vmatpush.msra.mxu0 %v399
    %2147 = vmatmul.f32.gmra.mxu0 %v2090
    %v2148 = vpop.f32.mrf.mxu0
    %v2149 = vadd.f32 %v90, %v2148
    %2150 = vdwg.mxu0
    %2151 = vmatpush.msra.mxu0 %v523
    %2152 = vmatpush.msra.mxu0 %v519
    %2153 = vmatpush.msra.mxu0 %v515
    %2154 = vmatpush.msra.mxu0 %v511
    %2155 = vmatpush.msra.mxu0 %v507
    %2156 = vmatpush.msra.mxu0 %v503
    %2157 = vmatpush.msra.mxu0 %v499
    %2158 = vmatpush.msra.mxu0 %v495
    %2159 = vmatpush.msra.mxu0 %v491
    %2160 = vmatpush.msra.mxu0 %v487
    %2161 = vmatpush.msra.mxu0 %v483
    %2162 = vmatpush.msra.mxu0 %v479
    %2163 = vmatpush.msra.mxu0 %v475
    %2164 = vmatpush.msra.mxu0 %v471
    %2165 = vmatpush.msra.mxu0 %v467
    %2166 = vmatpush.msra.mxu0 %v463
    %2167 = vmatmul.f32.gmra.mxu0 %v1982
    %v2168 = vpop.f32.mrf.mxu0
    %v2169 = vadd.f32 %v2149, %v2168
    %2170 = vdwg.mxu0
    %2171 = vmatpush.msra.mxu0 %v460
    %2172 = vmatpush.msra.mxu0 %v456
    %2173 = vmatpush.msra.mxu0 %v452
    %2174 = vmatpush.msra.mxu0 %v448
    %2175 = vmatpush.msra.mxu0 %v444
    %2176 = vmatpush.msra.mxu0 %v440
    %2177 = vmatpush.msra.mxu0 %v436
    %2178 = vmatpush.msra.mxu0 %v432
    %2179 = vmatpush.msra.mxu0 %v428
    %2180 = vmatpush.msra.mxu0 %v424
    %2181 = vmatpush.msra.mxu0 %v420
    %2182 = vmatpush.msra.mxu0 %v416
    %2183 = vmatpush.msra.mxu0 %v412
    %2184 = vmatpush.msra.mxu0 %v408
    %2185 = vmatpush.msra.mxu0 %v404
    %2186 = vmatpush.msra.mxu0 %v400
    %2187 = vmatmul.f32.gmra.mxu0 %v2090
    %v2188 = vpop.f32.mrf.mxu0
    %v2189 = vadd.f32 %v91, %v2188
    %2190 = vdwg.mxu0
    %2191 = vmatpush.msra.mxu0 %v524
    %2192 = vmatpush.msra.mxu0 %v520
    %2193 = vmatpush.msra.mxu0 %v516
    %2194 = vmatpush.msra.mxu0 %v512
    %2195 = vmatpush.msra.mxu0 %v508
    %2196 = vmatpush.msra.mxu0 %v504
    %2197 = vmatpush.msra.mxu0 %v500
    %2198 = vmatpush.msra.mxu0 %v496
    %2199 = vmatpush.msra.mxu0 %v492
    %2200 = vmatpush.msra.mxu0 %v488
    %2201 = vmatpush.msra.mxu0 %v484
    %2202 = vmatpush.msra.mxu0 %v480
    %2203 = vmatpush.msra.mxu0 %v476
    %2204 = vmatpush.msra.mxu0 %v472
    %2205 = vmatpush.msra.mxu0 %v468
    %2206 = vmatpush.msra.mxu0 %v464
    %2207 = vmatmul.f32.gmra.mxu0 %v1982
    %v2208 = vpop.f32.mrf.mxu0
    %v2209 = vadd.f32 %v2189, %v2208
    %2210 = vdwg.mxu0
    %2211 = vmatpush.msra.mxu0 %v461
    %2212 = vmatpush.msra.mxu0 %v457
    %2213 = vmatpush.msra.mxu0 %v453
    %2214 = vmatpush.msra.mxu0 %v449
    %2215 = vmatpush.msra.mxu0 %v445
    %2216 = vmatpush.msra.mxu0 %v441
    %2217 = vmatpush.msra.mxu0 %v437
    %2218 = vmatpush.msra.mxu0 %v433
    %2219 = vmatpush.msra.mxu0 %v429
    %2220 = vmatpush.msra.mxu0 %v425
    %2221 = vmatpush.msra.mxu0 %v421
    %2222 = vmatpush.msra.mxu0 %v417
    %2223 = vmatpush.msra.mxu0 %v413
    %2224 = vmatpush.msra.mxu0 %v409
    %2225 = vmatpush.msra.mxu0 %v405
    %2226 = vmatpush.msra.mxu0 %v401
    %2227 = vmatmul.f32.gmra.mxu0 %v2090
    %v2228 = vpop.f32.mrf.mxu0
    %v2229 = vadd.f32 %v92, %v2228
    %2230 = vdwg.mxu0
    %2231 = vmatpush.msra.mxu0 %v525
    %2232 = vmatpush.msra.mxu0 %v521
    %2233 = vmatpush.msra.mxu0 %v517
    %2234 = vmatpush.msra.mxu0 %v513
    %2235 = vmatpush.msra.mxu0 %v509
    %2236 = vmatpush.msra.mxu0 %v505
    %2237 = vmatpush.msra.mxu0 %v501
    %2238 = vmatpush.msra.mxu0 %v497
    %2239 = vmatpush.msra.mxu0 %v493
    %2240 = vmatpush.msra.mxu0 %v489
    %2241 = vmatpush.msra.mxu0 %v485
    %2242 = vmatpush.msra.mxu0 %v481
    %2243 = vmatpush.msra.mxu0 %v477
    %2244 = vmatpush.msra.mxu0 %v473
    %2245 = vmatpush.msra.mxu0 %v469
    %2246 = vmatpush.msra.mxu0 %v465
    %2247 = vmatmul.f32.gmra.mxu0 %v1982
    %v2248 = vpop.f32.mrf.mxu0
    %v2249 = vadd.f32 %v2229, %v2248
    %2250 = vdwg.mxu0
    %v2251 = vxor.u32 %v2129, 2147483648
    %v2252 = vmul.f32 %v2251, 1.442695
    %v2253 = vpow.pop %v2252
    %v2254 = vadd.f32 %v2253, 1.0
    %v2255 = vrcp.pop %v2254
    %v2256 = vmul.f32 %v2254, %v2255
    %v2257 = vsub.f32 1.0, %v2256
    %v2258 = vmul.f32 %v2255, %v2257
    %v2259 = vadd.f32 %v2255, %v2258
    %vm2260 = vweird.f32 %v2254
    %vm2261 = vweird.f32 %v2255
    %vm2262 = vmor %vm2260, %vm2261
    %v2263 = vsel %vm2262, %v2255, %v2259
    %v2264 = vand.u32 2147483647, %v2254
    %vm2265 = vcmp.eq.f32.partialorder %v2264, 8.507059e+37
    %v2266 = vand.u32 %v2254, 2147483648
    %v2267 = vor.u32 1.1754944e-38, %v2266
    %v2268 = vsel %vm2265, %v2267, %v2263
    %v2269 = vmul.f32 1.0, %v2268
    %v2270 = vxor.u32 %v2169, 2147483648
    %v2271 = vmul.f32 %v2270, 1.442695
    %v2272 = vpow.pop %v2271
    %v2273 = vadd.f32 %v2272, 1.0
    %v2274 = vrcp.pop %v2273
    %v2275 = vmul.f32 %v2273, %v2274
    %v2276 = vsub.f32 1.0, %v2275
    %v2277 = vmul.f32 %v2274, %v2276
    %v2278 = vadd.f32 %v2274, %v2277
    %vm2279 = vweird.f32 %v2273
    %vm2280 = vweird.f32 %v2274
    %vm2281 = vmor %vm2279, %vm2280
    %v2282 = vsel %vm2281, %v2274, %v2278
    %v2283 = vand.u32 2147483647, %v2273
    %vm2284 = vcmp.eq.f32.partialorder %v2283, 8.507059e+37
    %v2285 = vand.u32 %v2273, 2147483648
    %v2286 = vor.u32 1.1754944e-38, %v2285
    %v2287 = vsel %vm2284, %v2286, %v2282
    %v2288 = vmul.f32 1.0, %v2287
    %v2289 = vmul.f32 %v2269, %v2249
    %v2290 = vadd.f32 %v2209, %v2289
    %v2291 = vtanh.pop %v2290
    %v2292 = vsub.f32 1.0, %v2288
    %v2293 = vmul.f32 %v2292, %v2291
    %v2294 = vmul.f32 %v2288, %v1982
    %v2295 = vadd.f32 %v2293, %v2294
    %v2296 = vld [vmem:[#allocation7] sm:$0xff]
    %v2297 = vld [vmem:[#allocation7 + $0x8] sm:$0xff]
    %v2298 = vld [vmem:[#allocation7 + $0x10] sm:$0xff]
    %v2299 = vld [vmem:[#allocation7 + $0x18] sm:$0xff]
    %v2300 = vld [vmem:[#allocation7 + $0x20] sm:$0xff]
    %v2301 = vld [vmem:[#allocation7 + $0x28] sm:$0xff]
    %v2302 = vld [vmem:[#allocation7 + $0x30] sm:$0xff]
    %v2303 = vld [vmem:[#allocation7 + $0x38] sm:$0xff]
    %v2304 = vld [vmem:[#allocation7 + $0x40] sm:$0xff]
    %v2305 = vld [vmem:[#allocation7 + $0x48] sm:$0xff]
    %v2306 = vld [vmem:[#allocation7 + $0x50] sm:$0xff]
    %v2307 = vld [vmem:[#allocation7 + $0x58] sm:$0xff]
    %v2308 = vld [vmem:[#allocation7 + $0x60] sm:$0xff]
    %v2309 = vld [vmem:[#allocation7 + $0x68] sm:$0xff]
    %v2310 = vld [vmem:[#allocation7 + $0x70] sm:$0xff]
    %v2311 = vld [vmem:[#allocation7 + $0x78] sm:$0xff]
    %v2312 = vld [vmem:[%s9] sm:$0x1]
    %v2314 = vperm.slane %v2312, 0
    %2316 = vmatpush.msra.mxu0 %v2311
    %2317 = vmatpush.msra.mxu0 %v2310
    %2318 = vmatpush.msra.mxu0 %v2309
    %2319 = vmatpush.msra.mxu0 %v2308
    %2320 = vmatpush.msra.mxu0 %v2307
    %2321 = vmatpush.msra.mxu0 %v2306
    %2322 = vmatpush.msra.mxu0 %v2305
    %2323 = vmatpush.msra.mxu0 %v2304
    %2324 = vmatpush.msra.mxu0 %v2303
    %2325 = vmatpush.msra.mxu0 %v2302
    %2326 = vmatpush.msra.mxu0 %v2301
    %2327 = vmatpush.msra.mxu0 %v2300
    %2328 = vmatpush.msra.mxu0 %v2299
    %2329 = vmatpush.msra.mxu0 %v2298
    %2330 = vmatpush.msra.mxu0 %v2297
    %2331 = vmatpush.msra.mxu0 %v2296
    %2332 = vmatmul.f32.gmra.mxu0 %v730
    %v2333 = vpop.f32.mrf.mxu0
    %v2334 = vadd.f32 %v2314, %v2333
    %2335 = vmatmul.f32.gmra.mxu0 %v1043
    %v2336 = vpop.f32.mrf.mxu0
    %v2337 = vadd.f32 %v2314, %v2336
    %2338 = vmatmul.f32.gmra.mxu0 %v1356
    %v2339 = vpop.f32.mrf.mxu0
    %v2340 = vadd.f32 %v2314, %v2339
    %2341 = vmatmul.f32.gmra.mxu0 %v1669
    %v2342 = vpop.f32.mrf.mxu0
    %v2343 = vadd.f32 %v2314, %v2342
    %2344 = vmatmul.f32.gmra.mxu0 %v1982
    %v2345 = vpop.f32.mrf.mxu0
    %v2346 = vadd.f32 %v2314, %v2345
    %2347 = vmatmul.f32.gmra.mxu0 %v2295
    %v2348 = vpop.f32.mrf.mxu0
    %v2349 = vadd.f32 %v2314, %v2348
    %2350 = vdwg.mxu0
    %2351 = vst [vmem:[#allocation8] sm:$0xff] %v2334
    %2352 = vst [vmem:[#allocation8 + $0x8] sm:$0xff] %v2337
    %2353 = vst [vmem:[#allocation8 + $0x10] sm:$0xff] %v2340
    %2354 = vst [vmem:[#allocation8 + $0x18] sm:$0xff] %v2343
    %2355 = vst [vmem:[#allocation8 + $0x20] sm:$0xff] %v2346
    %2356 = vst [vmem:[#allocation8 + $0x28] sm:$0xff] %v2349
    // Predicated region
    $region54: #{tpu_custom_call.1} parent=1 // pred_check
      _
    $region55: #{tpu_custom_call.1} parent=1 // pred_check_branch
      %2358 = sbr.rel (0) target = $region57
    $region56: #{tpu_custom_call.1} parent=1 // pred_region
      %2360 = vsyncadd [#allocation4], 0
      %s2361 = sshll.u32 [#allocation8], 4
      %s2362 = int_to_ptr.vmem [resolvable:$true] %s2361
      %s2363 = sshll.u32 %s10, 4
      %s2364 = int_to_ptr.hbm [resolvable:$true] %s2363
      %2369 = dma.vmem_to_hbm [thread:$0]  %s2362, 768, %s2364, [#allocation4], 128, 128, 8
    $region57: #{tpu_custom_call.1} parent=1 // pred_fallthru
      _
    // Predicated region
    $region58: #{tpu_custom_call.1} parent=1 // pred_check
      _
    $region59: #{tpu_custom_call.1} parent=1 // pred_check_branch
      %2371 = sbr.rel (0) target = $region61
    $region60: #{tpu_custom_call.1} parent=1 // pred_region
      %2373 = dma.done [#allocation4], 768
    $region61: #{tpu_custom_call.1} parent=1 // pred_fallthru
      _
    %2374 = vsyncpa [#allocation3], 1
    %2375 = vsyncpa [#allocation6], 1
    %2376 = vsyncpa [#allocation4], 1

</llo_original>
